<compile_context>
chip_gen: v5e
topology: v5e:2x2
jax: 0.10.0
libtpu: 0.0.40
codegen_flags: <defaults>
</compile_context>

<pallas_src>
import numpy as np
import jax
import jax.numpy as jnp
from jax.experimental import pallas as pl
from jax.experimental.pallas import tpu as pltpu

IGNORE_ID = -1

# ----- small hyperparameters consistent with the module -----
VOCAB = 50        # vocab_size
EMB = 16          # embedding_dim
HID = 32          # hidden_size
EPROJ = 32        # eproj_size (== HID so that 'dot' attention is well defined)
DPROJ = 24        # dproj_size (projection between LSTM layers)
NUM_LAYERS = 2    # kernel hard-codes the 2-layer stack
SOS_ID = VOCAB - 2
EOS_ID = VOCAB - 1
VPAD = 128        # vocab padded to one full lane width (padded bias = -1e30)
NEG_INF = -1e30


# ---------------------------------------------------------------------------
# Fused kernel: full recurrence + attention + output MLP + log_softmax
# ---------------------------------------------------------------------------
def _fused_decoder_kernel(emb_ref, enct_ref, encf_ref, mask_ref,
                          w0_ref, b0_ref, wp_ref, bp_ref,
                          wih1_ref, whh1_ref, b1_ref,
                          w1r_ref, w1a_ref, mb1_ref, w2_ref, b2_ref,
                          logp_ref,
                          in0_s):
    T, N, E = emb_ref.shape
    EP = encf_ref.shape[1]
    H = whh1_ref.shape[0]

    enc_t = enct_ref[...]        # (EP, N*Ti)   for scores   = h1 @ enc_t
    enc_f = encf_ref[...]        # (N*Ti, EP)   for context  = attn @ enc_f
    mask = mask_ref[...]         # (N, N*Ti)    block-diagonal 0 / -1e30 bias
    w0 = w0_ref[...]             # (E+EP+H, 4H) pre-stacked layer-0 weight
    b0 = b0_ref[...]
    wp = wp_ref[...]
    bp = bp_ref[...]
    wih1 = wih1_ref[...]
    whh1 = whh1_ref[...]
    b1 = b1_ref[...]
    w1r = w1r_ref[...]           # mlp W1 rows acting on rnn_output
    w1a = w1a_ref[...]           # mlp W1 rows acting on att_c
    mb1 = mb1_ref[...]
    w2 = w2_ref[...]             # (H, VPAD)  vocab padded to 128
    b2 = b2_ref[...]             # (1, VPAD)  padded columns = -1e30

    def lstm_act(gates, c_prev):
        # activate the full 4*H (=128) lane-wide gate vector, then slice
        sig = jax.nn.sigmoid(gates)
        th = jnp.tanh(gates)
        i = sig[:, 0 * H:1 * H]
        f = sig[:, 1 * H:2 * H]
        g = th[:, 2 * H:3 * H]
        o = sig[:, 3 * H:4 * H]
        c_new = f * c_prev + i * g
        h_new = o * jnp.tanh(c_new)
        return h_new, c_new

    h0 = jnp.zeros((N, H), jnp.float32)
    c0 = jnp.zeros((N, H), jnp.float32)
    h1 = jnp.zeros((N, H), jnp.float32)
    c1 = jnp.zeros((N, H), jnp.float32)
    att_c = jnp.zeros((N, EP), jnp.float32)

    # fully unrolled time loop (T static & small): no per-step grid / DMA cost
    for t in range(T):
        # layer 0 input [x_t | att_c | h0] packed by static-offset stores into
        # a persistent VMEM scratch -> single MXU pass over the stacked weight
        in0_s[:, 0:E] = emb_ref[t]
        in0_s[:, E:E + EP] = att_c
        in0_s[:, E + EP:E + EP + H] = h0
        gates0 = jnp.dot(in0_s[...], w0,
                         preferred_element_type=jnp.float32) + b0
        h0, c0 = lstm_act(gates0, c0)

        # inter-layer projection (dropout_proj[0]; dropout acts as identity)
        proj = jnp.dot(h0, wp, preferred_element_type=jnp.float32) + bp

        # layer 1
        gates1 = (jnp.dot(proj, wih1, preferred_element_type=jnp.float32)
                  + jnp.dot(h1, whh1, preferred_element_type=jnp.float32)
                  + b1)
        h1, c1 = lstm_act(gates1, c1)

        # dot-product attention over encoder frames, on the MXU (2D matmuls
        # over the batch-flattened encoder + block-diagonal mask bias)
        scores = jnp.dot(h1, enc_t,
                         preferred_element_type=jnp.float32) + mask   # (N, N*Ti)
        m = jnp.max(scores, axis=-1, keepdims=True)
        e = jnp.exp(scores - m)
        attn = e * pl.reciprocal(jnp.sum(e, axis=-1, keepdims=True),
                                 approx=True)
        att_c = jnp.dot(attn, enc_f,
                        preferred_element_type=jnp.float32)           # (N, EP)

        # fused output MLP (W1 split over [rnn_output | att_c] -> no concat)
        hid = jnp.tanh(jnp.dot(h1, w1r, preferred_element_type=jnp.float32)
                       + jnp.dot(att_c, w1a, preferred_element_type=jnp.float32)
                       + mb1)
        logits = jnp.dot(hid, w2, preferred_element_type=jnp.float32) + b2
        lm = jnp.max(logits, axis=-1, keepdims=True)
        lse = jnp.log(jnp.sum(jnp.exp(logits - lm), axis=-1, keepdims=True)) + lm
        logp_ref[t] = logits - lse


def run_fused_decoder(emb_tnf, enc_t, enc_flat, mask_bias, kp):
    T, N, E = emb_tnf.shape
    EP = enc_flat.shape[1]
    vmem = pl.BlockSpec(memory_space=pltpu.MemorySpace.VMEM)
    return pl.pallas_call(
        _fused_decoder_kernel,
        out_shape=jax.ShapeDtypeStruct((T, N, VPAD), jnp.float32),
        in_specs=[vmem] * 16,
        out_specs=vmem,
        scratch_shapes=[pltpu.VMEM((N, E + EP + HID), jnp.float32)],
    )(emb_tnf, enc_t, enc_flat, mask_bias,
      kp['w0'], kp['b0'], kp['wp'], kp['bp'],
      kp['wih1'], kp['whh1'], kp['b1'],
      kp['w1r'], kp['w1a'], kp['mb1'], kp['w2p'], kp['b2p'])


# ---------------------------------------------------------------------------
# One-time parameter re-layout for the fused kernel
# ---------------------------------------------------------------------------
def prepare_kernel_params(p):
    kp = {}
    # pre-stack layer-0 input weights: rows = [x | att_c | h0]
    kp['w0'] = jnp.concatenate([p['wxh0'], p['wah0'], p['whh0']], axis=0)
    kp['b0'] = p['b0']
    kp['wp'] = p['wp']
    kp['bp'] = p['bp']
    kp['wih1'] = p['wih1']
    kp['whh1'] = p['whh1']
    kp['b1'] = p['b1']
    # split mlp W1 so the kernel never concatenates (rnn_output, att_c)
    kp['w1r'] = p['mlp_w1'][:HID]
    kp['w1a'] = p['mlp_w1'][HID:]
    kp['mb1'] = p['mlp_b1']
    # pad vocab to 128 lanes; padded bias columns = -1e30 vanish in the LSE
    w2p = jnp.zeros((HID, VPAD), jnp.float32).at[:, :VOCAB].set(p['mlp_w2'])
    b2p = jnp.full((1, VPAD), NEG_INF, jnp.float32).at[:, :VOCAB].set(p['mlp_b2'])
    kp['w2p'] = w2p
    kp['b2p'] = b2p
    return kp


# ---------------------------------------------------------------------------
# Forward pass glue (mirrors Decoder.forward, teacher forcing, aligns=None)
# ---------------------------------------------------------------------------
def decoder_forward(padded_input_np, encoder_outputs, params, kparams):
    # target prep (Python-level, as in PyTorch forward)
    ys = [row[row != IGNORE_ID] for row in padded_input_np]
    ys_in = [np.concatenate(([SOS_ID], y)).astype(np.int32) for y in ys]
    ys_out = [np.concatenate((y, [EOS_ID])).astype(np.int32) for y in ys]
    N = len(ys)
    T = max(len(y) for y in ys_in)                       # output_length
    ys_in_pad = np.full((N, T), EOS_ID, np.int32)
    ys_out_pad = np.full((N, T), IGNORE_ID, np.int32)
    for i in range(N):
        ys_in_pad[i, :len(ys_in[i])] = ys_in[i]
        ys_out_pad[i, :len(ys_out[i])] = ys_out[i]

    # embedding gather directly time-major (no activation transposes)
    emb_tnf = params['embedding'][jnp.asarray(ys_in_pad.T)]      # (T, N, E)

    # batch-flattened encoder views + block-diagonal attention bias
    _, Ti, EP = encoder_outputs.shape
    enc_flat = encoder_outputs.reshape(N * Ti, EP)               # (N*Ti, EP)
    enc_t = jnp.transpose(enc_flat)                              # (EP, N*Ti)
    col_batch = np.repeat(np.arange(N), Ti)
    mask_bias = jnp.asarray(
        np.where(col_batch[None, :] == np.arange(N)[:, None], 0.0, NEG_INF)
        .astype(np.float32))                                     # (N, N*Ti)

    # single fused Pallas call -> log-probs (T, N, VPAD)
    logp = run_fused_decoder(emb_tnf, enc_t, enc_flat, mask_bias, kparams)
    logp_flat = logp.reshape(T * N, VPAD)

    # cross-entropy with ignore_index (time-major flattening matches logp),
    # mean over non-ignored, scaled by (mean(len(ys_in)) - 1) as in lsm==0.
    labels = jnp.asarray(ys_out_pad.T.reshape(-1))
    valid = labels != IGNORE_ID
    safe = jnp.where(valid, labels, 0)
    nll = -jnp.take_along_axis(logp_flat, safe[:, None], axis=1)[:, 0]
    ce = jnp.sum(jnp.where(valid, nll, 0.0)) / jnp.sum(valid)
    scale = float(np.mean([len(y) for y in ys_in]) - 1.0)
    return ce * scale


# ---------------------------------------------------------------------------
# Deterministic parameter init (shapes per Decoder.__init__)
# ---------------------------------------------------------------------------
def init_params(key):
    ks = jax.random.split(key, 12)
    s = 0.1
    p = {}
    p['embedding'] = jax.random.normal(ks[0], (VOCAB, EMB)) * s
    # LSTMCell 0: input = EMB + EPROJ, gate order i,f,g,o (columns of 4*HID)
    p['wxh0'] = jax.random.normal(ks[1], (EMB, 4 * HID)) * s
    p['wah0'] = jax.random.normal(ks[2], (EPROJ, 4 * HID)) * s
    p['whh0'] = jax.random.normal(ks[3], (HID, 4 * HID)) * s
    p['b0'] = jax.random.normal(ks[4], (1, 4 * HID)) * s       # bias_ih + bias_hh combined
    # dropout_proj[0]: Linear(HID, DPROJ)
    p['wp'] = jax.random.normal(ks[5], (HID, DPROJ)) * s
    p['bp'] = jax.random.normal(ks[6], (1, DPROJ)) * s
    # LSTMCell 1: input = DPROJ
    p['wih1'] = jax.random.normal(ks[7], (DPROJ, 4 * HID)) * s
    p['whh1'] = jax.random.normal(ks[8], (HID, 4 * HID)) * s
    p['b1'] = jax.random.normal(ks[9], (1, 4 * HID)) * s
    # mlp: Linear(HID+EPROJ, HID) -> Tanh -> Linear(HID, VOCAB)
    p['mlp_w1'] = jax.random.normal(ks[10], (HID + EPROJ, HID)) * s
    p['mlp_b1'] = jnp.zeros((1, HID))
    p['mlp_w2'] = jax.random.normal(ks[11], (HID, VOCAB)) * s
    p['mlp_b2'] = jnp.zeros((1, VOCAB))
    return {k: v.astype(jnp.float32) for k, v in p.items()}


if __name__ == "__main__":
    key = jax.random.PRNGKey(0)
    pkey, ekey = jax.random.split(key, 2)
    params = init_params(pkey)
    kparams = prepare_kernel_params(params)

    # encoder outputs: N x Ti x EPROJ
    N, Ti = 2, 12
    encoder_outputs = jax.random.normal(ekey, (N, Ti, EPROJ), jnp.float32)

    # padded_input: N x To with IGNORE_ID padding (variable lengths)
    lens = [7, 5]
    To = max(lens)
    rng = np.random.RandomState(0)
    padded_input = np.full((N, To), IGNORE_ID, np.int32)
    for i, L in enumerate(lens):
        padded_input[i, :L] = rng.randint(0, VOCAB - 2, size=L)

    # TODO(synk): scheduled sampling, alignment-based attention masking,
    # label smoothing loss and beam search are not exercised (teacher-forcing,
    # aligns=None, lsm_weight=0 forward path only).
    loss = decoder_forward(padded_input, encoder_outputs, params, kparams)
    loss = jax.block_until_ready(loss)
    print("KERNEL_OK")
</pallas_src>

<mosaic_0001>
module attributes {stable_mosaic.version = 11 : i64} {
  func.func @_fused_decoder_kernel(%arg0: memref<8x2x16xf32, #tpu.memory_space<vmem>>, %arg1: memref<32x24xf32, #tpu.memory_space<vmem>>, %arg2: memref<24x32xf32, #tpu.memory_space<vmem>>, %arg3: memref<2x24xf32, #tpu.memory_space<vmem>>, %arg4: memref<80x128xf32, #tpu.memory_space<vmem>>, %arg5: memref<1x128xf32, #tpu.memory_space<vmem>>, %arg6: memref<32x24xf32, #tpu.memory_space<vmem>>, %arg7: memref<1x24xf32, #tpu.memory_space<vmem>>, %arg8: memref<24x128xf32, #tpu.memory_space<vmem>>, %arg9: memref<32x128xf32, #tpu.memory_space<vmem>>, %arg10: memref<1x128xf32, #tpu.memory_space<vmem>>, %arg11: memref<32x32xf32, #tpu.memory_space<vmem>>, %arg12: memref<32x32xf32, #tpu.memory_space<vmem>>, %arg13: memref<1x32xf32, #tpu.memory_space<vmem>>, %arg14: memref<32x128xf32, #tpu.memory_space<vmem>>, %arg15: memref<1x128xf32, #tpu.memory_space<vmem>>, %arg16: memref<8x2x128xf32, #tpu.memory_space<vmem>>, %arg17: memref<2x80xf32, #tpu.memory_space<vmem>>) attributes {dimension_semantics = [], scalar_prefetch = 0 : i64, scratch_operands = 1 : i64, tpu.core_type = #tpu.core_type<tc>} {
    %c0 = arith.constant 0 : index
    %c0_0 = arith.constant 0 : index
    %0 = vector.load %arg1[%c0, %c0_0] : memref<32x24xf32, #tpu.memory_space<vmem>>, vector<32x24xf32>
    %c0_1 = arith.constant 0 : index
    %c0_2 = arith.constant 0 : index
    %1 = vector.load %arg2[%c0_1, %c0_2] : memref<24x32xf32, #tpu.memory_space<vmem>>, vector<24x32xf32>
    %c0_3 = arith.constant 0 : index
    %c0_4 = arith.constant 0 : index
    %2 = vector.load %arg3[%c0_3, %c0_4] : memref<2x24xf32, #tpu.memory_space<vmem>>, vector<2x24xf32>
    %c0_5 = arith.constant 0 : index
    %c0_6 = arith.constant 0 : index
    %3 = vector.load %arg4[%c0_5, %c0_6] : memref<80x128xf32, #tpu.memory_space<vmem>>, vector<80x128xf32>
    %c0_7 = arith.constant 0 : index
    %c0_8 = arith.constant 0 : index
    %4 = vector.load %arg5[%c0_7, %c0_8] : memref<1x128xf32, #tpu.memory_space<vmem>>, vector<1x128xf32>
    %c0_9 = arith.constant 0 : index
    %c0_10 = arith.constant 0 : index
    %5 = vector.load %arg6[%c0_9, %c0_10] : memref<32x24xf32, #tpu.memory_space<vmem>>, vector<32x24xf32>
    %c0_11 = arith.constant 0 : index
    %c0_12 = arith.constant 0 : index
    %6 = vector.load %arg7[%c0_11, %c0_12] : memref<1x24xf32, #tpu.memory_space<vmem>>, vector<1x24xf32>
    %c0_13 = arith.constant 0 : index
    %c0_14 = arith.constant 0 : index
    %7 = vector.load %arg8[%c0_13, %c0_14] : memref<24x128xf32, #tpu.memory_space<vmem>>, vector<24x128xf32>
    %c0_15 = arith.constant 0 : index
    %c0_16 = arith.constant 0 : index
    %8 = vector.load %arg9[%c0_15, %c0_16] : memref<32x128xf32, #tpu.memory_space<vmem>>, vector<32x128xf32>
    %c0_17 = arith.constant 0 : index
    %c0_18 = arith.constant 0 : index
    %9 = vector.load %arg10[%c0_17, %c0_18] : memref<1x128xf32, #tpu.memory_space<vmem>>, vector<1x128xf32>
    %c0_19 = arith.constant 0 : index
    %c0_20 = arith.constant 0 : index
    %10 = vector.load %arg11[%c0_19, %c0_20] : memref<32x32xf32, #tpu.memory_space<vmem>>, vector<32x32xf32>
    %c0_21 = arith.constant 0 : index
    %c0_22 = arith.constant 0 : index
    %11 = vector.load %arg12[%c0_21, %c0_22] : memref<32x32xf32, #tpu.memory_space<vmem>>, vector<32x32xf32>
    %c0_23 = arith.constant 0 : index
    %c0_24 = arith.constant 0 : index
    %12 = vector.load %arg13[%c0_23, %c0_24] : memref<1x32xf32, #tpu.memory_space<vmem>>, vector<1x32xf32>
    %c0_25 = arith.constant 0 : index
    %c0_26 = arith.constant 0 : index
    %13 = vector.load %arg14[%c0_25, %c0_26] : memref<32x128xf32, #tpu.memory_space<vmem>>, vector<32x128xf32>
    %c0_27 = arith.constant 0 : index
    %c0_28 = arith.constant 0 : index
    %14 = vector.load %arg15[%c0_27, %c0_28] : memref<1x128xf32, #tpu.memory_space<vmem>>, vector<1x128xf32>
    %cst = arith.constant 0.000000e+00 : f32
    %15 = vector.broadcast %cst : f32 to vector<2x32xf32>
    %cst_29 = arith.constant 0.000000e+00 : f32
    %16 = vector.broadcast %cst_29 : f32 to vector<2x32xf32>
    %cst_30 = arith.constant 0.000000e+00 : f32
    %17 = vector.broadcast %cst_30 : f32 to vector<2x32xf32>
    %cst_31 = arith.constant 0.000000e+00 : f32
    %18 = vector.broadcast %cst_31 : f32 to vector<2x32xf32>
    %cst_32 = arith.constant 0.000000e+00 : f32
    %19 = vector.broadcast %cst_32 : f32 to vector<2x32xf32>
    %c0_33 = arith.constant 0 : index
    %c0_34 = arith.constant 0 : index
    %c0_35 = arith.constant 0 : index
    %20 = vector.load %arg0[%c0_33, %c0_34, %c0_35] : memref<8x2x16xf32, #tpu.memory_space<vmem>>, vector<1x2x16xf32>
    %21 = vector.shape_cast %20 : vector<1x2x16xf32> to vector<2x16xf32>
    %c0_36 = arith.constant 0 : index
    %c0_37 = arith.constant 0 : index
    %22 = vector.load %arg17[%c0_36, %c0_37] : memref<2x80xf32, #tpu.memory_space<vmem>>, vector<2x16xf32>
    tpu.vector_store %arg17[%c0_36, %c0_37], %21 {strides = array<i32>} : memref<2x80xf32, #tpu.memory_space<vmem>>, vector<2x16xf32>,
    %c0_38 = arith.constant 0 : index
    %c16 = arith.constant 16 : index
    %23 = vector.load %arg17[%c0_38, %c16] : memref<2x80xf32, #tpu.memory_space<vmem>>, vector<2x32xf32>
    tpu.vector_store %arg17[%c0_38, %c16], %19 {strides = array<i32>} : memref<2x80xf32, #tpu.memory_space<vmem>>, vector<2x32xf32>,
    %c0_39 = arith.constant 0 : index
    %c48 = arith.constant 48 : index
    %24 = vector.load %arg17[%c0_39, %c48] : memref<2x80xf32, #tpu.memory_space<vmem>>, vector<2x32xf32>
    tpu.vector_store %arg17[%c0_39, %c48], %15 {strides = array<i32>} : memref<2x80xf32, #tpu.memory_space<vmem>>, vector<2x32xf32>,
    %c0_40 = arith.constant 0 : index
    %c0_41 = arith.constant 0 : index
    %25 = vector.load %arg17[%c0_40, %c0_41] : memref<2x80xf32, #tpu.memory_space<vmem>>, vector<2x80xf32>
    %cst_42 = arith.constant dense<0.000000e+00> : vector<2x128xf32>
    %26 = tpu.matmul %25, %3, %cst_42 {dimension_numbers = #tpu.dot_dimension_numbers<[1], [0], [0], [1], [0, 0, 1, 1], [], []>} : vector<2x80xf32>, vector<80x128xf32>, vector<2x128xf32> -> vector<2x128xf32>
    %27 = vector.broadcast %4 : vector<1x128xf32> to vector<2x128xf32>
    %28 = arith.addf %26, %27 : vector<2x128xf32>
    %29 = arith.negf %28 : vector<2x128xf32>
    %30 = math.exp %29 : vector<2x128xf32>
    %cst_43 = arith.constant 1.000000e+00 : f32
    %31 = vector.broadcast %cst_43 : f32 to vector<2x128xf32>
    %32 = arith.addf %31, %30 : vector<2x128xf32>
    %33 = arith.divf %31, %32 : vector<2x128xf32>
    %34 = math.tanh %28 : vector<2x128xf32>
    %35 = vector.extract_strided_slice %33 {offsets = [0, 0], sizes = [2, 32], strides = [1, 1]} : vector<2x128xf32> to vector<2x32xf32>
    %36 = vector.extract_strided_slice %33 {offsets = [0, 32], sizes = [2, 32], strides = [1, 1]} : vector<2x128xf32> to vector<2x32xf32>
    %37 = vector.extract_strided_slice %34 {offsets = [0, 64], sizes = [2, 32], strides = [1, 1]} : vector<2x128xf32> to vector<2x32xf32>
    %38 = vector.extract_strided_slice %33 {offsets = [0, 96], sizes = [2, 32], strides = [1, 1]} : vector<2x128xf32> to vector<2x32xf32>
    %39 = arith.mulf %36, %16 : vector<2x32xf32>
    %40 = arith.mulf %35, %37 : vector<2x32xf32>
    %41 = arith.addf %39, %40 : vector<2x32xf32>
    %42 = math.tanh %41 : vector<2x32xf32>
    %43 = arith.mulf %38, %42 : vector<2x32xf32>
    %cst_44 = arith.constant dense<0.000000e+00> : vector<2x24xf32>
    %44 = tpu.matmul %43, %5, %cst_44 {dimension_numbers = #tpu.dot_dimension_numbers<[1], [0], [0], [1], [0, 0, 1, 1], [], []>} : vector<2x32xf32>, vector<32x24xf32>, vector<2x24xf32> -> vector<2x24xf32>
    %45 = vector.broadcast %6 : vector<1x24xf32> to vector<2x24xf32>
    %46 = arith.addf %44, %45 : vector<2x24xf32>
    %cst_45 = arith.constant dense<0.000000e+00> : vector<2x128xf32>
    %47 = tpu.matmul %46, %7, %cst_45 {dimension_numbers = #tpu.dot_dimension_numbers<[1], [0], [0], [1], [0, 0, 1, 1], [], []>} : vector<2x24xf32>, vector<24x128xf32>, vector<2x128xf32> -> vector<2x128xf32>
    %cst_46 = arith.constant dense<0.000000e+00> : vector<2x128xf32>
    %48 = tpu.matmul %17, %8, %cst_46 {dimension_numbers = #tpu.dot_dimension_numbers<[1], [0], [0], [1], [0, 0, 1, 1], [], []>} : vector<2x32xf32>, vector<32x128xf32>, vector<2x128xf32> -> vector<2x128xf32>
    %49 = arith.addf %47, %48 : vector<2x128xf32>
    %50 = vector.broadcast %9 : vector<1x128xf32> to vector<2x128xf32>
    %51 = arith.addf %49, %50 : vector<2x128xf32>
    %52 = arith.negf %51 : vector<2x128xf32>
    %53 = math.exp %52 : vector<2x128xf32>
    %cst_47 = arith.constant 1.000000e+00 : f32
    %54 = vector.broadcast %cst_47 : f32 to vector<2x128xf32>
    %55 = arith.addf %54, %53 : vector<2x128xf32>
    %56 = arith.divf %54, %55 : vector<2x128xf32>
    %57 = math.tanh %51 : vector<2x128xf32>
    %58 = vector.extract_strided_slice %56 {offsets = [0, 0], sizes = [2, 32], strides = [1, 1]} : vector<2x128xf32> to vector<2x32xf32>
    %59 = vector.extract_strided_slice %56 {offsets = [0, 32], sizes = [2, 32], strides = [1, 1]} : vector<2x128xf32> to vector<2x32xf32>
    %60 = vector.extract_strided_slice %57 {offsets = [0, 64], sizes = [2, 32], strides = [1, 1]} : vector<2x128xf32> to vector<2x32xf32>
    %61 = vector.extract_strided_slice %56 {offsets = [0, 96], sizes = [2, 32], strides = [1, 1]} : vector<2x128xf32> to vector<2x32xf32>
    %62 = arith.mulf %59, %18 : vector<2x32xf32>
    %63 = arith.mulf %58, %60 : vector<2x32xf32>
    %64 = arith.addf %62, %63 : vector<2x32xf32>
    %65 = math.tanh %64 : vector<2x32xf32>
    %66 = arith.mulf %61, %65 : vector<2x32xf32>
    %cst_48 = arith.constant dense<0.000000e+00> : vector<2x24xf32>
    %67 = tpu.matmul %66, %0, %cst_48 {dimension_numbers = #tpu.dot_dimension_numbers<[1], [0], [0], [1], [0, 0, 1, 1], [], []>} : vector<2x32xf32>, vector<32x24xf32>, vector<2x24xf32> -> vector<2x24xf32>
    %68 = arith.addf %67, %2 : vector<2x24xf32>
    %cst_49 = arith.constant dense<0xFF800000> : vector<2xf32>
    %69 = vector.multi_reduction <maximumf>, %68, %cst_49 [1] : vector<2x24xf32> to vector<2xf32>
    %70 = vector.shape_cast %69 : vector<2xf32> to vector<2x1xf32>
    %71 = vector.broadcast %70 : vector<2x1xf32> to vector<2x24xf32>
    %72 = arith.subf %68, %71 : vector<2x24xf32>
    %73 = math.exp %72 : vector<2x24xf32>
    %cst_50 = arith.constant dense<0.000000e+00> : vector<2xf32>
    %74 = vector.multi_reduction <add>, %73, %cst_50 [1] : vector<2x24xf32> to vector<2xf32>
    %75 = vector.shape_cast %74 : vector<2xf32> to vector<2x1xf32>
    %76 = tpu.reciprocal %75 {approx = true} : vector<2x1xf32> -> vector<2x1xf32>
    %77 = vector.broadcast %76 : vector<2x1xf32> to vector<2x24xf32>
    %78 = arith.mulf %73, %77 : vector<2x24xf32>
    %cst_51 = arith.constant dense<0.000000e+00> : vector<2x32xf32>
    %79 = tpu.matmul %78, %1, %cst_51 {dimension_numbers = #tpu.dot_dimension_numbers<[1], [0], [0], [1], [0, 0, 1, 1], [], []>} : vector<2x24xf32>, vector<24x32xf32>, vector<2x32xf32> -> vector<2x32xf32>
    %cst_52 = arith.constant dense<0.000000e+00> : vector<2x32xf32>
    %80 = tpu.matmul %66, %10, %cst_52 {dimension_numbers = #tpu.dot_dimension_numbers<[1], [0], [0], [1], [0, 0, 1, 1], [], []>} : vector<2x32xf32>, vector<32x32xf32>, vector<2x32xf32> -> vector<2x32xf32>
    %cst_53 = arith.constant dense<0.000000e+00> : vector<2x32xf32>
    %81 = tpu.matmul %79, %11, %cst_53 {dimension_numbers = #tpu.dot_dimension_numbers<[1], [0], [0], [1], [0, 0, 1, 1], [], []>} : vector<2x32xf32>, vector<32x32xf32>, vector<2x32xf32> -> vector<2x32xf32>
    %82 = arith.addf %80, %81 : vector<2x32xf32>
    %83 = vector.broadcast %12 : vector<1x32xf32> to vector<2x32xf32>
    %84 = arith.addf %82, %83 : vector<2x32xf32>
    %85 = math.tanh %84 : vector<2x32xf32>
    %cst_54 = arith.constant dense<0.000000e+00> : vector<2x128xf32>
    %86 = tpu.matmul %85, %13, %cst_54 {dimension_numbers = #tpu.dot_dimension_numbers<[1], [0], [0], [1], [0, 0, 1, 1], [], []>} : vector<2x32xf32>, vector<32x128xf32>, vector<2x128xf32> -> vector<2x128xf32>
    %87 = vector.broadcast %14 : vector<1x128xf32> to vector<2x128xf32>
    %88 = arith.addf %86, %87 : vector<2x128xf32>
    %cst_55 = arith.constant dense<0xFF800000> : vector<2xf32>
    %89 = vector.multi_reduction <maximumf>, %88, %cst_55 [1] : vector<2x128xf32> to vector<2xf32>
    %90 = vector.shape_cast %89 : vector<2xf32> to vector<2x1xf32>
    %91 = vector.broadcast %90 : vector<2x1xf32> to vector<2x128xf32>
    %92 = arith.subf %88, %91 : vector<2x128xf32>
    %93 = math.exp %92 : vector<2x128xf32>
    %cst_56 = arith.constant dense<0.000000e+00> : vector<2xf32>
    %94 = vector.multi_reduction <add>, %93, %cst_56 [1] : vector<2x128xf32> to vector<2xf32>
    %95 = vector.shape_cast %94 : vector<2xf32> to vector<2x1xf32>
    %96 = math.log %95 : vector<2x1xf32>
    %97 = arith.addf %96, %90 : vector<2x1xf32>
    %98 = vector.broadcast %97 : vector<2x1xf32> to vector<2x128xf32>
    %99 = arith.subf %88, %98 : vector<2x128xf32>
    %c0_57 = arith.constant 0 : index
    %c0_58 = arith.constant 0 : index
    %c0_59 = arith.constant 0 : index
    %100 = vector.load %arg16[%c0_57, %c0_58, %c0_59] : memref<8x2x128xf32, #tpu.memory_space<vmem>>, vector<1x2x128xf32>
    %101 = vector.shape_cast %100 : vector<1x2x128xf32> to vector<2x128xf32>
    %102 = vector.shape_cast %99 : vector<2x128xf32> to vector<1x2x128xf32>
    tpu.vector_store %arg16[%c0_57, %c0_58, %c0_59], %102 {strides = array<i32>} : memref<8x2x128xf32, #tpu.memory_space<vmem>>, vector<1x2x128xf32>,
    %c1 = arith.constant 1 : index
    %c0_60 = arith.constant 0 : index
    %c0_61 = arith.constant 0 : index
    %103 = vector.load %arg0[%c1, %c0_60, %c0_61] : memref<8x2x16xf32, #tpu.memory_space<vmem>>, vector<1x2x16xf32>
    %104 = vector.shape_cast %103 : vector<1x2x16xf32> to vector<2x16xf32>
    %c0_62 = arith.constant 0 : index
    %c0_63 = arith.constant 0 : index
    %105 = vector.load %arg17[%c0_62, %c0_63] : memref<2x80xf32, #tpu.memory_space<vmem>>, vector<2x16xf32>
    tpu.vector_store %arg17[%c0_62, %c0_63], %104 {strides = array<i32>} : memref<2x80xf32, #tpu.memory_space<vmem>>, vector<2x16xf32>,
    %c0_64 = arith.constant 0 : index
    %c16_65 = arith.constant 16 : index
    %106 = vector.load %arg17[%c0_64, %c16_65] : memref<2x80xf32, #tpu.memory_space<vmem>>, vector<2x32xf32>
    tpu.vector_store %arg17[%c0_64, %c16_65], %79 {strides = array<i32>} : memref<2x80xf32, #tpu.memory_space<vmem>>, vector<2x32xf32>,
    %c0_66 = arith.constant 0 : index
    %c48_67 = arith.constant 48 : index
    %107 = vector.load %arg17[%c0_66, %c48_67] : memref<2x80xf32, #tpu.memory_space<vmem>>, vector<2x32xf32>
    tpu.vector_store %arg17[%c0_66, %c48_67], %43 {strides = array<i32>} : memref<2x80xf32, #tpu.memory_space<vmem>>, vector<2x32xf32>,
    %c0_68 = arith.constant 0 : index
    %c0_69 = arith.constant 0 : index
    %108 = vector.load %arg17[%c0_68, %c0_69] : memref<2x80xf32, #tpu.memory_space<vmem>>, vector<2x80xf32>
    %cst_70 = arith.constant dense<0.000000e+00> : vector<2x128xf32>
    %109 = tpu.matmul %108, %3, %cst_70 {dimension_numbers = #tpu.dot_dimension_numbers<[1], [0], [0], [1], [0, 0, 1, 1], [], []>} : vector<2x80xf32>, vector<80x128xf32>, vector<2x128xf32> -> vector<2x128xf32>
    %110 = vector.broadcast %4 : vector<1x128xf32> to vector<2x128xf32>
    %111 = arith.addf %109, %110 : vector<2x128xf32>
    %112 = arith.negf %111 : vector<2x128xf32>
    %113 = math.exp %112 : vector<2x128xf32>
    %cst_71 = arith.constant 1.000000e+00 : f32
    %114 = vector.broadcast %cst_71 : f32 to vector<2x128xf32>
    %115 = arith.addf %114, %113 : vector<2x128xf32>
    %116 = arith.divf %114, %115 : vector<2x128xf32>
    %117 = math.tanh %111 : vector<2x128xf32>
    %118 = vector.extract_strided_slice %116 {offsets = [0, 0], sizes = [2, 32], strides = [1, 1]} : vector<2x128xf32> to vector<2x32xf32>
    %119 = vector.extract_strided_slice %116 {offsets = [0, 32], sizes = [2, 32], strides = [1, 1]} : vector<2x128xf32> to vector<2x32xf32>
    %120 = vector.extract_strided_slice %117 {offsets = [0, 64], sizes = [2, 32], strides = [1, 1]} : vector<2x128xf32> to vector<2x32xf32>
    %121 = vector.extract_strided_slice %116 {offsets = [0, 96], sizes = [2, 32], strides = [1, 1]} : vector<2x128xf32> to vector<2x32xf32>
    %122 = arith.mulf %119, %41 : vector<2x32xf32>
    %123 = arith.mulf %118, %120 : vector<2x32xf32>
    %124 = arith.addf %122, %123 : vector<2x32xf32>
    %125 = math.tanh %124 : vector<2x32xf32>
    %126 = arith.mulf %121, %125 : vector<2x32xf32>
    %cst_72 = arith.constant dense<0.000000e+00> : vector<2x24xf32>
    %127 = tpu.matmul %126, %5, %cst_72 {dimension_numbers = #tpu.dot_dimension_numbers<[1], [0], [0], [1], [0, 0, 1, 1], [], []>} : vector<2x32xf32>, vector<32x24xf32>, vector<2x24xf32> -> vector<2x24xf32>
    %128 = vector.broadcast %6 : vector<1x24xf32> to vector<2x24xf32>
    %129 = arith.addf %127, %128 : vector<2x24xf32>
    %cst_73 = arith.constant dense<0.000000e+00> : vector<2x128xf32>
    %130 = tpu.matmul %129, %7, %cst_73 {dimension_numbers = #tpu.dot_dimension_numbers<[1], [0], [0], [1], [0, 0, 1, 1], [], []>} : vector<2x24xf32>, vector<24x128xf32>, vector<2x128xf32> -> vector<2x128xf32>
    %cst_74 = arith.constant dense<0.000000e+00> : vector<2x128xf32>
    %131 = tpu.matmul %66, %8, %cst_74 {dimension_numbers = #tpu.dot_dimension_numbers<[1], [0], [0], [1], [0, 0, 1, 1], [], []>} : vector<2x32xf32>, vector<32x128xf32>, vector<2x128xf32> -> vector<2x128xf32>
    %132 = arith.addf %130, %131 : vector<2x128xf32>
    %133 = vector.broadcast %9 : vector<1x128xf32> to vector<2x128xf32>
    %134 = arith.addf %132, %133 : vector<2x128xf32>
    %135 = arith.negf %134 : vector<2x128xf32>
    %136 = math.exp %135 : vector<2x128xf32>
    %cst_75 = arith.constant 1.000000e+00 : f32
    %137 = vector.broadcast %cst_75 : f32 to vector<2x128xf32>
    %138 = arith.addf %137, %136 : vector<2x128xf32>
    %139 = arith.divf %137, %138 : vector<2x128xf32>
    %140 = math.tanh %134 : vector<2x128xf32>
    %141 = vector.extract_strided_slice %139 {offsets = [0, 0], sizes = [2, 32], strides = [1, 1]} : vector<2x128xf32> to vector<2x32xf32>
    %142 = vector.extract_strided_slice %139 {offsets = [0, 32], sizes = [2, 32], strides = [1, 1]} : vector<2x128xf32> to vector<2x32xf32>
    %143 = vector.extract_strided_slice %140 {offsets = [0, 64], sizes = [2, 32], strides = [1, 1]} : vector<2x128xf32> to vector<2x32xf32>
    %144 = vector.extract_strided_slice %139 {offsets = [0, 96], sizes = [2, 32], strides = [1, 1]} : vector<2x128xf32> to vector<2x32xf32>
    %145 = arith.mulf %142, %64 : vector<2x32xf32>
    %146 = arith.mulf %141, %143 : vector<2x32xf32>
    %147 = arith.addf %145, %146 : vector<2x32xf32>
    %148 = math.tanh %147 : vector<2x32xf32>
    %149 = arith.mulf %144, %148 : vector<2x32xf32>
    %cst_76 = arith.constant dense<0.000000e+00> : vector<2x24xf32>
    %150 = tpu.matmul %149, %0, %cst_76 {dimension_numbers = #tpu.dot_dimension_numbers<[1], [0], [0], [1], [0, 0, 1, 1], [], []>} : vector<2x32xf32>, vector<32x24xf32>, vector<2x24xf32> -> vector<2x24xf32>
    %151 = arith.addf %150, %2 : vector<2x24xf32>
    %cst_77 = arith.constant dense<0xFF800000> : vector<2xf32>
    %152 = vector.multi_reduction <maximumf>, %151, %cst_77 [1] : vector<2x24xf32> to vector<2xf32>
    %153 = vector.shape_cast %152 : vector<2xf32> to vector<2x1xf32>
    %154 = vector.broadcast %153 : vector<2x1xf32> to vector<2x24xf32>
    %155 = arith.subf %151, %154 : vector<2x24xf32>
    %156 = math.exp %155 : vector<2x24xf32>
    %cst_78 = arith.constant dense<0.000000e+00> : vector<2xf32>
    %157 = vector.multi_reduction <add>, %156, %cst_78 [1] : vector<2x24xf32> to vector<2xf32>
    %158 = vector.shape_cast %157 : vector<2xf32> to vector<2x1xf32>
    %159 = tpu.reciprocal %158 {approx = true} : vector<2x1xf32> -> vector<2x1xf32>
    %160 = vector.broadcast %159 : vector<2x1xf32> to vector<2x24xf32>
    %161 = arith.mulf %156, %160 : vector<2x24xf32>
    %cst_79 = arith.constant dense<0.000000e+00> : vector<2x32xf32>
    %162 = tpu.matmul %161, %1, %cst_79 {dimension_numbers = #tpu.dot_dimension_numbers<[1], [0], [0], [1], [0, 0, 1, 1], [], []>} : vector<2x24xf32>, vector<24x32xf32>, vector<2x32xf32> -> vector<2x32xf32>
    %cst_80 = arith.constant dense<0.000000e+00> : vector<2x32xf32>
    %163 = tpu.matmul %149, %10, %cst_80 {dimension_numbers = #tpu.dot_dimension_numbers<[1], [0], [0], [1], [0, 0, 1, 1], [], []>} : vector<2x32xf32>, vector<32x32xf32>, vector<2x32xf32> -> vector<2x32xf32>
    %cst_81 = arith.constant dense<0.000000e+00> : vector<2x32xf32>
    %164 = tpu.matmul %162, %11, %cst_81 {dimension_numbers = #tpu.dot_dimension_numbers<[1], [0], [0], [1], [0, 0, 1, 1], [], []>} : vector<2x32xf32>, vector<32x32xf32>, vector<2x32xf32> -> vector<2x32xf32>
    %165 = arith.addf %163, %164 : vector<2x32xf32>
    %166 = vector.broadcast %12 : vector<1x32xf32> to vector<2x32xf32>
    %167 = arith.addf %165, %166 : vector<2x32xf32>
    %168 = math.tanh %167 : vector<2x32xf32>
    %cst_82 = arith.constant dense<0.000000e+00> : vector<2x128xf32>
    %169 = tpu.matmul %168, %13, %cst_82 {dimension_numbers = #tpu.dot_dimension_numbers<[1], [0], [0], [1], [0, 0, 1, 1], [], []>} : vector<2x32xf32>, vector<32x128xf32>, vector<2x128xf32> -> vector<2x128xf32>
    %170 = vector.broadcast %14 : vector<1x128xf32> to vector<2x128xf32>
    %171 = arith.addf %169, %170 : vector<2x128xf32>
    %cst_83 = arith.constant dense<0xFF800000> : vector<2xf32>
    %172 = vector.multi_reduction <maximumf>, %171, %cst_83 [1] : vector<2x128xf32> to vector<2xf32>
    %173 = vector.shape_cast %172 : vector<2xf32> to vector<2x1xf32>
    %174 = vector.broadcast %173 : vector<2x1xf32> to vector<2x128xf32>
    %175 = arith.subf %171, %174 : vector<2x128xf32>
    %176 = math.exp %175 : vector<2x128xf32>
    %cst_84 = arith.constant dense<0.000000e+00> : vector<2xf32>
    %177 = vector.multi_reduction <add>, %176, %cst_84 [1] : vector<2x128xf32> to vector<2xf32>
    %178 = vector.shape_cast %177 : vector<2xf32> to vector<2x1xf32>
    %179 = math.log %178 : vector<2x1xf32>
    %180 = arith.addf %179, %173 : vector<2x1xf32>
    %181 = vector.broadcast %180 : vector<2x1xf32> to vector<2x128xf32>
    %182 = arith.subf %171, %181 : vector<2x128xf32>
    %c1_85 = arith.constant 1 : index
    %c0_86 = arith.constant 0 : index
    %c0_87 = arith.constant 0 : index
    %183 = vector.load %arg16[%c1_85, %c0_86, %c0_87] : memref<8x2x128xf32, #tpu.memory_space<vmem>>, vector<1x2x128xf32>
    %184 = vector.shape_cast %183 : vector<1x2x128xf32> to vector<2x128xf32>
    %185 = vector.shape_cast %182 : vector<2x128xf32> to vector<1x2x128xf32>
    tpu.vector_store %arg16[%c1_85, %c0_86, %c0_87], %185 {strides = array<i32>} : memref<8x2x128xf32, #tpu.memory_space<vmem>>, vector<1x2x128xf32>,
    %c2 = arith.constant 2 : index
    %c0_88 = arith.constant 0 : index
    %c0_89 = arith.constant 0 : index
    %186 = vector.load %arg0[%c2, %c0_88, %c0_89] : memref<8x2x16xf32, #tpu.memory_space<vmem>>, vector<1x2x16xf32>
    %187 = vector.shape_cast %186 : vector<1x2x16xf32> to vector<2x16xf32>
    %c0_90 = arith.constant 0 : index
    %c0_91 = arith.constant 0 : index
    %188 = vector.load %arg17[%c0_90, %c0_91] : memref<2x80xf32, #tpu.memory_space<vmem>>, vector<2x16xf32>
    tpu.vector_store %arg17[%c0_90, %c0_91], %187 {strides = array<i32>} : memref<2x80xf32, #tpu.memory_space<vmem>>, vector<2x16xf32>,
    %c0_92 = arith.constant 0 : index
    %c16_93 = arith.constant 16 : index
    %189 = vector.load %arg17[%c0_92, %c16_93] : memref<2x80xf32, #tpu.memory_space<vmem>>, vector<2x32xf32>
    tpu.vector_store %arg17[%c0_92, %c16_93], %162 {strides = array<i32>} : memref<2x80xf32, #tpu.memory_space<vmem>>, vector<2x32xf32>,
    %c0_94 = arith.constant 0 : index
    %c48_95 = arith.constant 48 : index
    %190 = vector.load %arg17[%c0_94, %c48_95] : memref<2x80xf32, #tpu.memory_space<vmem>>, vector<2x32xf32>
    tpu.vector_store %arg17[%c0_94, %c48_95], %126 {strides = array<i32>} : memref<2x80xf32, #tpu.memory_space<vmem>>, vector<2x32xf32>,
    %c0_96 = arith.constant 0 : index
    %c0_97 = arith.constant 0 : index
    %191 = vector.load %arg17[%c0_96, %c0_97] : memref<2x80xf32, #tpu.memory_space<vmem>>, vector<2x80xf32>
    %cst_98 = arith.constant dense<0.000000e+00> : vector<2x128xf32>
    %192 = tpu.matmul %191, %3, %cst_98 {dimension_numbers = #tpu.dot_dimension_numbers<[1], [0], [0], [1], [0, 0, 1, 1], [], []>} : vector<2x80xf32>, vector<80x128xf32>, vector<2x128xf32> -> vector<2x128xf32>
    %193 = vector.broadcast %4 : vector<1x128xf32> to vector<2x128xf32>
    %194 = arith.addf %192, %193 : vector<2x128xf32>
    %195 = arith.negf %194 : vector<2x128xf32>
    %196 = math.exp %195 : vector<2x128xf32>
    %cst_99 = arith.constant 1.000000e+00 : f32
    %197 = vector.broadcast %cst_99 : f32 to vector<2x128xf32>
    %198 = arith.addf %197, %196 : vector<2x128xf32>
    %199 = arith.divf %197, %198 : vector<2x128xf32>
    %200 = math.tanh %194 : vector<2x128xf32>
    %201 = vector.extract_strided_slice %199 {offsets = [0, 0], sizes = [2, 32], strides = [1, 1]} : vector<2x128xf32> to vector<2x32xf32>
    %202 = vector.extract_strided_slice %199 {offsets = [0, 32], sizes = [2, 32], strides = [1, 1]} : vector<2x128xf32> to vector<2x32xf32>
    %203 = vector.extract_strided_slice %200 {offsets = [0, 64], sizes = [2, 32], strides = [1, 1]} : vector<2x128xf32> to vector<2x32xf32>
    %204 = vector.extract_strided_slice %199 {offsets = [0, 96], sizes = [2, 32], strides = [1, 1]} : vector<2x128xf32> to vector<2x32xf32>
    %205 = arith.mulf %202, %124 : vector<2x32xf32>
    %206 = arith.mulf %201, %203 : vector<2x32xf32>
    %207 = arith.addf %205, %206 : vector<2x32xf32>
    %208 = math.tanh %207 : vector<2x32xf32>
    %209 = arith.mulf %204, %208 : vector<2x32xf32>
    %cst_100 = arith.constant dense<0.000000e+00> : vector<2x24xf32>
    %210 = tpu.matmul %209, %5, %cst_100 {dimension_numbers = #tpu.dot_dimension_numbers<[1], [0], [0], [1], [0, 0, 1, 1], [], []>} : vector<2x32xf32>, vector<32x24xf32>, vector<2x24xf32> -> vector<2x24xf32>
    %211 = vector.broadcast %6 : vector<1x24xf32> to vector<2x24xf32>
    %212 = arith.addf %210, %211 : vector<2x24xf32>
    %cst_101 = arith.constant dense<0.000000e+00> : vector<2x128xf32>
    %213 = tpu.matmul %212, %7, %cst_101 {dimension_numbers = #tpu.dot_dimension_numbers<[1], [0], [0], [1], [0, 0, 1, 1], [], []>} : vector<2x24xf32>, vector<24x128xf32>, vector<2x128xf32> -> vector<2x128xf32>
    %cst_102 = arith.constant dense<0.000000e+00> : vector<2x128xf32>
    %214 = tpu.matmul %149, %8, %cst_102 {dimension_numbers = #tpu.dot_dimension_numbers<[1], [0], [0], [1], [0, 0, 1, 1], [], []>} : vector<2x32xf32>, vector<32x128xf32>, vector<2x128xf32> -> vector<2x128xf32>
    %215 = arith.addf %213, %214 : vector<2x128xf32>
    %216 = vector.broadcast %9 : vector<1x128xf32> to vector<2x128xf32>
    %217 = arith.addf %215, %216 : vector<2x128xf32>
    %218 = arith.negf %217 : vector<2x128xf32>
    %219 = math.exp %218 : vector<2x128xf32>
    %cst_103 = arith.constant 1.000000e+00 : f32
    %220 = vector.broadcast %cst_103 : f32 to vector<2x128xf32>
    %221 = arith.addf %220, %219 : vector<2x128xf32>
    %222 = arith.divf %220, %221 : vector<2x128xf32>
    %223 = math.tanh %217 : vector<2x128xf32>
    %224 = vector.extract_strided_slice %222 {offsets = [0, 0], sizes = [2, 32], strides = [1, 1]} : vector<2x128xf32> to vector<2x32xf32>
    %225 = vector.extract_strided_slice %222 {offsets = [0, 32], sizes = [2, 32], strides = [1, 1]} : vector<2x128xf32> to vector<2x32xf32>
    %226 = vector.extract_strided_slice %223 {offsets = [0, 64], sizes = [2, 32], strides = [1, 1]} : vector<2x128xf32> to vector<2x32xf32>
    %227 = vector.extract_strided_slice %222 {offsets = [0, 96], sizes = [2, 32], strides = [1, 1]} : vector<2x128xf32> to vector<2x32xf32>
    %228 = arith.mulf %225, %147 : vector<2x32xf32>
    %229 = arith.mulf %224, %226 : vector<2x32xf32>
    %230 = arith.addf %228, %229 : vector<2x32xf32>
    %231 = math.tanh %230 : vector<2x32xf32>
    %232 = arith.mulf %227, %231 : vector<2x32xf32>
    %cst_104 = arith.constant dense<0.000000e+00> : vector<2x24xf32>
    %233 = tpu.matmul %232, %0, %cst_104 {dimension_numbers = #tpu.dot_dimension_numbers<[1], [0], [0], [1], [0, 0, 1, 1], [], []>} : vector<2x32xf32>, vector<32x24xf32>, vector<2x24xf32> -> vector<2x24xf32>
    %234 = arith.addf %233, %2 : vector<2x24xf32>
    %cst_105 = arith.constant dense<0xFF800000> : vector<2xf32>
    %235 = vector.multi_reduction <maximumf>, %234, %cst_105 [1] : vector<2x24xf32> to vector<2xf32>
    %236 = vector.shape_cast %235 : vector<2xf32> to vector<2x1xf32>
    %237 = vector.broadcast %236 : vector<2x1xf32> to vector<2x24xf32>
    %238 = arith.subf %234, %237 : vector<2x24xf32>
    %239 = math.exp %238 : vector<2x24xf32>
    %cst_106 = arith.constant dense<0.000000e+00> : vector<2xf32>
    %240 = vector.multi_reduction <add>, %239, %cst_106 [1] : vector<2x24xf32> to vector<2xf32>
    %241 = vector.shape_cast %240 : vector<2xf32> to vector<2x1xf32>
    %242 = tpu.reciprocal %241 {approx = true} : vector<2x1xf32> -> vector<2x1xf32>
    %243 = vector.broadcast %242 : vector<2x1xf32> to vector<2x24xf32>
    %244 = arith.mulf %239, %243 : vector<2x24xf32>
    %cst_107 = arith.constant dense<0.000000e+00> : vector<2x32xf32>
    %245 = tpu.matmul %244, %1, %cst_107 {dimension_numbers = #tpu.dot_dimension_numbers<[1], [0], [0], [1], [0, 0, 1, 1], [], []>} : vector<2x24xf32>, vector<24x32xf32>, vector<2x32xf32> -> vector<2x32xf32>
    %cst_108 = arith.constant dense<0.000000e+00> : vector<2x32xf32>
    %246 = tpu.matmul %232, %10, %cst_108 {dimension_numbers = #tpu.dot_dimension_numbers<[1], [0], [0], [1], [0, 0, 1, 1], [], []>} : vector<2x32xf32>, vector<32x32xf32>, vector<2x32xf32> -> vector<2x32xf32>
    %cst_109 = arith.constant dense<0.000000e+00> : vector<2x32xf32>
    %247 = tpu.matmul %245, %11, %cst_109 {dimension_numbers = #tpu.dot_dimension_numbers<[1], [0], [0], [1], [0, 0, 1, 1], [], []>} : vector<2x32xf32>, vector<32x32xf32>, vector<2x32xf32> -> vector<2x32xf32>
    %248 = arith.addf %246, %247 : vector<2x32xf32>
    %249 = vector.broadcast %12 : vector<1x32xf32> to vector<2x32xf32>
    %250 = arith.addf %248, %249 : vector<2x32xf32>
    %251 = math.tanh %250 : vector<2x32xf32>
    %cst_110 = arith.constant dense<0.000000e+00> : vector<2x128xf32>
    %252 = tpu.matmul %251, %13, %cst_110 {dimension_numbers = #tpu.dot_dimension_numbers<[1], [0], [0], [1], [0, 0, 1, 1], [], []>} : vector<2x32xf32>, vector<32x128xf32>, vector<2x128xf32> -> vector<2x128xf32>
    %253 = vector.broadcast %14 : vector<1x128xf32> to vector<2x128xf32>
    %254 = arith.addf %252, %253 : vector<2x128xf32>
    %cst_111 = arith.constant dense<0xFF800000> : vector<2xf32>
    %255 = vector.multi_reduction <maximumf>, %254, %cst_111 [1] : vector<2x128xf32> to vector<2xf32>
    %256 = vector.shape_cast %255 : vector<2xf32> to vector<2x1xf32>
    %257 = vector.broadcast %256 : vector<2x1xf32> to vector<2x128xf32>
    %258 = arith.subf %254, %257 : vector<2x128xf32>
    %259 = math.exp %258 : vector<2x128xf32>
    %cst_112 = arith.constant dense<0.000000e+00> : vector<2xf32>
    %260 = vector.multi_reduction <add>, %259, %cst_112 [1] : vector<2x128xf32> to vector<2xf32>
    %261 = vector.shape_cast %260 : vector<2xf32> to vector<2x1xf32>
    %262 = math.log %261 : vector<2x1xf32>
    %263 = arith.addf %262, %256 : vector<2x1xf32>
    %264 = vector.broadcast %263 : vector<2x1xf32> to vector<2x128xf32>
    %265 = arith.subf %254, %264 : vector<2x128xf32>
    %c2_113 = arith.constant 2 : index
    %c0_114 = arith.constant 0 : index
    %c0_115 = arith.constant 0 : index
    %266 = vector.load %arg16[%c2_113, %c0_114, %c0_115] : memref<8x2x128xf32, #tpu.memory_space<vmem>>, vector<1x2x128xf32>
    %267 = vector.shape_cast %266 : vector<1x2x128xf32> to vector<2x128xf32>
    %268 = vector.shape_cast %265 : vector<2x128xf32> to vector<1x2x128xf32>
    tpu.vector_store %arg16[%c2_113, %c0_114, %c0_115], %268 {strides = array<i32>} : memref<8x2x128xf32, #tpu.memory_space<vmem>>, vector<1x2x128xf32>,
    %c3 = arith.constant 3 : index
    %c0_116 = arith.constant 0 : index
    %c0_117 = arith.constant 0 : index
    %269 = vector.load %arg0[%c3, %c0_116, %c0_117] : memref<8x2x16xf32, #tpu.memory_space<vmem>>, vector<1x2x16xf32>
    %270 = vector.shape_cast %269 : vector<1x2x16xf32> to vector<2x16xf32>
    %c0_118 = arith.constant 0 : index
    %c0_119 = arith.constant 0 : index
    %271 = vector.load %arg17[%c0_118, %c0_119] : memref<2x80xf32, #tpu.memory_space<vmem>>, vector<2x16xf32>
    tpu.vector_store %arg17[%c0_118, %c0_119], %270 {strides = array<i32>} : memref<2x80xf32, #tpu.memory_space<vmem>>, vector<2x16xf32>,
    %c0_120 = arith.constant 0 : index
    %c16_121 = arith.constant 16 : index
    %272 = vector.load %arg17[%c0_120, %c16_121] : memref<2x80xf32, #tpu.memory_space<vmem>>, vector<2x32xf32>
    tpu.vector_store %arg17[%c0_120, %c16_121], %245 {strides = array<i32>} : memref<2x80xf32, #tpu.memory_space<vmem>>, vector<2x32xf32>,
    %c0_122 = arith.constant 0 : index
    %c48_123 = arith.constant 48 : index
    %273 = vector.load %arg17[%c0_122, %c48_123] : memref<2x80xf32, #tpu.memory_space<vmem>>, vector<2x32xf32>
    tpu.vector_store %arg17[%c0_122, %c48_123], %209 {strides = array<i32>} : memref<2x80xf32, #tpu.memory_space<vmem>>, vector<2x32xf32>,
    %c0_124 = arith.constant 0 : index
    %c0_125 = arith.constant 0 : index
    %274 = vector.load %arg17[%c0_124, %c0_125] : memref<2x80xf32, #tpu.memory_space<vmem>>, vector<2x80xf32>
    %cst_126 = arith.constant dense<0.000000e+00> : vector<2x128xf32>
    %275 = tpu.matmul %274, %3, %cst_126 {dimension_numbers = #tpu.dot_dimension_numbers<[1], [0], [0], [1], [0, 0, 1, 1], [], []>} : vector<2x80xf32>, vector<80x128xf32>, vector<2x128xf32> -> vector<2x128xf32>
    %276 = vector.broadcast %4 : vector<1x128xf32> to vector<2x128xf32>
    %277 = arith.addf %275, %276 : vector<2x128xf32>
    %278 = arith.negf %277 : vector<2x128xf32>
    %279 = math.exp %278 : vector<2x128xf32>
    %cst_127 = arith.constant 1.000000e+00 : f32
    %280 = vector.broadcast %cst_127 : f32 to vector<2x128xf32>
    %281 = arith.addf %280, %279 : vector<2x128xf32>
    %282 = arith.divf %280, %281 : vector<2x128xf32>
    %283 = math.tanh %277 : vector<2x128xf32>
    %284 = vector.extract_strided_slice %282 {offsets = [0, 0], sizes = [2, 32], strides = [1, 1]} : vector<2x128xf32> to vector<2x32xf32>
    %285 = vector.extract_strided_slice %282 {offsets = [0, 32], sizes = [2, 32], strides = [1, 1]} : vector<2x128xf32> to vector<2x32xf32>
    %286 = vector.extract_strided_slice %283 {offsets = [0, 64], sizes = [2, 32], strides = [1, 1]} : vector<2x128xf32> to vector<2x32xf32>
    %287 = vector.extract_strided_slice %282 {offsets = [0, 96], sizes = [2, 32], strides = [1, 1]} : vector<2x128xf32> to vector<2x32xf32>
    %288 = arith.mulf %285, %207 : vector<2x32xf32>
    %289 = arith.mulf %284, %286 : vector<2x32xf32>
    %290 = arith.addf %288, %289 : vector<2x32xf32>
    %291 = math.tanh %290 : vector<2x32xf32>
    %292 = arith.mulf %287, %291 : vector<2x32xf32>
    %cst_128 = arith.constant dense<0.000000e+00> : vector<2x24xf32>
    %293 = tpu.matmul %292, %5, %cst_128 {dimension_numbers = #tpu.dot_dimension_numbers<[1], [0], [0], [1], [0, 0, 1, 1], [], []>} : vector<2x32xf32>, vector<32x24xf32>, vector<2x24xf32> -> vector<2x24xf32>
    %294 = vector.broadcast %6 : vector<1x24xf32> to vector<2x24xf32>
    %295 = arith.addf %293, %294 : vector<2x24xf32>
    %cst_129 = arith.constant dense<0.000000e+00> : vector<2x128xf32>
    %296 = tpu.matmul %295, %7, %cst_129 {dimension_numbers = #tpu.dot_dimension_numbers<[1], [0], [0], [1], [0, 0, 1, 1], [], []>} : vector<2x24xf32>, vector<24x128xf32>, vector<2x128xf32> -> vector<2x128xf32>
    %cst_130 = arith.constant dense<0.000000e+00> : vector<2x128xf32>
    %297 = tpu.matmul %232, %8, %cst_130 {dimension_numbers = #tpu.dot_dimension_numbers<[1], [0], [0], [1], [0, 0, 1, 1], [], []>} : vector<2x32xf32>, vector<32x128xf32>, vector<2x128xf32> -> vector<2x128xf32>
    %298 = arith.addf %296, %297 : vector<2x128xf32>
    %299 = vector.broadcast %9 : vector<1x128xf32> to vector<2x128xf32>
    %300 = arith.addf %298, %299 : vector<2x128xf32>
    %301 = arith.negf %300 : vector<2x128xf32>
    %302 = math.exp %301 : vector<2x128xf32>
    %cst_131 = arith.constant 1.000000e+00 : f32
    %303 = vector.broadcast %cst_131 : f32 to vector<2x128xf32>
    %304 = arith.addf %303, %302 : vector<2x128xf32>
    %305 = arith.divf %303, %304 : vector<2x128xf32>
    %306 = math.tanh %300 : vector<2x128xf32>
    %307 = vector.extract_strided_slice %305 {offsets = [0, 0], sizes = [2, 32], strides = [1, 1]} : vector<2x128xf32> to vector<2x32xf32>
    %308 = vector.extract_strided_slice %305 {offsets = [0, 32], sizes = [2, 32], strides = [1, 1]} : vector<2x128xf32> to vector<2x32xf32>
    %309 = vector.extract_strided_slice %306 {offsets = [0, 64], sizes = [2, 32], strides = [1, 1]} : vector<2x128xf32> to vector<2x32xf32>
    %310 = vector.extract_strided_slice %305 {offsets = [0, 96], sizes = [2, 32], strides = [1, 1]} : vector<2x128xf32> to vector<2x32xf32>
    %311 = arith.mulf %308, %230 : vector<2x32xf32>
    %312 = arith.mulf %307, %309 : vector<2x32xf32>
    %313 = arith.addf %311, %312 : vector<2x32xf32>
    %314 = math.tanh %313 : vector<2x32xf32>
    %315 = arith.mulf %310, %314 : vector<2x32xf32>
    %cst_132 = arith.constant dense<0.000000e+00> : vector<2x24xf32>
    %316 = tpu.matmul %315, %0, %cst_132 {dimension_numbers = #tpu.dot_dimension_numbers<[1], [0], [0], [1], [0, 0, 1, 1], [], []>} : vector<2x32xf32>, vector<32x24xf32>, vector<2x24xf32> -> vector<2x24xf32>
    %317 = arith.addf %316, %2 : vector<2x24xf32>
    %cst_133 = arith.constant dense<0xFF800000> : vector<2xf32>
    %318 = vector.multi_reduction <maximumf>, %317, %cst_133 [1] : vector<2x24xf32> to vector<2xf32>
    %319 = vector.shape_cast %318 : vector<2xf32> to vector<2x1xf32>
    %320 = vector.broadcast %319 : vector<2x1xf32> to vector<2x24xf32>
    %321 = arith.subf %317, %320 : vector<2x24xf32>
    %322 = math.exp %321 : vector<2x24xf32>
    %cst_134 = arith.constant dense<0.000000e+00> : vector<2xf32>
    %323 = vector.multi_reduction <add>, %322, %cst_134 [1] : vector<2x24xf32> to vector<2xf32>
    %324 = vector.shape_cast %323 : vector<2xf32> to vector<2x1xf32>
    %325 = tpu.reciprocal %324 {approx = true} : vector<2x1xf32> -> vector<2x1xf32>
    %326 = vector.broadcast %325 : vector<2x1xf32> to vector<2x24xf32>
    %327 = arith.mulf %322, %326 : vector<2x24xf32>
    %cst_135 = arith.constant dense<0.000000e+00> : vector<2x32xf32>
    %328 = tpu.matmul %327, %1, %cst_135 {dimension_numbers = #tpu.dot_dimension_numbers<[1], [0], [0], [1], [0, 0, 1, 1], [], []>} : vector<2x24xf32>, vector<24x32xf32>, vector<2x32xf32> -> vector<2x32xf32>
    %cst_136 = arith.constant dense<0.000000e+00> : vector<2x32xf32>
    %329 = tpu.matmul %315, %10, %cst_136 {dimension_numbers = #tpu.dot_dimension_numbers<[1], [0], [0], [1], [0, 0, 1, 1], [], []>} : vector<2x32xf32>, vector<32x32xf32>, vector<2x32xf32> -> vector<2x32xf32>
    %cst_137 = arith.constant dense<0.000000e+00> : vector<2x32xf32>
    %330 = tpu.matmul %328, %11, %cst_137 {dimension_numbers = #tpu.dot_dimension_numbers<[1], [0], [0], [1], [0, 0, 1, 1], [], []>} : vector<2x32xf32>, vector<32x32xf32>, vector<2x32xf32> -> vector<2x32xf32>
    %331 = arith.addf %329, %330 : vector<2x32xf32>
    %332 = vector.broadcast %12 : vector<1x32xf32> to vector<2x32xf32>
    %333 = arith.addf %331, %332 : vector<2x32xf32>
    %334 = math.tanh %333 : vector<2x32xf32>
    %cst_138 = arith.constant dense<0.000000e+00> : vector<2x128xf32>
    %335 = tpu.matmul %334, %13, %cst_138 {dimension_numbers = #tpu.dot_dimension_numbers<[1], [0], [0], [1], [0, 0, 1, 1], [], []>} : vector<2x32xf32>, vector<32x128xf32>, vector<2x128xf32> -> vector<2x128xf32>
    %336 = vector.broadcast %14 : vector<1x128xf32> to vector<2x128xf32>
    %337 = arith.addf %335, %336 : vector<2x128xf32>
    %cst_139 = arith.constant dense<0xFF800000> : vector<2xf32>
    %338 = vector.multi_reduction <maximumf>, %337, %cst_139 [1] : vector<2x128xf32> to vector<2xf32>
    %339 = vector.shape_cast %338 : vector<2xf32> to vector<2x1xf32>
    %340 = vector.broadcast %339 : vector<2x1xf32> to vector<2x128xf32>
    %341 = arith.subf %337, %340 : vector<2x128xf32>
    %342 = math.exp %341 : vector<2x128xf32>
    %cst_140 = arith.constant dense<0.000000e+00> : vector<2xf32>
    %343 = vector.multi_reduction <add>, %342, %cst_140 [1] : vector<2x128xf32> to vector<2xf32>
    %344 = vector.shape_cast %343 : vector<2xf32> to vector<2x1xf32>
    %345 = math.log %344 : vector<2x1xf32>
    %346 = arith.addf %345, %339 : vector<2x1xf32>
    %347 = vector.broadcast %346 : vector<2x1xf32> to vector<2x128xf32>
    %348 = arith.subf %337, %347 : vector<2x128xf32>
    %c3_141 = arith.constant 3 : index
    %c0_142 = arith.constant 0 : index
    %c0_143 = arith.constant 0 : index
    %349 = vector.load %arg16[%c3_141, %c0_142, %c0_143] : memref<8x2x128xf32, #tpu.memory_space<vmem>>, vector<1x2x128xf32>
    %350 = vector.shape_cast %349 : vector<1x2x128xf32> to vector<2x128xf32>
    %351 = vector.shape_cast %348 : vector<2x128xf32> to vector<1x2x128xf32>
    tpu.vector_store %arg16[%c3_141, %c0_142, %c0_143], %351 {strides = array<i32>} : memref<8x2x128xf32, #tpu.memory_space<vmem>>, vector<1x2x128xf32>,
    %c4 = arith.constant 4 : index
    %c0_144 = arith.constant 0 : index
    %c0_145 = arith.constant 0 : index
    %352 = vector.load %arg0[%c4, %c0_144, %c0_145] : memref<8x2x16xf32, #tpu.memory_space<vmem>>, vector<1x2x16xf32>
    %353 = vector.shape_cast %352 : vector<1x2x16xf32> to vector<2x16xf32>
    %c0_146 = arith.constant 0 : index
    %c0_147 = arith.constant 0 : index
    %354 = vector.load %arg17[%c0_146, %c0_147] : memref<2x80xf32, #tpu.memory_space<vmem>>, vector<2x16xf32>
    tpu.vector_store %arg17[%c0_146, %c0_147], %353 {strides = array<i32>} : memref<2x80xf32, #tpu.memory_space<vmem>>, vector<2x16xf32>,
    %c0_148 = arith.constant 0 : index
    %c16_149 = arith.constant 16 : index
    %355 = vector.load %arg17[%c0_148, %c16_149] : memref<2x80xf32, #tpu.memory_space<vmem>>, vector<2x32xf32>
    tpu.vector_store %arg17[%c0_148, %c16_149], %328 {strides = array<i32>} : memref<2x80xf32, #tpu.memory_space<vmem>>, vector<2x32xf32>,
    %c0_150 = arith.constant 0 : index
    %c48_151 = arith.constant 48 : index
    %356 = vector.load %arg17[%c0_150, %c48_151] : memref<2x80xf32, #tpu.memory_space<vmem>>, vector<2x32xf32>
    tpu.vector_store %arg17[%c0_150, %c48_151], %292 {strides = array<i32>} : memref<2x80xf32, #tpu.memory_space<vmem>>, vector<2x32xf32>,
    %c0_152 = arith.constant 0 : index
    %c0_153 = arith.constant 0 : index
    %357 = vector.load %arg17[%c0_152, %c0_153] : memref<2x80xf32, #tpu.memory_space<vmem>>, vector<2x80xf32>
    %cst_154 = arith.constant dense<0.000000e+00> : vector<2x128xf32>
    %358 = tpu.matmul %357, %3, %cst_154 {dimension_numbers = #tpu.dot_dimension_numbers<[1], [0], [0], [1], [0, 0, 1, 1], [], []>} : vector<2x80xf32>, vector<80x128xf32>, vector<2x128xf32> -> vector<2x128xf32>
    %359 = vector.broadcast %4 : vector<1x128xf32> to vector<2x128xf32>
    %360 = arith.addf %358, %359 : vector<2x128xf32>
    %361 = arith.negf %360 : vector<2x128xf32>
    %362 = math.exp %361 : vector<2x128xf32>
    %cst_155 = arith.constant 1.000000e+00 : f32
    %363 = vector.broadcast %cst_155 : f32 to vector<2x128xf32>
    %364 = arith.addf %363, %362 : vector<2x128xf32>
    %365 = arith.divf %363, %364 : vector<2x128xf32>
    %366 = math.tanh %360 : vector<2x128xf32>
    %367 = vector.extract_strided_slice %365 {offsets = [0, 0], sizes = [2, 32], strides = [1, 1]} : vector<2x128xf32> to vector<2x32xf32>
    %368 = vector.extract_strided_slice %365 {offsets = [0, 32], sizes = [2, 32], strides = [1, 1]} : vector<2x128xf32> to vector<2x32xf32>
    %369 = vector.extract_strided_slice %366 {offsets = [0, 64], sizes = [2, 32], strides = [1, 1]} : vector<2x128xf32> to vector<2x32xf32>
    %370 = vector.extract_strided_slice %365 {offsets = [0, 96], sizes = [2, 32], strides = [1, 1]} : vector<2x128xf32> to vector<2x32xf32>
    %371 = arith.mulf %368, %290 : vector<2x32xf32>
    %372 = arith.mulf %367, %369 : vector<2x32xf32>
    %373 = arith.addf %371, %372 : vector<2x32xf32>
    %374 = math.tanh %373 : vector<2x32xf32>
    %375 = arith.mulf %370, %374 : vector<2x32xf32>
    %cst_156 = arith.constant dense<0.000000e+00> : vector<2x24xf32>
    %376 = tpu.matmul %375, %5, %cst_156 {dimension_numbers = #tpu.dot_dimension_numbers<[1], [0], [0], [1], [0, 0, 1, 1], [], []>} : vector<2x32xf32>, vector<32x24xf32>, vector<2x24xf32> -> vector<2x24xf32>
    %377 = vector.broadcast %6 : vector<1x24xf32> to vector<2x24xf32>
    %378 = arith.addf %376, %377 : vector<2x24xf32>
    %cst_157 = arith.constant dense<0.000000e+00> : vector<2x128xf32>
    %379 = tpu.matmul %378, %7, %cst_157 {dimension_numbers = #tpu.dot_dimension_numbers<[1], [0], [0], [1], [0, 0, 1, 1], [], []>} : vector<2x24xf32>, vector<24x128xf32>, vector<2x128xf32> -> vector<2x128xf32>
    %cst_158 = arith.constant dense<0.000000e+00> : vector<2x128xf32>
    %380 = tpu.matmul %315, %8, %cst_158 {dimension_numbers = #tpu.dot_dimension_numbers<[1], [0], [0], [1], [0, 0, 1, 1], [], []>} : vector<2x32xf32>, vector<32x128xf32>, vector<2x128xf32> -> vector<2x128xf32>
    %381 = arith.addf %379, %380 : vector<2x128xf32>
    %382 = vector.broadcast %9 : vector<1x128xf32> to vector<2x128xf32>
    %383 = arith.addf %381, %382 : vector<2x128xf32>
    %384 = arith.negf %383 : vector<2x128xf32>
    %385 = math.exp %384 : vector<2x128xf32>
    %cst_159 = arith.constant 1.000000e+00 : f32
    %386 = vector.broadcast %cst_159 : f32 to vector<2x128xf32>
    %387 = arith.addf %386, %385 : vector<2x128xf32>
    %388 = arith.divf %386, %387 : vector<2x128xf32>
    %389 = math.tanh %383 : vector<2x128xf32>
    %390 = vector.extract_strided_slice %388 {offsets = [0, 0], sizes = [2, 32], strides = [1, 1]} : vector<2x128xf32> to vector<2x32xf32>
    %391 = vector.extract_strided_slice %388 {offsets = [0, 32], sizes = [2, 32], strides = [1, 1]} : vector<2x128xf32> to vector<2x32xf32>
    %392 = vector.extract_strided_slice %389 {offsets = [0, 64], sizes = [2, 32], strides = [1, 1]} : vector<2x128xf32> to vector<2x32xf32>
    %393 = vector.extract_strided_slice %388 {offsets = [0, 96], sizes = [2, 32], strides = [1, 1]} : vector<2x128xf32> to vector<2x32xf32>
    %394 = arith.mulf %391, %313 : vector<2x32xf32>
    %395 = arith.mulf %390, %392 : vector<2x32xf32>
    %396 = arith.addf %394, %395 : vector<2x32xf32>
    %397 = math.tanh %396 : vector<2x32xf32>
    %398 = arith.mulf %393, %397 : vector<2x32xf32>
    %cst_160 = arith.constant dense<0.000000e+00> : vector<2x24xf32>
    %399 = tpu.matmul %398, %0, %cst_160 {dimension_numbers = #tpu.dot_dimension_numbers<[1], [0], [0], [1], [0, 0, 1, 1], [], []>} : vector<2x32xf32>, vector<32x24xf32>, vector<2x24xf32> -> vector<2x24xf32>
    %400 = arith.addf %399, %2 : vector<2x24xf32>
    %cst_161 = arith.constant dense<0xFF800000> : vector<2xf32>
    %401 = vector.multi_reduction <maximumf>, %400, %cst_161 [1] : vector<2x24xf32> to vector<2xf32>
    %402 = vector.shape_cast %401 : vector<2xf32> to vector<2x1xf32>
    %403 = vector.broadcast %402 : vector<2x1xf32> to vector<2x24xf32>
    %404 = arith.subf %400, %403 : vector<2x24xf32>
    %405 = math.exp %404 : vector<2x24xf32>
    %cst_162 = arith.constant dense<0.000000e+00> : vector<2xf32>
    %406 = vector.multi_reduction <add>, %405, %cst_162 [1] : vector<2x24xf32> to vector<2xf32>
    %407 = vector.shape_cast %406 : vector<2xf32> to vector<2x1xf32>
    %408 = tpu.reciprocal %407 {approx = true} : vector<2x1xf32> -> vector<2x1xf32>
    %409 = vector.broadcast %408 : vector<2x1xf32> to vector<2x24xf32>
    %410 = arith.mulf %405, %409 : vector<2x24xf32>
    %cst_163 = arith.constant dense<0.000000e+00> : vector<2x32xf32>
    %411 = tpu.matmul %410, %1, %cst_163 {dimension_numbers = #tpu.dot_dimension_numbers<[1], [0], [0], [1], [0, 0, 1, 1], [], []>} : vector<2x24xf32>, vector<24x32xf32>, vector<2x32xf32> -> vector<2x32xf32>
    %cst_164 = arith.constant dense<0.000000e+00> : vector<2x32xf32>
    %412 = tpu.matmul %398, %10, %cst_164 {dimension_numbers = #tpu.dot_dimension_numbers<[1], [0], [0], [1], [0, 0, 1, 1], [], []>} : vector<2x32xf32>, vector<32x32xf32>, vector<2x32xf32> -> vector<2x32xf32>
    %cst_165 = arith.constant dense<0.000000e+00> : vector<2x32xf32>
    %413 = tpu.matmul %411, %11, %cst_165 {dimension_numbers = #tpu.dot_dimension_numbers<[1], [0], [0], [1], [0, 0, 1, 1], [], []>} : vector<2x32xf32>, vector<32x32xf32>, vector<2x32xf32> -> vector<2x32xf32>
    %414 = arith.addf %412, %413 : vector<2x32xf32>
    %415 = vector.broadcast %12 : vector<1x32xf32> to vector<2x32xf32>
    %416 = arith.addf %414, %415 : vector<2x32xf32>
    %417 = math.tanh %416 : vector<2x32xf32>
    %cst_166 = arith.constant dense<0.000000e+00> : vector<2x128xf32>
    %418 = tpu.matmul %417, %13, %cst_166 {dimension_numbers = #tpu.dot_dimension_numbers<[1], [0], [0], [1], [0, 0, 1, 1], [], []>} : vector<2x32xf32>, vector<32x128xf32>, vector<2x128xf32> -> vector<2x128xf32>
    %419 = vector.broadcast %14 : vector<1x128xf32> to vector<2x128xf32>
    %420 = arith.addf %418, %419 : vector<2x128xf32>
    %cst_167 = arith.constant dense<0xFF800000> : vector<2xf32>
    %421 = vector.multi_reduction <maximumf>, %420, %cst_167 [1] : vector<2x128xf32> to vector<2xf32>
    %422 = vector.shape_cast %421 : vector<2xf32> to vector<2x1xf32>
    %423 = vector.broadcast %422 : vector<2x1xf32> to vector<2x128xf32>
    %424 = arith.subf %420, %423 : vector<2x128xf32>
    %425 = math.exp %424 : vector<2x128xf32>
    %cst_168 = arith.constant dense<0.000000e+00> : vector<2xf32>
    %426 = vector.multi_reduction <add>, %425, %cst_168 [1] : vector<2x128xf32> to vector<2xf32>
    %427 = vector.shape_cast %426 : vector<2xf32> to vector<2x1xf32>
    %428 = math.log %427 : vector<2x1xf32>
    %429 = arith.addf %428, %422 : vector<2x1xf32>
    %430 = vector.broadcast %429 : vector<2x1xf32> to vector<2x128xf32>
    %431 = arith.subf %420, %430 : vector<2x128xf32>
    %c4_169 = arith.constant 4 : index
    %c0_170 = arith.constant 0 : index
    %c0_171 = arith.constant 0 : index
    %432 = vector.load %arg16[%c4_169, %c0_170, %c0_171] : memref<8x2x128xf32, #tpu.memory_space<vmem>>, vector<1x2x128xf32>
    %433 = vector.shape_cast %432 : vector<1x2x128xf32> to vector<2x128xf32>
    %434 = vector.shape_cast %431 : vector<2x128xf32> to vector<1x2x128xf32>
    tpu.vector_store %arg16[%c4_169, %c0_170, %c0_171], %434 {strides = array<i32>} : memref<8x2x128xf32, #tpu.memory_space<vmem>>, vector<1x2x128xf32>,
    %c5 = arith.constant 5 : index
    %c0_172 = arith.constant 0 : index
    %c0_173 = arith.constant 0 : index
    %435 = vector.load %arg0[%c5, %c0_172, %c0_173] : memref<8x2x16xf32, #tpu.memory_space<vmem>>, vector<1x2x16xf32>
    %436 = vector.shape_cast %435 : vector<1x2x16xf32> to vector<2x16xf32>
    %c0_174 = arith.constant 0 : index
    %c0_175 = arith.constant 0 : index
    %437 = vector.load %arg17[%c0_174, %c0_175] : memref<2x80xf32, #tpu.memory_space<vmem>>, vector<2x16xf32>
    tpu.vector_store %arg17[%c0_174, %c0_175], %436 {strides = array<i32>} : memref<2x80xf32, #tpu.memory_space<vmem>>, vector<2x16xf32>,
    %c0_176 = arith.constant 0 : index
    %c16_177 = arith.constant 16 : index
    %438 = vector.load %arg17[%c0_176, %c16_177] : memref<2x80xf32, #tpu.memory_space<vmem>>, vector<2x32xf32>
    tpu.vector_store %arg17[%c0_176, %c16_177], %411 {strides = array<i32>} : memref<2x80xf32, #tpu.memory_space<vmem>>, vector<2x32xf32>,
    %c0_178 = arith.constant 0 : index
    %c48_179 = arith.constant 48 : index
    %439 = vector.load %arg17[%c0_178, %c48_179] : memref<2x80xf32, #tpu.memory_space<vmem>>, vector<2x32xf32>
    tpu.vector_store %arg17[%c0_178, %c48_179], %375 {strides = array<i32>} : memref<2x80xf32, #tpu.memory_space<vmem>>, vector<2x32xf32>,
    %c0_180 = arith.constant 0 : index
    %c0_181 = arith.constant 0 : index
    %440 = vector.load %arg17[%c0_180, %c0_181] : memref<2x80xf32, #tpu.memory_space<vmem>>, vector<2x80xf32>
    %cst_182 = arith.constant dense<0.000000e+00> : vector<2x128xf32>
    %441 = tpu.matmul %440, %3, %cst_182 {dimension_numbers = #tpu.dot_dimension_numbers<[1], [0], [0], [1], [0, 0, 1, 1], [], []>} : vector<2x80xf32>, vector<80x128xf32>, vector<2x128xf32> -> vector<2x128xf32>
    %442 = vector.broadcast %4 : vector<1x128xf32> to vector<2x128xf32>
    %443 = arith.addf %441, %442 : vector<2x128xf32>
    %444 = arith.negf %443 : vector<2x128xf32>
    %445 = math.exp %444 : vector<2x128xf32>
    %cst_183 = arith.constant 1.000000e+00 : f32
    %446 = vector.broadcast %cst_183 : f32 to vector<2x128xf32>
    %447 = arith.addf %446, %445 : vector<2x128xf32>
    %448 = arith.divf %446, %447 : vector<2x128xf32>
    %449 = math.tanh %443 : vector<2x128xf32>
    %450 = vector.extract_strided_slice %448 {offsets = [0, 0], sizes = [2, 32], strides = [1, 1]} : vector<2x128xf32> to vector<2x32xf32>
    %451 = vector.extract_strided_slice %448 {offsets = [0, 32], sizes = [2, 32], strides = [1, 1]} : vector<2x128xf32> to vector<2x32xf32>
    %452 = vector.extract_strided_slice %449 {offsets = [0, 64], sizes = [2, 32], strides = [1, 1]} : vector<2x128xf32> to vector<2x32xf32>
    %453 = vector.extract_strided_slice %448 {offsets = [0, 96], sizes = [2, 32], strides = [1, 1]} : vector<2x128xf32> to vector<2x32xf32>
    %454 = arith.mulf %451, %373 : vector<2x32xf32>
    %455 = arith.mulf %450, %452 : vector<2x32xf32>
    %456 = arith.addf %454, %455 : vector<2x32xf32>
    %457 = math.tanh %456 : vector<2x32xf32>
    %458 = arith.mulf %453, %457 : vector<2x32xf32>
    %cst_184 = arith.constant dense<0.000000e+00> : vector<2x24xf32>
    %459 = tpu.matmul %458, %5, %cst_184 {dimension_numbers = #tpu.dot_dimension_numbers<[1], [0], [0], [1], [0, 0, 1, 1], [], []>} : vector<2x32xf32>, vector<32x24xf32>, vector<2x24xf32> -> vector<2x24xf32>
    %460 = vector.broadcast %6 : vector<1x24xf32> to vector<2x24xf32>
    %461 = arith.addf %459, %460 : vector<2x24xf32>
    %cst_185 = arith.constant dense<0.000000e+00> : vector<2x128xf32>
    %462 = tpu.matmul %461, %7, %cst_185 {dimension_numbers = #tpu.dot_dimension_numbers<[1], [0], [0], [1], [0, 0, 1, 1], [], []>} : vector<2x24xf32>, vector<24x128xf32>, vector<2x128xf32> -> vector<2x128xf32>
    %cst_186 = arith.constant dense<0.000000e+00> : vector<2x128xf32>
    %463 = tpu.matmul %398, %8, %cst_186 {dimension_numbers = #tpu.dot_dimension_numbers<[1], [0], [0], [1], [0, 0, 1, 1], [], []>} : vector<2x32xf32>, vector<32x128xf32>, vector<2x128xf32> -> vector<2x128xf32>
    %464 = arith.addf %462, %463 : vector<2x128xf32>
    %465 = vector.broadcast %9 : vector<1x128xf32> to vector<2x128xf32>
    %466 = arith.addf %464, %465 : vector<2x128xf32>
    %467 = arith.negf %466 : vector<2x128xf32>
    %468 = math.exp %467 : vector<2x128xf32>
    %cst_187 = arith.constant 1.000000e+00 : f32
    %469 = vector.broadcast %cst_187 : f32 to vector<2x128xf32>
    %470 = arith.addf %469, %468 : vector<2x128xf32>
    %471 = arith.divf %469, %470 : vector<2x128xf32>
    %472 = math.tanh %466 : vector<2x128xf32>
    %473 = vector.extract_strided_slice %471 {offsets = [0, 0], sizes = [2, 32], strides = [1, 1]} : vector<2x128xf32> to vector<2x32xf32>
    %474 = vector.extract_strided_slice %471 {offsets = [0, 32], sizes = [2, 32], strides = [1, 1]} : vector<2x128xf32> to vector<2x32xf32>
    %475 = vector.extract_strided_slice %472 {offsets = [0, 64], sizes = [2, 32], strides = [1, 1]} : vector<2x128xf32> to vector<2x32xf32>
    %476 = vector.extract_strided_slice %471 {offsets = [0, 96], sizes = [2, 32], strides = [1, 1]} : vector<2x128xf32> to vector<2x32xf32>
    %477 = arith.mulf %474, %396 : vector<2x32xf32>
    %478 = arith.mulf %473, %475 : vector<2x32xf32>
    %479 = arith.addf %477, %478 : vector<2x32xf32>
    %480 = math.tanh %479 : vector<2x32xf32>
    %481 = arith.mulf %476, %480 : vector<2x32xf32>
    %cst_188 = arith.constant dense<0.000000e+00> : vector<2x24xf32>
    %482 = tpu.matmul %481, %0, %cst_188 {dimension_numbers = #tpu.dot_dimension_numbers<[1], [0], [0], [1], [0, 0, 1, 1], [], []>} : vector<2x32xf32>, vector<32x24xf32>, vector<2x24xf32> -> vector<2x24xf32>
    %483 = arith.addf %482, %2 : vector<2x24xf32>
    %cst_189 = arith.constant dense<0xFF800000> : vector<2xf32>
    %484 = vector.multi_reduction <maximumf>, %483, %cst_189 [1] : vector<2x24xf32> to vector<2xf32>
    %485 = vector.shape_cast %484 : vector<2xf32> to vector<2x1xf32>
    %486 = vector.broadcast %485 : vector<2x1xf32> to vector<2x24xf32>
    %487 = arith.subf %483, %486 : vector<2x24xf32>
    %488 = math.exp %487 : vector<2x24xf32>
    %cst_190 = arith.constant dense<0.000000e+00> : vector<2xf32>
    %489 = vector.multi_reduction <add>, %488, %cst_190 [1] : vector<2x24xf32> to vector<2xf32>
    %490 = vector.shape_cast %489 : vector<2xf32> to vector<2x1xf32>
    %491 = tpu.reciprocal %490 {approx = true} : vector<2x1xf32> -> vector<2x1xf32>
    %492 = vector.broadcast %491 : vector<2x1xf32> to vector<2x24xf32>
    %493 = arith.mulf %488, %492 : vector<2x24xf32>
    %cst_191 = arith.constant dense<0.000000e+00> : vector<2x32xf32>
    %494 = tpu.matmul %493, %1, %cst_191 {dimension_numbers = #tpu.dot_dimension_numbers<[1], [0], [0], [1], [0, 0, 1, 1], [], []>} : vector<2x24xf32>, vector<24x32xf32>, vector<2x32xf32> -> vector<2x32xf32>
    %cst_192 = arith.constant dense<0.000000e+00> : vector<2x32xf32>
    %495 = tpu.matmul %481, %10, %cst_192 {dimension_numbers = #tpu.dot_dimension_numbers<[1], [0], [0], [1], [0, 0, 1, 1], [], []>} : vector<2x32xf32>, vector<32x32xf32>, vector<2x32xf32> -> vector<2x32xf32>
    %cst_193 = arith.constant dense<0.000000e+00> : vector<2x32xf32>
    %496 = tpu.matmul %494, %11, %cst_193 {dimension_numbers = #tpu.dot_dimension_numbers<[1], [0], [0], [1], [0, 0, 1, 1], [], []>} : vector<2x32xf32>, vector<32x32xf32>, vector<2x32xf32> -> vector<2x32xf32>
    %497 = arith.addf %495, %496 : vector<2x32xf32>
    %498 = vector.broadcast %12 : vector<1x32xf32> to vector<2x32xf32>
    %499 = arith.addf %497, %498 : vector<2x32xf32>
    %500 = math.tanh %499 : vector<2x32xf32>
    %cst_194 = arith.constant dense<0.000000e+00> : vector<2x128xf32>
    %501 = tpu.matmul %500, %13, %cst_194 {dimension_numbers = #tpu.dot_dimension_numbers<[1], [0], [0], [1], [0, 0, 1, 1], [], []>} : vector<2x32xf32>, vector<32x128xf32>, vector<2x128xf32> -> vector<2x128xf32>
    %502 = vector.broadcast %14 : vector<1x128xf32> to vector<2x128xf32>
    %503 = arith.addf %501, %502 : vector<2x128xf32>
    %cst_195 = arith.constant dense<0xFF800000> : vector<2xf32>
    %504 = vector.multi_reduction <maximumf>, %503, %cst_195 [1] : vector<2x128xf32> to vector<2xf32>
    %505 = vector.shape_cast %504 : vector<2xf32> to vector<2x1xf32>
    %506 = vector.broadcast %505 : vector<2x1xf32> to vector<2x128xf32>
    %507 = arith.subf %503, %506 : vector<2x128xf32>
    %508 = math.exp %507 : vector<2x128xf32>
    %cst_196 = arith.constant dense<0.000000e+00> : vector<2xf32>
    %509 = vector.multi_reduction <add>, %508, %cst_196 [1] : vector<2x128xf32> to vector<2xf32>
    %510 = vector.shape_cast %509 : vector<2xf32> to vector<2x1xf32>
    %511 = math.log %510 : vector<2x1xf32>
    %512 = arith.addf %511, %505 : vector<2x1xf32>
    %513 = vector.broadcast %512 : vector<2x1xf32> to vector<2x128xf32>
    %514 = arith.subf %503, %513 : vector<2x128xf32>
    %c5_197 = arith.constant 5 : index
    %c0_198 = arith.constant 0 : index
    %c0_199 = arith.constant 0 : index
    %515 = vector.load %arg16[%c5_197, %c0_198, %c0_199] : memref<8x2x128xf32, #tpu.memory_space<vmem>>, vector<1x2x128xf32>
    %516 = vector.shape_cast %515 : vector<1x2x128xf32> to vector<2x128xf32>
    %517 = vector.shape_cast %514 : vector<2x128xf32> to vector<1x2x128xf32>
    tpu.vector_store %arg16[%c5_197, %c0_198, %c0_199], %517 {strides = array<i32>} : memref<8x2x128xf32, #tpu.memory_space<vmem>>, vector<1x2x128xf32>,
    %c6 = arith.constant 6 : index
    %c0_200 = arith.constant 0 : index
    %c0_201 = arith.constant 0 : index
    %518 = vector.load %arg0[%c6, %c0_200, %c0_201] : memref<8x2x16xf32, #tpu.memory_space<vmem>>, vector<1x2x16xf32>
    %519 = vector.shape_cast %518 : vector<1x2x16xf32> to vector<2x16xf32>
    %c0_202 = arith.constant 0 : index
    %c0_203 = arith.constant 0 : index
    %520 = vector.load %arg17[%c0_202, %c0_203] : memref<2x80xf32, #tpu.memory_space<vmem>>, vector<2x16xf32>
    tpu.vector_store %arg17[%c0_202, %c0_203], %519 {strides = array<i32>} : memref<2x80xf32, #tpu.memory_space<vmem>>, vector<2x16xf32>,
    %c0_204 = arith.constant 0 : index
    %c16_205 = arith.constant 16 : index
    %521 = vector.load %arg17[%c0_204, %c16_205] : memref<2x80xf32, #tpu.memory_space<vmem>>, vector<2x32xf32>
    tpu.vector_store %arg17[%c0_204, %c16_205], %494 {strides = array<i32>} : memref<2x80xf32, #tpu.memory_space<vmem>>, vector<2x32xf32>,
    %c0_206 = arith.constant 0 : index
    %c48_207 = arith.constant 48 : index
    %522 = vector.load %arg17[%c0_206, %c48_207] : memref<2x80xf32, #tpu.memory_space<vmem>>, vector<2x32xf32>
    tpu.vector_store %arg17[%c0_206, %c48_207], %458 {strides = array<i32>} : memref<2x80xf32, #tpu.memory_space<vmem>>, vector<2x32xf32>,
    %c0_208 = arith.constant 0 : index
    %c0_209 = arith.constant 0 : index
    %523 = vector.load %arg17[%c0_208, %c0_209] : memref<2x80xf32, #tpu.memory_space<vmem>>, vector<2x80xf32>
    %cst_210 = arith.constant dense<0.000000e+00> : vector<2x128xf32>
    %524 = tpu.matmul %523, %3, %cst_210 {dimension_numbers = #tpu.dot_dimension_numbers<[1], [0], [0], [1], [0, 0, 1, 1], [], []>} : vector<2x80xf32>, vector<80x128xf32>, vector<2x128xf32> -> vector<2x128xf32>
    %525 = vector.broadcast %4 : vector<1x128xf32> to vector<2x128xf32>
    %526 = arith.addf %524, %525 : vector<2x128xf32>
    %527 = arith.negf %526 : vector<2x128xf32>
    %528 = math.exp %527 : vector<2x128xf32>
    %cst_211 = arith.constant 1.000000e+00 : f32
    %529 = vector.broadcast %cst_211 : f32 to vector<2x128xf32>
    %530 = arith.addf %529, %528 : vector<2x128xf32>
    %531 = arith.divf %529, %530 : vector<2x128xf32>
    %532 = math.tanh %526 : vector<2x128xf32>
    %533 = vector.extract_strided_slice %531 {offsets = [0, 0], sizes = [2, 32], strides = [1, 1]} : vector<2x128xf32> to vector<2x32xf32>
    %534 = vector.extract_strided_slice %531 {offsets = [0, 32], sizes = [2, 32], strides = [1, 1]} : vector<2x128xf32> to vector<2x32xf32>
    %535 = vector.extract_strided_slice %532 {offsets = [0, 64], sizes = [2, 32], strides = [1, 1]} : vector<2x128xf32> to vector<2x32xf32>
    %536 = vector.extract_strided_slice %531 {offsets = [0, 96], sizes = [2, 32], strides = [1, 1]} : vector<2x128xf32> to vector<2x32xf32>
    %537 = arith.mulf %534, %456 : vector<2x32xf32>
    %538 = arith.mulf %533, %535 : vector<2x32xf32>
    %539 = arith.addf %537, %538 : vector<2x32xf32>
    %540 = math.tanh %539 : vector<2x32xf32>
    %541 = arith.mulf %536, %540 : vector<2x32xf32>
    %cst_212 = arith.constant dense<0.000000e+00> : vector<2x24xf32>
    %542 = tpu.matmul %541, %5, %cst_212 {dimension_numbers = #tpu.dot_dimension_numbers<[1], [0], [0], [1], [0, 0, 1, 1], [], []>} : vector<2x32xf32>, vector<32x24xf32>, vector<2x24xf32> -> vector<2x24xf32>
    %543 = vector.broadcast %6 : vector<1x24xf32> to vector<2x24xf32>
    %544 = arith.addf %542, %543 : vector<2x24xf32>
    %cst_213 = arith.constant dense<0.000000e+00> : vector<2x128xf32>
    %545 = tpu.matmul %544, %7, %cst_213 {dimension_numbers = #tpu.dot_dimension_numbers<[1], [0], [0], [1], [0, 0, 1, 1], [], []>} : vector<2x24xf32>, vector<24x128xf32>, vector<2x128xf32> -> vector<2x128xf32>
    %cst_214 = arith.constant dense<0.000000e+00> : vector<2x128xf32>
    %546 = tpu.matmul %481, %8, %cst_214 {dimension_numbers = #tpu.dot_dimension_numbers<[1], [0], [0], [1], [0, 0, 1, 1], [], []>} : vector<2x32xf32>, vector<32x128xf32>, vector<2x128xf32> -> vector<2x128xf32>
    %547 = arith.addf %545, %546 : vector<2x128xf32>
    %548 = vector.broadcast %9 : vector<1x128xf32> to vector<2x128xf32>
    %549 = arith.addf %547, %548 : vector<2x128xf32>
    %550 = arith.negf %549 : vector<2x128xf32>
    %551 = math.exp %550 : vector<2x128xf32>
    %cst_215 = arith.constant 1.000000e+00 : f32
    %552 = vector.broadcast %cst_215 : f32 to vector<2x128xf32>
    %553 = arith.addf %552, %551 : vector<2x128xf32>
    %554 = arith.divf %552, %553 : vector<2x128xf32>
    %555 = math.tanh %549 : vector<2x128xf32>
    %556 = vector.extract_strided_slice %554 {offsets = [0, 0], sizes = [2, 32], strides = [1, 1]} : vector<2x128xf32> to vector<2x32xf32>
    %557 = vector.extract_strided_slice %554 {offsets = [0, 32], sizes = [2, 32], strides = [1, 1]} : vector<2x128xf32> to vector<2x32xf32>
    %558 = vector.extract_strided_slice %555 {offsets = [0, 64], sizes = [2, 32], strides = [1, 1]} : vector<2x128xf32> to vector<2x32xf32>
    %559 = vector.extract_strided_slice %554 {offsets = [0, 96], sizes = [2, 32], strides = [1, 1]} : vector<2x128xf32> to vector<2x32xf32>
    %560 = arith.mulf %557, %479 : vector<2x32xf32>
    %561 = arith.mulf %556, %558 : vector<2x32xf32>
    %562 = arith.addf %560, %561 : vector<2x32xf32>
    %563 = math.tanh %562 : vector<2x32xf32>
    %564 = arith.mulf %559, %563 : vector<2x32xf32>
    %cst_216 = arith.constant dense<0.000000e+00> : vector<2x24xf32>
    %565 = tpu.matmul %564, %0, %cst_216 {dimension_numbers = #tpu.dot_dimension_numbers<[1], [0], [0], [1], [0, 0, 1, 1], [], []>} : vector<2x32xf32>, vector<32x24xf32>, vector<2x24xf32> -> vector<2x24xf32>
    %566 = arith.addf %565, %2 : vector<2x24xf32>
    %cst_217 = arith.constant dense<0xFF800000> : vector<2xf32>
    %567 = vector.multi_reduction <maximumf>, %566, %cst_217 [1] : vector<2x24xf32> to vector<2xf32>
    %568 = vector.shape_cast %567 : vector<2xf32> to vector<2x1xf32>
    %569 = vector.broadcast %568 : vector<2x1xf32> to vector<2x24xf32>
    %570 = arith.subf %566, %569 : vector<2x24xf32>
    %571 = math.exp %570 : vector<2x24xf32>
    %cst_218 = arith.constant dense<0.000000e+00> : vector<2xf32>
    %572 = vector.multi_reduction <add>, %571, %cst_218 [1] : vector<2x24xf32> to vector<2xf32>
    %573 = vector.shape_cast %572 : vector<2xf32> to vector<2x1xf32>
    %574 = tpu.reciprocal %573 {approx = true} : vector<2x1xf32> -> vector<2x1xf32>
    %575 = vector.broadcast %574 : vector<2x1xf32> to vector<2x24xf32>
    %576 = arith.mulf %571, %575 : vector<2x24xf32>
    %cst_219 = arith.constant dense<0.000000e+00> : vector<2x32xf32>
    %577 = tpu.matmul %576, %1, %cst_219 {dimension_numbers = #tpu.dot_dimension_numbers<[1], [0], [0], [1], [0, 0, 1, 1], [], []>} : vector<2x24xf32>, vector<24x32xf32>, vector<2x32xf32> -> vector<2x32xf32>
    %cst_220 = arith.constant dense<0.000000e+00> : vector<2x32xf32>
    %578 = tpu.matmul %564, %10, %cst_220 {dimension_numbers = #tpu.dot_dimension_numbers<[1], [0], [0], [1], [0, 0, 1, 1], [], []>} : vector<2x32xf32>, vector<32x32xf32>, vector<2x32xf32> -> vector<2x32xf32>
    %cst_221 = arith.constant dense<0.000000e+00> : vector<2x32xf32>
    %579 = tpu.matmul %577, %11, %cst_221 {dimension_numbers = #tpu.dot_dimension_numbers<[1], [0], [0], [1], [0, 0, 1, 1], [], []>} : vector<2x32xf32>, vector<32x32xf32>, vector<2x32xf32> -> vector<2x32xf32>
    %580 = arith.addf %578, %579 : vector<2x32xf32>
    %581 = vector.broadcast %12 : vector<1x32xf32> to vector<2x32xf32>
    %582 = arith.addf %580, %581 : vector<2x32xf32>
    %583 = math.tanh %582 : vector<2x32xf32>
    %cst_222 = arith.constant dense<0.000000e+00> : vector<2x128xf32>
    %584 = tpu.matmul %583, %13, %cst_222 {dimension_numbers = #tpu.dot_dimension_numbers<[1], [0], [0], [1], [0, 0, 1, 1], [], []>} : vector<2x32xf32>, vector<32x128xf32>, vector<2x128xf32> -> vector<2x128xf32>
    %585 = vector.broadcast %14 : vector<1x128xf32> to vector<2x128xf32>
    %586 = arith.addf %584, %585 : vector<2x128xf32>
    %cst_223 = arith.constant dense<0xFF800000> : vector<2xf32>
    %587 = vector.multi_reduction <maximumf>, %586, %cst_223 [1] : vector<2x128xf32> to vector<2xf32>
    %588 = vector.shape_cast %587 : vector<2xf32> to vector<2x1xf32>
    %589 = vector.broadcast %588 : vector<2x1xf32> to vector<2x128xf32>
    %590 = arith.subf %586, %589 : vector<2x128xf32>
    %591 = math.exp %590 : vector<2x128xf32>
    %cst_224 = arith.constant dense<0.000000e+00> : vector<2xf32>
    %592 = vector.multi_reduction <add>, %591, %cst_224 [1] : vector<2x128xf32> to vector<2xf32>
    %593 = vector.shape_cast %592 : vector<2xf32> to vector<2x1xf32>
    %594 = math.log %593 : vector<2x1xf32>
    %595 = arith.addf %594, %588 : vector<2x1xf32>
    %596 = vector.broadcast %595 : vector<2x1xf32> to vector<2x128xf32>
    %597 = arith.subf %586, %596 : vector<2x128xf32>
    %c6_225 = arith.constant 6 : index
    %c0_226 = arith.constant 0 : index
    %c0_227 = arith.constant 0 : index
    %598 = vector.load %arg16[%c6_225, %c0_226, %c0_227] : memref<8x2x128xf32, #tpu.memory_space<vmem>>, vector<1x2x128xf32>
    %599 = vector.shape_cast %598 : vector<1x2x128xf32> to vector<2x128xf32>
    %600 = vector.shape_cast %597 : vector<2x128xf32> to vector<1x2x128xf32>
    tpu.vector_store %arg16[%c6_225, %c0_226, %c0_227], %600 {strides = array<i32>} : memref<8x2x128xf32, #tpu.memory_space<vmem>>, vector<1x2x128xf32>,
    %c7 = arith.constant 7 : index
    %c0_228 = arith.constant 0 : index
    %c0_229 = arith.constant 0 : index
    %601 = vector.load %arg0[%c7, %c0_228, %c0_229] : memref<8x2x16xf32, #tpu.memory_space<vmem>>, vector<1x2x16xf32>
    %602 = vector.shape_cast %601 : vector<1x2x16xf32> to vector<2x16xf32>
    %c0_230 = arith.constant 0 : index
    %c0_231 = arith.constant 0 : index
    %603 = vector.load %arg17[%c0_230, %c0_231] : memref<2x80xf32, #tpu.memory_space<vmem>>, vector<2x16xf32>
    tpu.vector_store %arg17[%c0_230, %c0_231], %602 {strides = array<i32>} : memref<2x80xf32, #tpu.memory_space<vmem>>, vector<2x16xf32>,
    %c0_232 = arith.constant 0 : index
    %c16_233 = arith.constant 16 : index
    %604 = vector.load %arg17[%c0_232, %c16_233] : memref<2x80xf32, #tpu.memory_space<vmem>>, vector<2x32xf32>
    tpu.vector_store %arg17[%c0_232, %c16_233], %577 {strides = array<i32>} : memref<2x80xf32, #tpu.memory_space<vmem>>, vector<2x32xf32>,
    %c0_234 = arith.constant 0 : index
    %c48_235 = arith.constant 48 : index
    %605 = vector.load %arg17[%c0_234, %c48_235] : memref<2x80xf32, #tpu.memory_space<vmem>>, vector<2x32xf32>
    tpu.vector_store %arg17[%c0_234, %c48_235], %541 {strides = array<i32>} : memref<2x80xf32, #tpu.memory_space<vmem>>, vector<2x32xf32>,
    %c0_236 = arith.constant 0 : index
    %c0_237 = arith.constant 0 : index
    %606 = vector.load %arg17[%c0_236, %c0_237] : memref<2x80xf32, #tpu.memory_space<vmem>>, vector<2x80xf32>
    %cst_238 = arith.constant dense<0.000000e+00> : vector<2x128xf32>
    %607 = tpu.matmul %606, %3, %cst_238 {dimension_numbers = #tpu.dot_dimension_numbers<[1], [0], [0], [1], [0, 0, 1, 1], [], []>} : vector<2x80xf32>, vector<80x128xf32>, vector<2x128xf32> -> vector<2x128xf32>
    %608 = vector.broadcast %4 : vector<1x128xf32> to vector<2x128xf32>
    %609 = arith.addf %607, %608 : vector<2x128xf32>
    %610 = arith.negf %609 : vector<2x128xf32>
    %611 = math.exp %610 : vector<2x128xf32>
    %cst_239 = arith.constant 1.000000e+00 : f32
    %612 = vector.broadcast %cst_239 : f32 to vector<2x128xf32>
    %613 = arith.addf %612, %611 : vector<2x128xf32>
    %614 = arith.divf %612, %613 : vector<2x128xf32>
    %615 = math.tanh %609 : vector<2x128xf32>
    %616 = vector.extract_strided_slice %614 {offsets = [0, 0], sizes = [2, 32], strides = [1, 1]} : vector<2x128xf32> to vector<2x32xf32>
    %617 = vector.extract_strided_slice %614 {offsets = [0, 32], sizes = [2, 32], strides = [1, 1]} : vector<2x128xf32> to vector<2x32xf32>
    %618 = vector.extract_strided_slice %615 {offsets = [0, 64], sizes = [2, 32], strides = [1, 1]} : vector<2x128xf32> to vector<2x32xf32>
    %619 = vector.extract_strided_slice %614 {offsets = [0, 96], sizes = [2, 32], strides = [1, 1]} : vector<2x128xf32> to vector<2x32xf32>
    %620 = arith.mulf %617, %539 : vector<2x32xf32>
    %621 = arith.mulf %616, %618 : vector<2x32xf32>
    %622 = arith.addf %620, %621 : vector<2x32xf32>
    %623 = math.tanh %622 : vector<2x32xf32>
    %624 = arith.mulf %619, %623 : vector<2x32xf32>
    %cst_240 = arith.constant dense<0.000000e+00> : vector<2x24xf32>
    %625 = tpu.matmul %624, %5, %cst_240 {dimension_numbers = #tpu.dot_dimension_numbers<[1], [0], [0], [1], [0, 0, 1, 1], [], []>} : vector<2x32xf32>, vector<32x24xf32>, vector<2x24xf32> -> vector<2x24xf32>
    %626 = vector.broadcast %6 : vector<1x24xf32> to vector<2x24xf32>
    %627 = arith.addf %625, %626 : vector<2x24xf32>
    %cst_241 = arith.constant dense<0.000000e+00> : vector<2x128xf32>
    %628 = tpu.matmul %627, %7, %cst_241 {dimension_numbers = #tpu.dot_dimension_numbers<[1], [0], [0], [1], [0, 0, 1, 1], [], []>} : vector<2x24xf32>, vector<24x128xf32>, vector<2x128xf32> -> vector<2x128xf32>
    %cst_242 = arith.constant dense<0.000000e+00> : vector<2x128xf32>
    %629 = tpu.matmul %564, %8, %cst_242 {dimension_numbers = #tpu.dot_dimension_numbers<[1], [0], [0], [1], [0, 0, 1, 1], [], []>} : vector<2x32xf32>, vector<32x128xf32>, vector<2x128xf32> -> vector<2x128xf32>
    %630 = arith.addf %628, %629 : vector<2x128xf32>
    %631 = vector.broadcast %9 : vector<1x128xf32> to vector<2x128xf32>
    %632 = arith.addf %630, %631 : vector<2x128xf32>
    %633 = arith.negf %632 : vector<2x128xf32>
    %634 = math.exp %633 : vector<2x128xf32>
    %cst_243 = arith.constant 1.000000e+00 : f32
    %635 = vector.broadcast %cst_243 : f32 to vector<2x128xf32>
    %636 = arith.addf %635, %634 : vector<2x128xf32>
    %637 = arith.divf %635, %636 : vector<2x128xf32>
    %638 = math.tanh %632 : vector<2x128xf32>
    %639 = vector.extract_strided_slice %637 {offsets = [0, 0], sizes = [2, 32], strides = [1, 1]} : vector<2x128xf32> to vector<2x32xf32>
    %640 = vector.extract_strided_slice %637 {offsets = [0, 32], sizes = [2, 32], strides = [1, 1]} : vector<2x128xf32> to vector<2x32xf32>
    %641 = vector.extract_strided_slice %638 {offsets = [0, 64], sizes = [2, 32], strides = [1, 1]} : vector<2x128xf32> to vector<2x32xf32>
    %642 = vector.extract_strided_slice %637 {offsets = [0, 96], sizes = [2, 32], strides = [1, 1]} : vector<2x128xf32> to vector<2x32xf32>
    %643 = arith.mulf %640, %562 : vector<2x32xf32>
    %644 = arith.mulf %639, %641 : vector<2x32xf32>
    %645 = arith.addf %643, %644 : vector<2x32xf32>
    %646 = math.tanh %645 : vector<2x32xf32>
    %647 = arith.mulf %642, %646 : vector<2x32xf32>
    %cst_244 = arith.constant dense<0.000000e+00> : vector<2x24xf32>
    %648 = tpu.matmul %647, %0, %cst_244 {dimension_numbers = #tpu.dot_dimension_numbers<[1], [0], [0], [1], [0, 0, 1, 1], [], []>} : vector<2x32xf32>, vector<32x24xf32>, vector<2x24xf32> -> vector<2x24xf32>
    %649 = arith.addf %648, %2 : vector<2x24xf32>
    %cst_245 = arith.constant dense<0xFF800000> : vector<2xf32>
    %650 = vector.multi_reduction <maximumf>, %649, %cst_245 [1] : vector<2x24xf32> to vector<2xf32>
    %651 = vector.shape_cast %650 : vector<2xf32> to vector<2x1xf32>
    %652 = vector.broadcast %651 : vector<2x1xf32> to vector<2x24xf32>
    %653 = arith.subf %649, %652 : vector<2x24xf32>
    %654 = math.exp %653 : vector<2x24xf32>
    %cst_246 = arith.constant dense<0.000000e+00> : vector<2xf32>
    %655 = vector.multi_reduction <add>, %654, %cst_246 [1] : vector<2x24xf32> to vector<2xf32>
    %656 = vector.shape_cast %655 : vector<2xf32> to vector<2x1xf32>
    %657 = tpu.reciprocal %656 {approx = true} : vector<2x1xf32> -> vector<2x1xf32>
    %658 = vector.broadcast %657 : vector<2x1xf32> to vector<2x24xf32>
    %659 = arith.mulf %654, %658 : vector<2x24xf32>
    %cst_247 = arith.constant dense<0.000000e+00> : vector<2x32xf32>
    %660 = tpu.matmul %659, %1, %cst_247 {dimension_numbers = #tpu.dot_dimension_numbers<[1], [0], [0], [1], [0, 0, 1, 1], [], []>} : vector<2x24xf32>, vector<24x32xf32>, vector<2x32xf32> -> vector<2x32xf32>
    %cst_248 = arith.constant dense<0.000000e+00> : vector<2x32xf32>
    %661 = tpu.matmul %647, %10, %cst_248 {dimension_numbers = #tpu.dot_dimension_numbers<[1], [0], [0], [1], [0, 0, 1, 1], [], []>} : vector<2x32xf32>, vector<32x32xf32>, vector<2x32xf32> -> vector<2x32xf32>
    %cst_249 = arith.constant dense<0.000000e+00> : vector<2x32xf32>
    %662 = tpu.matmul %660, %11, %cst_249 {dimension_numbers = #tpu.dot_dimension_numbers<[1], [0], [0], [1], [0, 0, 1, 1], [], []>} : vector<2x32xf32>, vector<32x32xf32>, vector<2x32xf32> -> vector<2x32xf32>
    %663 = arith.addf %661, %662 : vector<2x32xf32>
    %664 = vector.broadcast %12 : vector<1x32xf32> to vector<2x32xf32>
    %665 = arith.addf %663, %664 : vector<2x32xf32>
    %666 = math.tanh %665 : vector<2x32xf32>
    %cst_250 = arith.constant dense<0.000000e+00> : vector<2x128xf32>
    %667 = tpu.matmul %666, %13, %cst_250 {dimension_numbers = #tpu.dot_dimension_numbers<[1], [0], [0], [1], [0, 0, 1, 1], [], []>} : vector<2x32xf32>, vector<32x128xf32>, vector<2x128xf32> -> vector<2x128xf32>
    %668 = vector.broadcast %14 : vector<1x128xf32> to vector<2x128xf32>
    %669 = arith.addf %667, %668 : vector<2x128xf32>
    %cst_251 = arith.constant dense<0xFF800000> : vector<2xf32>
    %670 = vector.multi_reduction <maximumf>, %669, %cst_251 [1] : vector<2x128xf32> to vector<2xf32>
    %671 = vector.shape_cast %670 : vector<2xf32> to vector<2x1xf32>
    %672 = vector.broadcast %671 : vector<2x1xf32> to vector<2x128xf32>
    %673 = arith.subf %669, %672 : vector<2x128xf32>
    %674 = math.exp %673 : vector<2x128xf32>
    %cst_252 = arith.constant dense<0.000000e+00> : vector<2xf32>
    %675 = vector.multi_reduction <add>, %674, %cst_252 [1] : vector<2x128xf32> to vector<2xf32>
    %676 = vector.shape_cast %675 : vector<2xf32> to vector<2x1xf32>
    %677 = math.log %676 : vector<2x1xf32>
    %678 = arith.addf %677, %671 : vector<2x1xf32>
    %679 = vector.broadcast %678 : vector<2x1xf32> to vector<2x128xf32>
    %680 = arith.subf %669, %679 : vector<2x128xf32>
    %c7_253 = arith.constant 7 : index
    %c0_254 = arith.constant 0 : index
    %c0_255 = arith.constant 0 : index
    %681 = vector.load %arg16[%c7_253, %c0_254, %c0_255] : memref<8x2x128xf32, #tpu.memory_space<vmem>>, vector<1x2x128xf32>
    %682 = vector.shape_cast %681 : vector<1x2x128xf32> to vector<2x128xf32>
    %683 = vector.shape_cast %680 : vector<2x128xf32> to vector<1x2x128xf32>
    tpu.vector_store %arg16[%c7_253, %c0_254, %c0_255], %683 {strides = array<i32>} : memref<8x2x128xf32, #tpu.memory_space<vmem>>, vector<1x2x128xf32>,
    return
  }
}

</mosaic_0001>

<llo_original>
// kernel: tpu_custom_call.1
$region0: #{tpu_custom_call.1}
  #allocation0 [shape = 'u32[]', space=smem, size = 0x4, offset = 0x4, fixed_abs, tag = 'smem constant byte address 0x4 - core index']
  #allocation1 [shape = 'u32[72,128]{1,0:T(1,128)}', space=vmem, size = 0x9000, scoped, tag = 'internal scratch']
  #allocation2 [shape = 'f32[2,80]{1,0:T(2,128)}', space=vmem, size = 0x400, scoped, tag = 'scratch operand']
  %s0 = inlined_call_operand.hbm [shape: f32[8,2,16], index: 0, kind: input, shape index: {}]
  %s1 = inlined_call_operand.vmem [shape: f32[32,24], index: 1, kind: input, shape index: {}]
  %s2 = inlined_call_operand.hbm [shape: f32[24,32], index: 2, kind: input, shape index: {}]
  %s3 = inlined_call_operand.vmem [shape: f32[2,24], index: 3, kind: input, shape index: {}]
  %s4 = inlined_call_operand.vmem [shape: f32[80,128], index: 4, kind: input, shape index: {}]
  %s5 = inlined_call_operand.vmem [shape: f32[1,128], index: 5, kind: input, shape index: {}]
  %s6 = inlined_call_operand.vmem [shape: f32[32,24], index: 6, kind: input, shape index: {}]
  %s7 = inlined_call_operand.vmem [shape: f32[1,24], index: 7, kind: input, shape index: {}]
  %s8 = inlined_call_operand.hbm [shape: f32[24,128], index: 8, kind: input, shape index: {}]
  %s9 = inlined_call_operand.hbm [shape: f32[32,128], index: 9, kind: input, shape index: {}]
  %s10 = inlined_call_operand.vmem [shape: f32[1,128], index: 10, kind: input, shape index: {}]
  %s11 = inlined_call_operand.hbm [shape: f32[32,32], index: 11, kind: input, shape index: {}]
  %s12 = inlined_call_operand.hbm [shape: f32[32,32], index: 12, kind: input, shape index: {}]
  %s13 = inlined_call_operand.vmem [shape: f32[1,32], index: 13, kind: input, shape index: {}]
  %s14 = inlined_call_operand.hbm [shape: f32[32,128], index: 14, kind: input, shape index: {}]
  %s15 = inlined_call_operand.vmem [shape: f32[1,128], index: 15, kind: input, shape index: {}]
  %s16 = inlined_call_operand.hbm [shape: f32[8,2,128], index: 16, kind: output, shape index: {}]
  %s17 = sld [smem:[#allocation0]]
  $region102: #{tpu_custom_call.1} parent=0
    _
  %s19 = ssub.s32 1, %s17
  %s20 = scalar_select 0, %s19, %s17
  $region1: #{tpu_custom_call.1} parent=0
    #allocation3 [shape = 'u8[8192]{0}', space=vmem, size = 0x2000, scoped, tag = 'input window, operand 0, single buffered']
    #allocation4 [shape = 's32[1]{0}', space=sflag, size = 0x4, scoped, tag = 'scoped memory for tpu_custom_call.1']
    #allocation5 [shape = 's32[1]{0}', space=sflag, size = 0x4, scoped, tag = 'scoped memory for tpu_custom_call.1']
    #allocation6 [shape = 'u8[12288]{0}', space=vmem, size = 0x3000, scoped, tag = 'input window, operand 2, single buffered']
    #allocation7 [shape = 's32[1]{0}', space=sflag, size = 0x4, scoped, tag = 'scoped memory for tpu_custom_call.1']
    #allocation8 [shape = 'u8[12288]{0}', space=vmem, size = 0x3000, scoped, tag = 'input window, operand 8, single buffered']
    #allocation9 [shape = 'u8[16384]{0}', space=vmem, size = 0x4000, scoped, tag = 'input window, operand 9, single buffered']
    #allocation10 [shape = 's32[1]{0}', space=sflag, size = 0x4, scoped, tag = 'scoped memory for tpu_custom_call.1']
    #allocation11 [shape = 'u8[16384]{0}', space=vmem, size = 0x4000, scoped, tag = 'input window, operand 11, single buffered']
    #allocation12 [shape = 'u8[16384]{0}', space=vmem, size = 0x4000, scoped, tag = 'input window, operand 12, single buffered']
    #allocation13 [shape = 's32[1]{0}', space=sflag, size = 0x4, scoped, tag = 'scoped memory for tpu_custom_call.1']
    #allocation14 [shape = 'u8[16384]{0}', space=vmem, size = 0x4000, scoped, tag = 'input window, operand 14, single buffered']
    #allocation15 [shape = 'u8[8192]{0}', space=vmem, size = 0x2000, scoped, tag = 'output window, operand 0, single buffered']
    %21 = vsyncpa [#allocation4], 0
    %22 = vsyncpa [#allocation7], 0
    %23 = vsyncpa [#allocation10], 0
    %24 = vsyncpa [#allocation13], 0
    %25 = vsyncpa [#allocation5], 0
    // Predicated region
    $region2: #{tpu_custom_call.1} parent=1 // pred_check
      _
    $region3: #{tpu_custom_call.1} parent=1 // pred_check_branch
      %27 = sbr.rel (0) target = $region5
    $region4: #{tpu_custom_call.1} parent=1 // pred_region
      %29 = vsyncadd [#allocation4], 0
      %s30 = sshll.u32 %s0, 4
      %s31 = int_to_ptr.hbm [resolvable:$true] %s30
      %s32 = sshll.u32 [#allocation3], 4
      %s33 = int_to_ptr.vmem [resolvable:$true] %s32
      %38 = dma.hbm_to_vmem [thread:$0]  %s31, 256, %s33, [#allocation4], 32, 32, 2
    $region5: #{tpu_custom_call.1} parent=1 // pred_fallthru
      _
    // Predicated region
    $region6: #{tpu_custom_call.1} parent=1 // pred_check
      _
    $region7: #{tpu_custom_call.1} parent=1 // pred_check_branch
      %40 = sbr.rel (0) target = $region9
    $region8: #{tpu_custom_call.1} parent=1 // pred_region
      _
    $region9: #{tpu_custom_call.1} parent=1 // pred_fallthru
      _
    // Predicated region
    $region10: #{tpu_custom_call.1} parent=1 // pred_check
      _
    $region11: #{tpu_custom_call.1} parent=1 // pred_check_branch
      %42 = sbr.rel (0) target = $region13
    $region12: #{tpu_custom_call.1} parent=1 // pred_region
      %44 = vsyncadd [#allocation7], 0
      %s45 = sshll.u32 %s2, 4
      %s46 = int_to_ptr.hbm [resolvable:$true] %s45
      %s47 = sshll.u32 [#allocation6], 4
      %s48 = int_to_ptr.vmem [resolvable:$true] %s47
      %53 = dma.hbm_to_vmem [thread:$0]  %s46, 384, %s48, [#allocation7], 128, 128, 8
    $region13: #{tpu_custom_call.1} parent=1 // pred_fallthru
      _
    // Predicated region
    $region14: #{tpu_custom_call.1} parent=1 // pred_check
      _
    $region15: #{tpu_custom_call.1} parent=1 // pred_check_branch
      %55 = sbr.rel (0) target = $region17
    $region16: #{tpu_custom_call.1} parent=1 // pred_region
      _
    $region17: #{tpu_custom_call.1} parent=1 // pred_fallthru
      _
    // Predicated region
    $region18: #{tpu_custom_call.1} parent=1 // pred_check
      _
    $region19: #{tpu_custom_call.1} parent=1 // pred_check_branch
      %57 = sbr.rel (0) target = $region21
    $region20: #{tpu_custom_call.1} parent=1 // pred_region
      _
    $region21: #{tpu_custom_call.1} parent=1 // pred_fallthru
      _
    // Predicated region
    $region22: #{tpu_custom_call.1} parent=1 // pred_check
      _
    $region23: #{tpu_custom_call.1} parent=1 // pred_check_branch
      %59 = sbr.rel (0) target = $region25
    $region24: #{tpu_custom_call.1} parent=1 // pred_region
      _
    $region25: #{tpu_custom_call.1} parent=1 // pred_fallthru
      _
    // Predicated region
    $region26: #{tpu_custom_call.1} parent=1 // pred_check
      _
    $region27: #{tpu_custom_call.1} parent=1 // pred_check_branch
      %61 = sbr.rel (0) target = $region29
    $region28: #{tpu_custom_call.1} parent=1 // pred_region
      _
    $region29: #{tpu_custom_call.1} parent=1 // pred_fallthru
      _
    // Predicated region
    $region30: #{tpu_custom_call.1} parent=1 // pred_check
      _
    $region31: #{tpu_custom_call.1} parent=1 // pred_check_branch
      %63 = sbr.rel (0) target = $region33
    $region32: #{tpu_custom_call.1} parent=1 // pred_region
      _
    $region33: #{tpu_custom_call.1} parent=1 // pred_fallthru
      _
    // Predicated region
    $region34: #{tpu_custom_call.1} parent=1 // pred_check
      _
    $region35: #{tpu_custom_call.1} parent=1 // pred_check_branch
      %65 = sbr.rel (0) target = $region37
    $region36: #{tpu_custom_call.1} parent=1 // pred_region
      %67 = vsyncadd [#allocation7], 0
      %s68 = sshll.u32 %s8, 4
      %s69 = int_to_ptr.hbm [resolvable:$true] %s68
      %s70 = sshll.u32 [#allocation8], 4
      %s71 = int_to_ptr.vmem [resolvable:$true] %s70
      %76 = dma.hbm_to_vmem [thread:$0]  %s69, 384, %s71, [#allocation7], 128, 128, 8
    $region37: #{tpu_custom_call.1} parent=1 // pred_fallthru
      _
    // Predicated region
    $region38: #{tpu_custom_call.1} parent=1 // pred_check
      _
    $region39: #{tpu_custom_call.1} parent=1 // pred_check_branch
      %78 = sbr.rel (0) target = $region41
    $region40: #{tpu_custom_call.1} parent=1 // pred_region
      %80 = vsyncadd [#allocation10], 0
      %s81 = sshll.u32 %s9, 4
      %s82 = int_to_ptr.hbm [resolvable:$true] %s81
      %s83 = sshll.u32 [#allocation9], 4
      %s84 = int_to_ptr.vmem [resolvable:$true] %s83
      %89 = dma.hbm_to_vmem [thread:$0]  %s82, 512, %s84, [#allocation10], 128, 128, 8
    $region41: #{tpu_custom_call.1} parent=1 // pred_fallthru
      _
    // Predicated region
    $region42: #{tpu_custom_call.1} parent=1 // pred_check
      _
    $region43: #{tpu_custom_call.1} parent=1 // pred_check_branch
      %91 = sbr.rel (0) target = $region45
    $region44: #{tpu_custom_call.1} parent=1 // pred_region
      _
    $region45: #{tpu_custom_call.1} parent=1 // pred_fallthru
      _
    // Predicated region
    $region46: #{tpu_custom_call.1} parent=1 // pred_check
      _
    $region47: #{tpu_custom_call.1} parent=1 // pred_check_branch
      %93 = sbr.rel (0) target = $region49
    $region48: #{tpu_custom_call.1} parent=1 // pred_region
      %95 = vsyncadd [#allocation10], 0
      %s96 = sshll.u32 %s11, 4
      %s97 = int_to_ptr.hbm [resolvable:$true] %s96
      %s98 = sshll.u32 [#allocation11], 4
      %s99 = int_to_ptr.vmem [resolvable:$true] %s98
      %104 = dma.hbm_to_vmem [thread:$0]  %s97, 512, %s99, [#allocation10], 128, 128, 8
    $region49: #{tpu_custom_call.1} parent=1 // pred_fallthru
      _
    // Predicated region
    $region50: #{tpu_custom_call.1} parent=1 // pred_check
      _
    $region51: #{tpu_custom_call.1} parent=1 // pred_check_branch
      %106 = sbr.rel (0) target = $region53
    $region52: #{tpu_custom_call.1} parent=1 // pred_region
      %108 = vsyncadd [#allocation13], 0
      %s109 = sshll.u32 %s12, 4
      %s110 = int_to_ptr.hbm [resolvable:$true] %s109
      %s111 = sshll.u32 [#allocation12], 4
      %s112 = int_to_ptr.vmem [resolvable:$true] %s111
      %117 = dma.hbm_to_vmem [thread:$0]  %s110, 512, %s112, [#allocation13], 128, 128, 8
    $region53: #{tpu_custom_call.1} parent=1 // pred_fallthru
      _
    // Predicated region
    $region54: #{tpu_custom_call.1} parent=1 // pred_check
      _
    $region55: #{tpu_custom_call.1} parent=1 // pred_check_branch
      %119 = sbr.rel (0) target = $region57
    $region56: #{tpu_custom_call.1} parent=1 // pred_region
      _
    $region57: #{tpu_custom_call.1} parent=1 // pred_fallthru
      _
    // Predicated region
    $region58: #{tpu_custom_call.1} parent=1 // pred_check
      _
    $region59: #{tpu_custom_call.1} parent=1 // pred_check_branch
      %121 = sbr.rel (0) target = $region61
    $region60: #{tpu_custom_call.1} parent=1 // pred_region
      %123 = vsyncadd [#allocation13], 0
      %s124 = sshll.u32 %s14, 4
      %s125 = int_to_ptr.hbm [resolvable:$true] %s124
      %s126 = sshll.u32 [#allocation14], 4
      %s127 = int_to_ptr.vmem [resolvable:$true] %s126
      %132 = dma.hbm_to_vmem [thread:$0]  %s125, 512, %s127, [#allocation13], 128, 128, 8
    $region61: #{tpu_custom_call.1} parent=1 // pred_fallthru
      _
    // Predicated region
    $region62: #{tpu_custom_call.1} parent=1 // pred_check
      _
    $region63: #{tpu_custom_call.1} parent=1 // pred_check_branch
      %134 = sbr.rel (0) target = $region65
    $region64: #{tpu_custom_call.1} parent=1 // pred_region
      _
    $region65: #{tpu_custom_call.1} parent=1 // pred_fallthru
      _
    // Predicated region
    $region66: #{tpu_custom_call.1} parent=1 // pred_check
      _
    $region67: #{tpu_custom_call.1} parent=1 // pred_check_branch
      %136 = sbr.rel (0) target = $region69
    $region68: #{tpu_custom_call.1} parent=1 // pred_region
      %138 = dma.done [#allocation4], 256
    $region69: #{tpu_custom_call.1} parent=1 // pred_fallthru
      _
    // Predicated region
    $region70: #{tpu_custom_call.1} parent=1 // pred_check
      _
    $region71: #{tpu_custom_call.1} parent=1 // pred_check_branch
      %140 = sbr.rel (0) target = $region73
    $region72: #{tpu_custom_call.1} parent=1 // pred_region
      %142 = dma.done [#allocation7], 384
    $region73: #{tpu_custom_call.1} parent=1 // pred_fallthru
      _
    // Predicated region
    $region74: #{tpu_custom_call.1} parent=1 // pred_check
      _
    $region75: #{tpu_custom_call.1} parent=1 // pred_check_branch
      %144 = sbr.rel (0) target = $region77
    $region76: #{tpu_custom_call.1} parent=1 // pred_region
      %146 = dma.done [#allocation7], 384
    $region77: #{tpu_custom_call.1} parent=1 // pred_fallthru
      _
    // Predicated region
    $region78: #{tpu_custom_call.1} parent=1 // pred_check
      _
    $region79: #{tpu_custom_call.1} parent=1 // pred_check_branch
      %148 = sbr.rel (0) target = $region81
    $region80: #{tpu_custom_call.1} parent=1 // pred_region
      %150 = dma.done [#allocation10], 512
    $region81: #{tpu_custom_call.1} parent=1 // pred_fallthru
      _
    // Predicated region
    $region82: #{tpu_custom_call.1} parent=1 // pred_check
      _
    $region83: #{tpu_custom_call.1} parent=1 // pred_check_branch
      %152 = sbr.rel (0) target = $region85
    $region84: #{tpu_custom_call.1} parent=1 // pred_region
      %154 = dma.done [#allocation10], 512
    $region85: #{tpu_custom_call.1} parent=1 // pred_fallthru
      _
    // Predicated region
    $region86: #{tpu_custom_call.1} parent=1 // pred_check
      _
    $region87: #{tpu_custom_call.1} parent=1 // pred_check_branch
      %156 = sbr.rel (0) target = $region89
    $region88: #{tpu_custom_call.1} parent=1 // pred_region
      %158 = dma.done [#allocation13], 512
    $region89: #{tpu_custom_call.1} parent=1 // pred_fallthru
      _
    // Predicated region
    $region90: #{tpu_custom_call.1} parent=1 // pred_check
      _
    $region91: #{tpu_custom_call.1} parent=1 // pred_check_branch
      %160 = sbr.rel (0) target = $region93
    $region92: #{tpu_custom_call.1} parent=1 // pred_region
      %162 = dma.done [#allocation13], 512
    $region93: #{tpu_custom_call.1} parent=1 // pred_fallthru
      _
    %v163 = vld [vmem:[%s1] sm:$0xff]
    %v164 = vld [vmem:[%s1 + $0x8] sm:$0xff]
    %v165 = vld [vmem:[%s1 + $0x10] sm:$0xff]
    %v166 = vld [vmem:[%s1 + $0x18] sm:$0xff]
    %v167 = vld [vmem:[#allocation6] sm:$0xff]
    %v168 = vld [vmem:[#allocation6 + $0x8] sm:$0xff]
    %v169 = vld [vmem:[#allocation6 + $0x10] sm:$0xff]
    %v170 = vld [vmem:[%s3] sm:$0x3]
    %v171 = vld [vmem:[%s4] sm:$0xff]
    %v172 = vld [vmem:[%s4 + $0x8] sm:$0xff]
    %v173 = vld [vmem:[%s4 + $0x10] sm:$0xff]
    %v174 = vld [vmem:[%s4 + $0x18] sm:$0xff]
    %v175 = vld [vmem:[%s4 + $0x20] sm:$0xff]
    %v176 = vld [vmem:[%s4 + $0x28] sm:$0xff]
    %v177 = vld [vmem:[%s4 + $0x30] sm:$0xff]
    %v178 = vld [vmem:[%s4 + $0x38] sm:$0xff]
    %v179 = vld [vmem:[%s4 + $0x40] sm:$0xff]
    %v180 = vld [vmem:[%s4 + $0x48] sm:$0xff]
    %v181 = vld [vmem:[%s5] sm:$0x1]
    %v182 = vld [vmem:[%s6] sm:$0xff]
    %v183 = vld [vmem:[%s6 + $0x8] sm:$0xff]
    %v184 = vld [vmem:[%s6 + $0x10] sm:$0xff]
    %v185 = vld [vmem:[%s6 + $0x18] sm:$0xff]
    %v186 = vld [vmem:[%s7] sm:$0x1]
    %v187 = vld [vmem:[#allocation8] sm:$0xff]
    %v188 = vld [vmem:[#allocation8 + $0x8] sm:$0xff]
    %v189 = vld [vmem:[#allocation8 + $0x10] sm:$0xff]
    %v190 = vld [vmem:[#allocation9] sm:$0xff]
    %v191 = vld [vmem:[#allocation9 + $0x8] sm:$0xff]
    %v192 = vld [vmem:[#allocation9 + $0x10] sm:$0xff]
    %v193 = vld [vmem:[#allocation9 + $0x18] sm:$0xff]
    %v194 = vld [vmem:[%s10] sm:$0x1]
    %v195 = vld [vmem:[#allocation11] sm:$0xff]
    %v196 = vld [vmem:[#allocation11 + $0x8] sm:$0xff]
    %v197 = vld [vmem:[#allocation11 + $0x10] sm:$0xff]
    %v198 = vld [vmem:[#allocation11 + $0x18] sm:$0xff]
    %v199 = vld [vmem:[#allocation12] sm:$0xff]
    %v200 = vld [vmem:[#allocation12 + $0x8] sm:$0xff]
    %v201 = vld [vmem:[#allocation12 + $0x10] sm:$0xff]
    %v202 = vld [vmem:[#allocation12 + $0x18] sm:$0xff]
    %v203 = vld [vmem:[%s13] sm:$0x1]
    %v204 = vld [vmem:[#allocation14] sm:$0xff]
    %v205 = vld [vmem:[#allocation14 + $0x8] sm:$0xff]
    %v206 = vld [vmem:[#allocation14 + $0x10] sm:$0xff]
    %v207 = vld [vmem:[#allocation14 + $0x18] sm:$0xff]
    %v208 = vld [vmem:[%s15] sm:$0x1]
    %v209 = vld [vmem:[#allocation3] sm:$0x3]
    %vm210 = vcmask 123904
    %211 = vst.msk [vmem:[#allocation2] sm:$0x3] %vm210, %v209
    %vm212 = vcmask 386176
    %213 = vst.msk [vmem:[#allocation2] sm:$0x3] %vm212, 0.0
    %vm214 = vcmask 648576
    %215 = vst.msk [vmem:[#allocation2] sm:$0x3] %vm214, 0.0
    %v216 = vld [vmem:[#allocation2] sm:$0x3]
    %v218 = vperm.slane %v181, 0
    %vm220 = vcmask 654336
    %v222 = vsel %vm220, %v216, 0
    %224 = vmatpush.msra.mxu0 0.0
    %225 = vmatpush.msra.mxu0 0.0
    %226 = vmatpush.msra.mxu0 0.0
    %227 = vmatpush.msra.mxu0 0.0
    %228 = vmatpush.msra.mxu0 0.0
    %229 = vmatpush.msra.mxu0 0.0
    %230 = vmatpush.msra.mxu0 %v180
    %231 = vmatpush.msra.mxu0 %v179
    %232 = vmatpush.msra.mxu0 %v178
    %233 = vmatpush.msra.mxu0 %v177
    %234 = vmatpush.msra.mxu0 %v176
    %235 = vmatpush.msra.mxu0 %v175
    %236 = vmatpush.msra.mxu0 %v174
    %237 = vmatpush.msra.mxu0 %v173
    %238 = vmatpush.msra.mxu0 %v172
    %239 = vmatpush.msra.mxu0 %v171
    %240 = vmatmul.f32.gmra.mxu0 %v222
    %v241 = vpop.f32.mrf.mxu0
    %v242 = vadd.f32 %v218, %v241
    %243 = vdwg.mxu0
    %v244 = vxor.u32 %v242, 2147483648
    %v245 = vmul.f32 %v244, 1.442695
    %v246 = vpow.pop %v245
    %v247 = vadd.f32 %v246, 1.0
    %v248 = vrcp.pop %v247
    %v249 = vmul.f32 %v247, %v248
    %v250 = vsub.f32 1.0, %v249
    %v251 = vmul.f32 %v248, %v250
    %v252 = vadd.f32 %v248, %v251
    %vm253 = vweird.f32 %v247
    %vm254 = vweird.f32 %v248
    %vm255 = vmor %vm253, %vm254
    %v256 = vsel %vm255, %v248, %v252
    %v257 = vand.u32 2147483647, %v247
    %vm258 = vcmp.eq.f32.partialorder %v257, 8.507059e+37
    %v259 = vand.u32 %v247, 2147483648
    %v260 = vor.u32 1.1754944e-38, %v259
    %v261 = vsel %vm258, %v260, %v256
    %v262 = vmul.f32 1.0, %v261
    %v263 = vtanh.pop %v242
    %v264 = vmul.f32 %v262, 0.0
    %266 = vrot.lane.b32.xlu0 %v263, 64
    %v267 = vpop.permute.xlu0 %266
    %v269 = vmul.f32 %v262, %v267
    %271 = vrot.lane.b32.xlu0 %v269, 32
    %v272 = vpop.permute.xlu0 %271
    %v274 = vadd.f32 %v264, %v272
    %v275 = vtanh.pop %v274
    %277 = vrot.lane.b32.xlu0 %v275, 64
    %v278 = vpop.permute.xlu0 %277
    %v280 = vmul.f32 %v262, %v278
    %v282 = vperm.slane %v186, 0
    %285 = vrot.lane.b32.xlu0 %v280, 32
    %v286 = vpop.permute.xlu0 %285
    %vm287 = vcmask 261120
    %v288 = vsel %vm287, %v286, 0
    %290 = vmatpush.msra.mxu0 0.0
    %291 = vmatpush.msra.mxu0 0.0
    %292 = vmatpush.msra.mxu0 0.0
    %293 = vmatpush.msra.mxu0 0.0
    %294 = vmatpush.msra.mxu0 0.0
    %295 = vmatpush.msra.mxu0 0.0
    %296 = vmatpush.msra.mxu0 0.0
    %297 = vmatpush.msra.mxu0 0.0
    %298 = vmatpush.msra.mxu0 0.0
    %299 = vmatpush.msra.mxu0 0.0
    %300 = vmatpush.msra.mxu0 0.0
    %301 = vmatpush.msra.mxu0 0.0
    %302 = vmatpush.msra.mxu0 %v185
    %303 = vmatpush.msra.mxu0 %v184
    %304 = vmatpush.msra.mxu0 %v183
    %305 = vmatpush.msra.mxu0 %v182
    %306 = vmatmul.f32.gmra.mxu0 %v288
    %v307 = vpop.f32.mrf.mxu0
    %v308 = vadd.f32 %v282, %v307
    %309 = vdwg.mxu0
    %v311 = vsel %vm287, 0.0, 0
    %313 = vmatpush.msra.mxu0 0.0
    %314 = vmatpush.msra.mxu0 0.0
    %315 = vmatpush.msra.mxu0 0.0
    %316 = vmatpush.msra.mxu0 0.0
    %317 = vmatpush.msra.mxu0 0.0
    %318 = vmatpush.msra.mxu0 0.0
    %319 = vmatpush.msra.mxu0 0.0
    %320 = vmatpush.msra.mxu0 0.0
    %321 = vmatpush.msra.mxu0 0.0
    %322 = vmatpush.msra.mxu0 0.0
    %323 = vmatpush.msra.mxu0 0.0
    %324 = vmatpush.msra.mxu0 0.0
    %325 = vmatpush.msra.mxu0 %v193
    %326 = vmatpush.msra.mxu0 %v192
    %327 = vmatpush.msra.mxu0 %v191
    %328 = vmatpush.msra.mxu0 %v190
    %329 = vmatmul.f32.gmra.mxu0 %v311
    %v330 = vpop.f32.mrf.mxu0
    %v331 = vadd.f32 0.0, %v330
    %332 = vdwg.mxu0
    %vm333 = vcmask 195584
    %v335 = vsel %vm333, %v308, 0
    %337 = vmatpush.msra.mxu0 0.0
    %338 = vmatpush.msra.mxu0 0.0
    %339 = vmatpush.msra.mxu0 0.0
    %340 = vmatpush.msra.mxu0 0.0
    %341 = vmatpush.msra.mxu0 0.0
    %342 = vmatpush.msra.mxu0 0.0
    %343 = vmatpush.msra.mxu0 0.0
    %344 = vmatpush.msra.mxu0 0.0
    %345 = vmatpush.msra.mxu0 0.0
    %346 = vmatpush.msra.mxu0 0.0
    %347 = vmatpush.msra.mxu0 0.0
    %348 = vmatpush.msra.mxu0 0.0
    %349 = vmatpush.msra.mxu0 0.0
    %350 = vmatpush.msra.mxu0 %v189
    %351 = vmatpush.msra.mxu0 %v188
    %352 = vmatpush.msra.mxu0 %v187
    %353 = vmatmul.f32.gmra.mxu0 %v335
    %v354 = vpop.f32.mrf.mxu0
    %v355 = vadd.f32 %v331, %v354
    %356 = vdwg.mxu0
    %v358 = vperm.slane %v194, 0
    %v360 = vadd.f32 %v355, %v358
    %v361 = vxor.u32 %v360, 2147483648
    %v362 = vmul.f32 %v361, 1.442695
    %v363 = vpow.pop %v362
    %v364 = vadd.f32 %v363, 1.0
    %v365 = vrcp.pop %v364
    %v366 = vmul.f32 %v364, %v365
    %v367 = vsub.f32 1.0, %v366
    %v368 = vmul.f32 %v365, %v367
    %v369 = vadd.f32 %v365, %v368
    %vm370 = vweird.f32 %v364
    %vm371 = vweird.f32 %v365
    %vm372 = vmor %vm370, %vm371
    %v373 = vsel %vm372, %v365, %v369
    %v374 = vand.u32 2147483647, %v364
    %vm375 = vcmp.eq.f32.partialorder %v374, 8.507059e+37
    %v376 = vand.u32 %v364, 2147483648
    %v377 = vor.u32 1.1754944e-38, %v376
    %v378 = vsel %vm375, %v377, %v373
    %v379 = vmul.f32 1.0, %v378
    %v380 = vtanh.pop %v360
    %v381 = vmul.f32 %v379, 0.0
    %383 = vrot.lane.b32.xlu0 %v380, 64
    %v384 = vpop.permute.xlu0 %383
    %v386 = vmul.f32 %v379, %v384
    %388 = vrot.lane.b32.xlu0 %v386, 32
    %v389 = vpop.permute.xlu0 %388
    %v391 = vadd.f32 %v381, %v389
    %v392 = vtanh.pop %v391
    %394 = vrot.lane.b32.xlu0 %v392, 64
    %v395 = vpop.permute.xlu0 %394
    %v397 = vmul.f32 %v379, %v395
    %399 = vrot.lane.b32.xlu0 %v397, 32
    %v400 = vpop.permute.xlu0 %399
    %v401 = vsel %vm287, %v400, 0
    %403 = vmatpush.msra.mxu0 0.0
    %404 = vmatpush.msra.mxu0 0.0
    %405 = vmatpush.msra.mxu0 0.0
    %406 = vmatpush.msra.mxu0 0.0
    %407 = vmatpush.msra.mxu0 0.0
    %408 = vmatpush.msra.mxu0 0.0
    %409 = vmatpush.msra.mxu0 0.0
    %410 = vmatpush.msra.mxu0 0.0
    %411 = vmatpush.msra.mxu0 0.0
    %412 = vmatpush.msra.mxu0 0.0
    %413 = vmatpush.msra.mxu0 0.0
    %414 = vmatpush.msra.mxu0 0.0
    %415 = vmatpush.msra.mxu0 %v166
    %416 = vmatpush.msra.mxu0 %v165
    %417 = vmatpush.msra.mxu0 %v164
    %418 = vmatpush.msra.mxu0 %v163
    %419 = vmatmul.f32.gmra.mxu0 %v401
    %v420 = vpop.f32.mrf.mxu0
    %v421 = vadd.f32 %v170, %v420
    %422 = vdwg.mxu0
    %vm423 = vcmask 189440
    %v424 = vsel %vm423, %v421, -inf
    %425 = vmax.xlane.f32.xlu0 %v424
    %v426 = vpop.xlane.xlu0 %425
    %v427 = vsub.f32 %v421, %v426
    %v428 = vmul.f32 %v427, 1.442695
    %v429 = vpow.pop %v428
    %v430 = vsel %vm423, %v429, 0.0
    %431 = vadd.xlane.f32.xlu0 %v430
    %v432 = vpop.xlane.xlu0 %431
    %v433 = vrcp.pop %v432
    %v434 = vmul.f32 %v429, %v433
    %v436 = vsel %vm333, %v434, 0
    %438 = vmatpush.msra.mxu0 0.0
    %439 = vmatpush.msra.mxu0 0.0
    %440 = vmatpush.msra.mxu0 0.0
    %441 = vmatpush.msra.mxu0 0.0
    %442 = vmatpush.msra.mxu0 0.0
    %443 = vmatpush.msra.mxu0 0.0
    %444 = vmatpush.msra.mxu0 0.0
    %445 = vmatpush.msra.mxu0 0.0
    %446 = vmatpush.msra.mxu0 0.0
    %447 = vmatpush.msra.mxu0 0.0
    %448 = vmatpush.msra.mxu0 0.0
    %449 = vmatpush.msra.mxu0 0.0
    %450 = vmatpush.msra.mxu0 0.0
    %451 = vmatpush.msra.mxu0 %v169
    %452 = vmatpush.msra.mxu0 %v168
    %453 = vmatpush.msra.mxu0 %v167
    %454 = vmatmul.f32.gmra.mxu0 %v436
    %v455 = vpop.f32.mrf.mxu0
    %v456 = vadd.f32 0.0, %v455
    %457 = vdwg.mxu0
    %v459 = vsel %vm287, %v456, 0
    %461 = vmatpush.msra.mxu0 0.0
    %462 = vmatpush.msra.mxu0 0.0
    %463 = vmatpush.msra.mxu0 0.0
    %464 = vmatpush.msra.mxu0 0.0
    %465 = vmatpush.msra.mxu0 0.0
    %466 = vmatpush.msra.mxu0 0.0
    %467 = vmatpush.msra.mxu0 0.0
    %468 = vmatpush.msra.mxu0 0.0
    %469 = vmatpush.msra.mxu0 0.0
    %470 = vmatpush.msra.mxu0 0.0
    %471 = vmatpush.msra.mxu0 0.0
    %472 = vmatpush.msra.mxu0 0.0
    %473 = vmatpush.msra.mxu0 %v202
    %474 = vmatpush.msra.mxu0 %v201
    %475 = vmatpush.msra.mxu0 %v200
    %476 = vmatpush.msra.mxu0 %v199
    %477 = vmatmul.f32.gmra.mxu0 %v459
    %v478 = vpop.f32.mrf.mxu0
    %v479 = vadd.f32 0.0, %v478
    %480 = vdwg.mxu0
    %481 = vmatpush.msra.mxu0 0.0
    %482 = vmatpush.msra.mxu0 0.0
    %483 = vmatpush.msra.mxu0 0.0
    %484 = vmatpush.msra.mxu0 0.0
    %485 = vmatpush.msra.mxu0 0.0
    %486 = vmatpush.msra.mxu0 0.0
    %487 = vmatpush.msra.mxu0 0.0
    %488 = vmatpush.msra.mxu0 0.0
    %489 = vmatpush.msra.mxu0 0.0
    %490 = vmatpush.msra.mxu0 0.0
    %491 = vmatpush.msra.mxu0 0.0
    %492 = vmatpush.msra.mxu0 0.0
    %493 = vmatpush.msra.mxu0 %v198
    %494 = vmatpush.msra.mxu0 %v197
    %495 = vmatpush.msra.mxu0 %v196
    %496 = vmatpush.msra.mxu0 %v195
    %497 = vmatmul.f32.gmra.mxu0 %v401
    %v498 = vpop.f32.mrf.mxu0
    %v499 = vadd.f32 %v479, %v498
    %500 = vdwg.mxu0
    %v502 = vperm.slane %v203, 0
    %v504 = vadd.f32 %v499, %v502
    %v505 = vtanh.pop %v504
    %v507 = vperm.slane %v208, 0
    %v510 = vsel %vm287, %v505, 0
    %512 = vmatpush.msra.mxu0 0.0
    %513 = vmatpush.msra.mxu0 0.0
    %514 = vmatpush.msra.mxu0 0.0
    %515 = vmatpush.msra.mxu0 0.0
    %516 = vmatpush.msra.mxu0 0.0
    %517 = vmatpush.msra.mxu0 0.0
    %518 = vmatpush.msra.mxu0 0.0
    %519 = vmatpush.msra.mxu0 0.0
    %520 = vmatpush.msra.mxu0 0.0
    %521 = vmatpush.msra.mxu0 0.0
    %522 = vmatpush.msra.mxu0 0.0
    %523 = vmatpush.msra.mxu0 0.0
    %524 = vmatpush.msra.mxu0 %v207
    %525 = vmatpush.msra.mxu0 %v206
    %526 = vmatpush.msra.mxu0 %v205
    %527 = vmatpush.msra.mxu0 %v204
    %528 = vmatmul.f32.gmra.mxu0 %v510
    %v529 = vpop.f32.mrf.mxu0
    %v530 = vadd.f32 %v507, %v529
    %531 = vdwg.mxu0
    %vm532 = vcmask 1041408
    %v533 = vsel %vm532, %v530, -inf
    %534 = vmax.xlane.f32.xlu0 %v533
    %v535 = vpop.xlane.xlu0 %534
    %v536 = vsub.f32 %v530, %v535
    %v537 = vmul.f32 %v536, 1.442695
    %v538 = vpow.pop %v537
    %v539 = vsel %vm532, %v538, 0.0
    %540 = vadd.xlane.f32.xlu0 %v539
    %v541 = vpop.xlane.xlu0 %540
    %v542 = vlog2.pop %v541
    %v543 = vmul.f32 %v542, 0.6931472
    %v544 = vadd.f32 %v543, %v535
    %v545 = vsub.f32 %v530, %v544
    %546 = vst [vmem:[#allocation15] sm:$0x3] %v545
    %s547 = scalar_lea.vmem [#allocation3], 2
    %v548 = vld [vmem:[%s547] sm:$0x3]
    %549 = vst.msk [vmem:[#allocation2] sm:$0x3] %vm210, %v548
    %550 = vrot.lane.b32.xlu0 %v456, 16
    %v551 = vpop.permute.xlu0 %550
    %553 = vst.msk [vmem:[#allocation2] sm:$0x3] %vm212, %v551
    %554 = vrot.lane.b32.xlu0 %v280, 80
    %v555 = vpop.permute.xlu0 %554
    %557 = vst.msk [vmem:[#allocation2] sm:$0x3] %vm214, %v555
    %v558 = vld [vmem:[#allocation2] sm:$0x3]
    %v560 = vsel %vm220, %v558, 0
    %562 = vmatpush.msra.mxu0 0.0
    %563 = vmatpush.msra.mxu0 0.0
    %564 = vmatpush.msra.mxu0 0.0
    %565 = vmatpush.msra.mxu0 0.0
    %566 = vmatpush.msra.mxu0 0.0
    %567 = vmatpush.msra.mxu0 0.0
    %568 = vmatpush.msra.mxu0 %v180
    %569 = vmatpush.msra.mxu0 %v179
    %570 = vmatpush.msra.mxu0 %v178
    %571 = vmatpush.msra.mxu0 %v177
    %572 = vmatpush.msra.mxu0 %v176
    %573 = vmatpush.msra.mxu0 %v175
    %574 = vmatpush.msra.mxu0 %v174
    %575 = vmatpush.msra.mxu0 %v173
    %576 = vmatpush.msra.mxu0 %v172
    %577 = vmatpush.msra.mxu0 %v171
    %578 = vmatmul.f32.gmra.mxu0 %v560
    %v579 = vpop.f32.mrf.mxu0
    %v580 = vadd.f32 %v218, %v579
    %581 = vdwg.mxu0
    %v582 = vxor.u32 %v580, 2147483648
    %v583 = vmul.f32 %v582, 1.442695
    %v584 = vpow.pop %v583
    %v585 = vadd.f32 %v584, 1.0
    %v586 = vrcp.pop %v585
    %v587 = vmul.f32 %v585, %v586
    %v588 = vsub.f32 1.0, %v587
    %v589 = vmul.f32 %v586, %v588
    %v590 = vadd.f32 %v586, %v589
    %vm591 = vweird.f32 %v585
    %vm592 = vweird.f32 %v586
    %vm593 = vmor %vm591, %vm592
    %v594 = vsel %vm593, %v586, %v590
    %v595 = vand.u32 2147483647, %v585
    %vm596 = vcmp.eq.f32.partialorder %v595, 8.507059e+37
    %v597 = vand.u32 %v585, 2147483648
    %v598 = vor.u32 1.1754944e-38, %v597
    %v599 = vsel %vm596, %v598, %v594
    %v600 = vmul.f32 1.0, %v599
    %v601 = vtanh.pop %v580
    %v602 = vmul.f32 %v600, %v274
    %604 = vrot.lane.b32.xlu0 %v601, 64
    %v605 = vpop.permute.xlu0 %604
    %v607 = vmul.f32 %v600, %v605
    %609 = vrot.lane.b32.xlu0 %v607, 32
    %v610 = vpop.permute.xlu0 %609
    %v612 = vadd.f32 %v602, %v610
    %v613 = vtanh.pop %v612
    %615 = vrot.lane.b32.xlu0 %v613, 64
    %v616 = vpop.permute.xlu0 %615
    %v618 = vmul.f32 %v600, %v616
    %620 = vrot.lane.b32.xlu0 %v618, 32
    %v621 = vpop.permute.xlu0 %620
    %v622 = vsel %vm287, %v621, 0
    %624 = vmatpush.msra.mxu0 0.0
    %625 = vmatpush.msra.mxu0 0.0
    %626 = vmatpush.msra.mxu0 0.0
    %627 = vmatpush.msra.mxu0 0.0
    %628 = vmatpush.msra.mxu0 0.0
    %629 = vmatpush.msra.mxu0 0.0
    %630 = vmatpush.msra.mxu0 0.0
    %631 = vmatpush.msra.mxu0 0.0
    %632 = vmatpush.msra.mxu0 0.0
    %633 = vmatpush.msra.mxu0 0.0
    %634 = vmatpush.msra.mxu0 0.0
    %635 = vmatpush.msra.mxu0 0.0
    %636 = vmatpush.msra.mxu0 %v185
    %637 = vmatpush.msra.mxu0 %v184
    %638 = vmatpush.msra.mxu0 %v183
    %639 = vmatpush.msra.mxu0 %v182
    %640 = vmatmul.f32.gmra.mxu0 %v622
    %v641 = vpop.f32.mrf.mxu0
    %v642 = vadd.f32 %v282, %v641
    %643 = vdwg.mxu0
    %644 = vmatpush.msra.mxu0 0.0
    %645 = vmatpush.msra.mxu0 0.0
    %646 = vmatpush.msra.mxu0 0.0
    %647 = vmatpush.msra.mxu0 0.0
    %648 = vmatpush.msra.mxu0 0.0
    %649 = vmatpush.msra.mxu0 0.0
    %650 = vmatpush.msra.mxu0 0.0
    %651 = vmatpush.msra.mxu0 0.0
    %652 = vmatpush.msra.mxu0 0.0
    %653 = vmatpush.msra.mxu0 0.0
    %654 = vmatpush.msra.mxu0 0.0
    %655 = vmatpush.msra.mxu0 0.0
    %656 = vmatpush.msra.mxu0 %v193
    %657 = vmatpush.msra.mxu0 %v192
    %658 = vmatpush.msra.mxu0 %v191
    %659 = vmatpush.msra.mxu0 %v190
    %660 = vmatmul.f32.gmra.mxu0 %v401
    %v661 = vpop.f32.mrf.mxu0
    %v662 = vadd.f32 0.0, %v661
    %663 = vdwg.mxu0
    %v665 = vsel %vm333, %v642, 0
    %667 = vmatpush.msra.mxu0 0.0
    %668 = vmatpush.msra.mxu0 0.0
    %669 = vmatpush.msra.mxu0 0.0
    %670 = vmatpush.msra.mxu0 0.0
    %671 = vmatpush.msra.mxu0 0.0
    %672 = vmatpush.msra.mxu0 0.0
    %673 = vmatpush.msra.mxu0 0.0
    %674 = vmatpush.msra.mxu0 0.0
    %675 = vmatpush.msra.mxu0 0.0
    %676 = vmatpush.msra.mxu0 0.0
    %677 = vmatpush.msra.mxu0 0.0
    %678 = vmatpush.msra.mxu0 0.0
    %679 = vmatpush.msra.mxu0 0.0
    %680 = vmatpush.msra.mxu0 %v189
    %681 = vmatpush.msra.mxu0 %v188
    %682 = vmatpush.msra.mxu0 %v187
    %683 = vmatmul.f32.gmra.mxu0 %v665
    %v684 = vpop.f32.mrf.mxu0
    %v685 = vadd.f32 %v662, %v684
    %686 = vdwg.mxu0
    %v687 = vadd.f32 %v685, %v358
    %v688 = vxor.u32 %v687, 2147483648
    %v689 = vmul.f32 %v688, 1.442695
    %v690 = vpow.pop %v689
    %v691 = vadd.f32 %v690, 1.0
    %v692 = vrcp.pop %v691
    %v693 = vmul.f32 %v691, %v692
    %v694 = vsub.f32 1.0, %v693
    %v695 = vmul.f32 %v692, %v694
    %v696 = vadd.f32 %v692, %v695
    %vm697 = vweird.f32 %v691
    %vm698 = vweird.f32 %v692
    %vm699 = vmor %vm697, %vm698
    %v700 = vsel %vm699, %v692, %v696
    %v701 = vand.u32 2147483647, %v691
    %vm702 = vcmp.eq.f32.partialorder %v701, 8.507059e+37
    %v703 = vand.u32 %v691, 2147483648
    %v704 = vor.u32 1.1754944e-38, %v703
    %v705 = vsel %vm702, %v704, %v700
    %v706 = vmul.f32 1.0, %v705
    %v707 = vtanh.pop %v687
    %v708 = vmul.f32 %v706, %v391
    %710 = vrot.lane.b32.xlu0 %v707, 64
    %v711 = vpop.permute.xlu0 %710
    %v713 = vmul.f32 %v706, %v711
    %715 = vrot.lane.b32.xlu0 %v713, 32
    %v716 = vpop.permute.xlu0 %715
    %v718 = vadd.f32 %v708, %v716
    %v719 = vtanh.pop %v718
    %721 = vrot.lane.b32.xlu0 %v719, 64
    %v722 = vpop.permute.xlu0 %721
    %v724 = vmul.f32 %v706, %v722
    %726 = vrot.lane.b32.xlu0 %v724, 32
    %v727 = vpop.permute.xlu0 %726
    %v728 = vsel %vm287, %v727, 0
    %730 = vmatpush.msra.mxu0 0.0
    %731 = vmatpush.msra.mxu0 0.0
    %732 = vmatpush.msra.mxu0 0.0
    %733 = vmatpush.msra.mxu0 0.0
    %734 = vmatpush.msra.mxu0 0.0
    %735 = vmatpush.msra.mxu0 0.0
    %736 = vmatpush.msra.mxu0 0.0
    %737 = vmatpush.msra.mxu0 0.0
    %738 = vmatpush.msra.mxu0 0.0
    %739 = vmatpush.msra.mxu0 0.0
    %740 = vmatpush.msra.mxu0 0.0
    %741 = vmatpush.msra.mxu0 0.0
    %742 = vmatpush.msra.mxu0 %v166
    %743 = vmatpush.msra.mxu0 %v165
    %744 = vmatpush.msra.mxu0 %v164
    %745 = vmatpush.msra.mxu0 %v163
    %746 = vmatmul.f32.gmra.mxu0 %v728
    %v747 = vpop.f32.mrf.mxu0
    %v748 = vadd.f32 %v170, %v747
    %749 = vdwg.mxu0
    %v750 = vsel %vm423, %v748, -inf
    %751 = vmax.xlane.f32.xlu0 %v750
    %v752 = vpop.xlane.xlu0 %751
    %v753 = vsub.f32 %v748, %v752
    %v754 = vmul.f32 %v753, 1.442695
    %v755 = vpow.pop %v754
    %v756 = vsel %vm423, %v755, 0.0
    %757 = vadd.xlane.f32.xlu0 %v756
    %v758 = vpop.xlane.xlu0 %757
    %v759 = vrcp.pop %v758
    %v760 = vmul.f32 %v755, %v759
    %v762 = vsel %vm333, %v760, 0
    %764 = vmatpush.msra.mxu0 0.0
    %765 = vmatpush.msra.mxu0 0.0
    %766 = vmatpush.msra.mxu0 0.0
    %767 = vmatpush.msra.mxu0 0.0
    %768 = vmatpush.msra.mxu0 0.0
    %769 = vmatpush.msra.mxu0 0.0
    %770 = vmatpush.msra.mxu0 0.0
    %771 = vmatpush.msra.mxu0 0.0
    %772 = vmatpush.msra.mxu0 0.0
    %773 = vmatpush.msra.mxu0 0.0
    %774 = vmatpush.msra.mxu0 0.0
    %775 = vmatpush.msra.mxu0 0.0
    %776 = vmatpush.msra.mxu0 0.0
    %777 = vmatpush.msra.mxu0 %v169
    %778 = vmatpush.msra.mxu0 %v168
    %779 = vmatpush.msra.mxu0 %v167
    %780 = vmatmul.f32.gmra.mxu0 %v762
    %v781 = vpop.f32.mrf.mxu0
    %v782 = vadd.f32 0.0, %v781
    %783 = vdwg.mxu0
    %v785 = vsel %vm287, %v782, 0
    %787 = vmatpush.msra.mxu0 0.0
    %788 = vmatpush.msra.mxu0 0.0
    %789 = vmatpush.msra.mxu0 0.0
    %790 = vmatpush.msra.mxu0 0.0
    %791 = vmatpush.msra.mxu0 0.0
    %792 = vmatpush.msra.mxu0 0.0
    %793 = vmatpush.msra.mxu0 0.0
    %794 = vmatpush.msra.mxu0 0.0
    %795 = vmatpush.msra.mxu0 0.0
    %796 = vmatpush.msra.mxu0 0.0
    %797 = vmatpush.msra.mxu0 0.0
    %798 = vmatpush.msra.mxu0 0.0
    %799 = vmatpush.msra.mxu0 %v202
    %800 = vmatpush.msra.mxu0 %v201
    %801 = vmatpush.msra.mxu0 %v200
    %802 = vmatpush.msra.mxu0 %v199
    %803 = vmatmul.f32.gmra.mxu0 %v785
    %v804 = vpop.f32.mrf.mxu0
    %v805 = vadd.f32 0.0, %v804
    %806 = vdwg.mxu0
    %807 = vmatpush.msra.mxu0 0.0
    %808 = vmatpush.msra.mxu0 0.0
    %809 = vmatpush.msra.mxu0 0.0
    %810 = vmatpush.msra.mxu0 0.0
    %811 = vmatpush.msra.mxu0 0.0
    %812 = vmatpush.msra.mxu0 0.0
    %813 = vmatpush.msra.mxu0 0.0
    %814 = vmatpush.msra.mxu0 0.0
    %815 = vmatpush.msra.mxu0 0.0
    %816 = vmatpush.msra.mxu0 0.0
    %817 = vmatpush.msra.mxu0 0.0
    %818 = vmatpush.msra.mxu0 0.0
    %819 = vmatpush.msra.mxu0 %v198
    %820 = vmatpush.msra.mxu0 %v197
    %821 = vmatpush.msra.mxu0 %v196
    %822 = vmatpush.msra.mxu0 %v195
    %823 = vmatmul.f32.gmra.mxu0 %v728
    %v824 = vpop.f32.mrf.mxu0
    %v825 = vadd.f32 %v805, %v824
    %826 = vdwg.mxu0
    %v827 = vadd.f32 %v825, %v502
    %v828 = vtanh.pop %v827
    %v830 = vsel %vm287, %v828, 0
    %832 = vmatpush.msra.mxu0 0.0
    %833 = vmatpush.msra.mxu0 0.0
    %834 = vmatpush.msra.mxu0 0.0
    %835 = vmatpush.msra.mxu0 0.0
    %836 = vmatpush.msra.mxu0 0.0
    %837 = vmatpush.msra.mxu0 0.0
    %838 = vmatpush.msra.mxu0 0.0
    %839 = vmatpush.msra.mxu0 0.0
    %840 = vmatpush.msra.mxu0 0.0
    %841 = vmatpush.msra.mxu0 0.0
    %842 = vmatpush.msra.mxu0 0.0
    %843 = vmatpush.msra.mxu0 0.0
    %844 = vmatpush.msra.mxu0 %v207
    %845 = vmatpush.msra.mxu0 %v206
    %846 = vmatpush.msra.mxu0 %v205
    %847 = vmatpush.msra.mxu0 %v204
    %848 = vmatmul.f32.gmra.mxu0 %v830
    %v849 = vpop.f32.mrf.mxu0
    %v850 = vadd.f32 %v507, %v849
    %851 = vdwg.mxu0
    %v852 = vsel %vm532, %v850, -inf
    %853 = vmax.xlane.f32.xlu0 %v852
    %v854 = vpop.xlane.xlu0 %853
    %v855 = vsub.f32 %v850, %v854
    %v856 = vmul.f32 %v855, 1.442695
    %v857 = vpow.pop %v856
    %v858 = vsel %vm532, %v857, 0.0
    %859 = vadd.xlane.f32.xlu0 %v858
    %v860 = vpop.xlane.xlu0 %859
    %v861 = vlog2.pop %v860
    %v862 = vmul.f32 %v861, 0.6931472
    %v863 = vadd.f32 %v862, %v854
    %v864 = vsub.f32 %v850, %v863
    %s865 = scalar_lea.vmem [#allocation15], 2
    %866 = vst [vmem:[%s865] sm:$0x3] %v864
    %s867 = scalar_lea.vmem [#allocation3], 4
    %v868 = vld [vmem:[%s867] sm:$0x3]
    %869 = vst.msk [vmem:[#allocation2] sm:$0x3] %vm210, %v868
    %870 = vrot.lane.b32.xlu0 %v782, 16
    %v871 = vpop.permute.xlu0 %870
    %873 = vst.msk [vmem:[#allocation2] sm:$0x3] %vm212, %v871
    %874 = vrot.lane.b32.xlu0 %v618, 80
    %v875 = vpop.permute.xlu0 %874
    %877 = vst.msk [vmem:[#allocation2] sm:$0x3] %vm214, %v875
    %v878 = vld [vmem:[#allocation2] sm:$0x3]
    %v880 = vsel %vm220, %v878, 0
    %882 = vmatpush.msra.mxu0 0.0
    %883 = vmatpush.msra.mxu0 0.0
    %884 = vmatpush.msra.mxu0 0.0
    %885 = vmatpush.msra.mxu0 0.0
    %886 = vmatpush.msra.mxu0 0.0
    %887 = vmatpush.msra.mxu0 0.0
    %888 = vmatpush.msra.mxu0 %v180
    %889 = vmatpush.msra.mxu0 %v179
    %890 = vmatpush.msra.mxu0 %v178
    %891 = vmatpush.msra.mxu0 %v177
    %892 = vmatpush.msra.mxu0 %v176
    %893 = vmatpush.msra.mxu0 %v175
    %894 = vmatpush.msra.mxu0 %v174
    %895 = vmatpush.msra.mxu0 %v173
    %896 = vmatpush.msra.mxu0 %v172
    %897 = vmatpush.msra.mxu0 %v171
    %898 = vmatmul.f32.gmra.mxu0 %v880
    %v899 = vpop.f32.mrf.mxu0
    %v900 = vadd.f32 %v218, %v899
    %901 = vdwg.mxu0
    %v902 = vxor.u32 %v900, 2147483648
    %v903 = vmul.f32 %v902, 1.442695
    %v904 = vpow.pop %v903
    %v905 = vadd.f32 %v904, 1.0
    %v906 = vrcp.pop %v905
    %v907 = vmul.f32 %v905, %v906
    %v908 = vsub.f32 1.0, %v907
    %v909 = vmul.f32 %v906, %v908
    %v910 = vadd.f32 %v906, %v909
    %vm911 = vweird.f32 %v905
    %vm912 = vweird.f32 %v906
    %vm913 = vmor %vm911, %vm912
    %v914 = vsel %vm913, %v906, %v910
    %v915 = vand.u32 2147483647, %v905
    %vm916 = vcmp.eq.f32.partialorder %v915, 8.507059e+37
    %v917 = vand.u32 %v905, 2147483648
    %v918 = vor.u32 1.1754944e-38, %v917
    %v919 = vsel %vm916, %v918, %v914
    %v920 = vmul.f32 1.0, %v919
    %v921 = vtanh.pop %v900
    %v922 = vmul.f32 %v920, %v612
    %924 = vrot.lane.b32.xlu0 %v921, 64
    %v925 = vpop.permute.xlu0 %924
    %v927 = vmul.f32 %v920, %v925
    %929 = vrot.lane.b32.xlu0 %v927, 32
    %v930 = vpop.permute.xlu0 %929
    %v932 = vadd.f32 %v922, %v930
    %v933 = vtanh.pop %v932
    %935 = vrot.lane.b32.xlu0 %v933, 64
    %v936 = vpop.permute.xlu0 %935
    %v938 = vmul.f32 %v920, %v936
    %940 = vrot.lane.b32.xlu0 %v938, 32
    %v941 = vpop.permute.xlu0 %940
    %v942 = vsel %vm287, %v941, 0
    %944 = vmatpush.msra.mxu0 0.0
    %945 = vmatpush.msra.mxu0 0.0
    %946 = vmatpush.msra.mxu0 0.0
    %947 = vmatpush.msra.mxu0 0.0
    %948 = vmatpush.msra.mxu0 0.0
    %949 = vmatpush.msra.mxu0 0.0
    %950 = vmatpush.msra.mxu0 0.0
    %951 = vmatpush.msra.mxu0 0.0
    %952 = vmatpush.msra.mxu0 0.0
    %953 = vmatpush.msra.mxu0 0.0
    %954 = vmatpush.msra.mxu0 0.0
    %955 = vmatpush.msra.mxu0 0.0
    %956 = vmatpush.msra.mxu0 %v185
    %957 = vmatpush.msra.mxu0 %v184
    %958 = vmatpush.msra.mxu0 %v183
    %959 = vmatpush.msra.mxu0 %v182
    %960 = vmatmul.f32.gmra.mxu0 %v942
    %v961 = vpop.f32.mrf.mxu0
    %v962 = vadd.f32 %v282, %v961
    %963 = vdwg.mxu0
    %964 = vmatpush.msra.mxu0 0.0
    %965 = vmatpush.msra.mxu0 0.0
    %966 = vmatpush.msra.mxu0 0.0
    %967 = vmatpush.msra.mxu0 0.0
    %968 = vmatpush.msra.mxu0 0.0
    %969 = vmatpush.msra.mxu0 0.0
    %970 = vmatpush.msra.mxu0 0.0
    %971 = vmatpush.msra.mxu0 0.0
    %972 = vmatpush.msra.mxu0 0.0
    %973 = vmatpush.msra.mxu0 0.0
    %974 = vmatpush.msra.mxu0 0.0
    %975 = vmatpush.msra.mxu0 0.0
    %976 = vmatpush.msra.mxu0 %v193
    %977 = vmatpush.msra.mxu0 %v192
    %978 = vmatpush.msra.mxu0 %v191
    %979 = vmatpush.msra.mxu0 %v190
    %980 = vmatmul.f32.gmra.mxu0 %v728
    %v981 = vpop.f32.mrf.mxu0
    %v982 = vadd.f32 0.0, %v981
    %983 = vdwg.mxu0
    %v985 = vsel %vm333, %v962, 0
    %987 = vmatpush.msra.mxu0 0.0
    %988 = vmatpush.msra.mxu0 0.0
    %989 = vmatpush.msra.mxu0 0.0
    %990 = vmatpush.msra.mxu0 0.0
    %991 = vmatpush.msra.mxu0 0.0
    %992 = vmatpush.msra.mxu0 0.0
    %993 = vmatpush.msra.mxu0 0.0
    %994 = vmatpush.msra.mxu0 0.0
    %995 = vmatpush.msra.mxu0 0.0
    %996 = vmatpush.msra.mxu0 0.0
    %997 = vmatpush.msra.mxu0 0.0
    %998 = vmatpush.msra.mxu0 0.0
    %999 = vmatpush.msra.mxu0 0.0
    %1000 = vmatpush.msra.mxu0 %v189
    %1001 = vmatpush.msra.mxu0 %v188
    %1002 = vmatpush.msra.mxu0 %v187
    %1003 = vmatmul.f32.gmra.mxu0 %v985
    %v1004 = vpop.f32.mrf.mxu0
    %v1005 = vadd.f32 %v982, %v1004
    %1006 = vdwg.mxu0
    %v1007 = vadd.f32 %v1005, %v358
    %v1008 = vxor.u32 %v1007, 2147483648
    %v1009 = vmul.f32 %v1008, 1.442695
    %v1010 = vpow.pop %v1009
    %v1011 = vadd.f32 %v1010, 1.0
    %v1012 = vrcp.pop %v1011
    %v1013 = vmul.f32 %v1011, %v1012
    %v1014 = vsub.f32 1.0, %v1013
    %v1015 = vmul.f32 %v1012, %v1014
    %v1016 = vadd.f32 %v1012, %v1015
    %vm1017 = vweird.f32 %v1011
    %vm1018 = vweird.f32 %v1012
    %vm1019 = vmor %vm1017, %vm1018
    %v1020 = vsel %vm1019, %v1012, %v1016
    %v1021 = vand.u32 2147483647, %v1011
    %vm1022 = vcmp.eq.f32.partialorder %v1021, 8.507059e+37
    %v1023 = vand.u32 %v1011, 2147483648
    %v1024 = vor.u32 1.1754944e-38, %v1023
    %v1025 = vsel %vm1022, %v1024, %v1020
    %v1026 = vmul.f32 1.0, %v1025
    %v1027 = vtanh.pop %v1007
    %v1028 = vmul.f32 %v1026, %v718
    %1030 = vrot.lane.b32.xlu0 %v1027, 64
    %v1031 = vpop.permute.xlu0 %1030
    %v1033 = vmul.f32 %v1026, %v1031
    %1035 = vrot.lane.b32.xlu0 %v1033, 32
    %v1036 = vpop.permute.xlu0 %1035
    %v1038 = vadd.f32 %v1028, %v1036
    %v1039 = vtanh.pop %v1038
    %1041 = vrot.lane.b32.xlu0 %v1039, 64
    %v1042 = vpop.permute.xlu0 %1041
    %v1044 = vmul.f32 %v1026, %v1042
    %1046 = vrot.lane.b32.xlu0 %v1044, 32
    %v1047 = vpop.permute.xlu0 %1046
    %v1048 = vsel %vm287, %v1047, 0
    %1050 = vmatpush.msra.mxu0 0.0
    %1051 = vmatpush.msra.mxu0 0.0
    %1052 = vmatpush.msra.mxu0 0.0
    %1053 = vmatpush.msra.mxu0 0.0
    %1054 = vmatpush.msra.mxu0 0.0
    %1055 = vmatpush.msra.mxu0 0.0
    %1056 = vmatpush.msra.mxu0 0.0
    %1057 = vmatpush.msra.mxu0 0.0
    %1058 = vmatpush.msra.mxu0 0.0
    %1059 = vmatpush.msra.mxu0 0.0
    %1060 = vmatpush.msra.mxu0 0.0
    %1061 = vmatpush.msra.mxu0 0.0
    %1062 = vmatpush.msra.mxu0 %v166
    %1063 = vmatpush.msra.mxu0 %v165
    %1064 = vmatpush.msra.mxu0 %v164
    %1065 = vmatpush.msra.mxu0 %v163
    %1066 = vmatmul.f32.gmra.mxu0 %v1048
    %v1067 = vpop.f32.mrf.mxu0
    %v1068 = vadd.f32 %v170, %v1067
    %1069 = vdwg.mxu0
    %v1070 = vsel %vm423, %v1068, -inf
    %1071 = vmax.xlane.f32.xlu0 %v1070
    %v1072 = vpop.xlane.xlu0 %1071
    %v1073 = vsub.f32 %v1068, %v1072
    %v1074 = vmul.f32 %v1073, 1.442695
    %v1075 = vpow.pop %v1074
    %v1076 = vsel %vm423, %v1075, 0.0
    %1077 = vadd.xlane.f32.xlu0 %v1076
    %v1078 = vpop.xlane.xlu0 %1077
    %v1079 = vrcp.pop %v1078
    %v1080 = vmul.f32 %v1075, %v1079
    %v1082 = vsel %vm333, %v1080, 0
    %1084 = vmatpush.msra.mxu0 0.0
    %1085 = vmatpush.msra.mxu0 0.0
    %1086 = vmatpush.msra.mxu0 0.0
    %1087 = vmatpush.msra.mxu0 0.0
    %1088 = vmatpush.msra.mxu0 0.0
    %1089 = vmatpush.msra.mxu0 0.0
    %1090 = vmatpush.msra.mxu0 0.0
    %1091 = vmatpush.msra.mxu0 0.0
    %1092 = vmatpush.msra.mxu0 0.0
    %1093 = vmatpush.msra.mxu0 0.0
    %1094 = vmatpush.msra.mxu0 0.0
    %1095 = vmatpush.msra.mxu0 0.0
    %1096 = vmatpush.msra.mxu0 0.0
    %1097 = vmatpush.msra.mxu0 %v169
    %1098 = vmatpush.msra.mxu0 %v168
    %1099 = vmatpush.msra.mxu0 %v167
    %1100 = vmatmul.f32.gmra.mxu0 %v1082
    %v1101 = vpop.f32.mrf.mxu0
    %v1102 = vadd.f32 0.0, %v1101
    %1103 = vdwg.mxu0
    %v1105 = vsel %vm287, %v1102, 0
    %1107 = vmatpush.msra.mxu0 0.0
    %1108 = vmatpush.msra.mxu0 0.0
    %1109 = vmatpush.msra.mxu0 0.0
    %1110 = vmatpush.msra.mxu0 0.0
    %1111 = vmatpush.msra.mxu0 0.0
    %1112 = vmatpush.msra.mxu0 0.0
    %1113 = vmatpush.msra.mxu0 0.0
    %1114 = vmatpush.msra.mxu0 0.0
    %1115 = vmatpush.msra.mxu0 0.0
    %1116 = vmatpush.msra.mxu0 0.0
    %1117 = vmatpush.msra.mxu0 0.0
    %1118 = vmatpush.msra.mxu0 0.0
    %1119 = vmatpush.msra.mxu0 %v202
    %1120 = vmatpush.msra.mxu0 %v201
    %1121 = vmatpush.msra.mxu0 %v200
    %1122 = vmatpush.msra.mxu0 %v199
    %1123 = vmatmul.f32.gmra.mxu0 %v1105
    %v1124 = vpop.f32.mrf.mxu0
    %v1125 = vadd.f32 0.0, %v1124
    %1126 = vdwg.mxu0
    %1127 = vmatpush.msra.mxu0 0.0
    %1128 = vmatpush.msra.mxu0 0.0
    %1129 = vmatpush.msra.mxu0 0.0
    %1130 = vmatpush.msra.mxu0 0.0
    %1131 = vmatpush.msra.mxu0 0.0
    %1132 = vmatpush.msra.mxu0 0.0
    %1133 = vmatpush.msra.mxu0 0.0
    %1134 = vmatpush.msra.mxu0 0.0
    %1135 = vmatpush.msra.mxu0 0.0
    %1136 = vmatpush.msra.mxu0 0.0
    %1137 = vmatpush.msra.mxu0 0.0
    %1138 = vmatpush.msra.mxu0 0.0
    %1139 = vmatpush.msra.mxu0 %v198
    %1140 = vmatpush.msra.mxu0 %v197
    %1141 = vmatpush.msra.mxu0 %v196
    %1142 = vmatpush.msra.mxu0 %v195
    %1143 = vmatmul.f32.gmra.mxu0 %v1048
    %v1144 = vpop.f32.mrf.mxu0
    %v1145 = vadd.f32 %v1125, %v1144
    %1146 = vdwg.mxu0
    %v1147 = vadd.f32 %v1145, %v502
    %v1148 = vtanh.pop %v1147
    %v1150 = vsel %vm287, %v1148, 0
    %1152 = vmatpush.msra.mxu0 0.0
    %1153 = vmatpush.msra.mxu0 0.0
    %1154 = vmatpush.msra.mxu0 0.0
    %1155 = vmatpush.msra.mxu0 0.0
    %1156 = vmatpush.msra.mxu0 0.0
    %1157 = vmatpush.msra.mxu0 0.0
    %1158 = vmatpush.msra.mxu0 0.0
    %1159 = vmatpush.msra.mxu0 0.0
    %1160 = vmatpush.msra.mxu0 0.0
    %1161 = vmatpush.msra.mxu0 0.0
    %1162 = vmatpush.msra.mxu0 0.0
    %1163 = vmatpush.msra.mxu0 0.0
    %1164 = vmatpush.msra.mxu0 %v207
    %1165 = vmatpush.msra.mxu0 %v206
    %1166 = vmatpush.msra.mxu0 %v205
    %1167 = vmatpush.msra.mxu0 %v204
    %1168 = vmatmul.f32.gmra.mxu0 %v1150
    %v1169 = vpop.f32.mrf.mxu0
    %v1170 = vadd.f32 %v507, %v1169
    %1171 = vdwg.mxu0
    %v1172 = vsel %vm532, %v1170, -inf
    %1173 = vmax.xlane.f32.xlu0 %v1172
    %v1174 = vpop.xlane.xlu0 %1173
    %v1175 = vsub.f32 %v1170, %v1174
    %v1176 = vmul.f32 %v1175, 1.442695
    %v1177 = vpow.pop %v1176
    %v1178 = vsel %vm532, %v1177, 0.0
    %1179 = vadd.xlane.f32.xlu0 %v1178
    %v1180 = vpop.xlane.xlu0 %1179
    %v1181 = vlog2.pop %v1180
    %v1182 = vmul.f32 %v1181, 0.6931472
    %v1183 = vadd.f32 %v1182, %v1174
    %v1184 = vsub.f32 %v1170, %v1183
    %s1185 = scalar_lea.vmem [#allocation15], 4
    %1186 = vst [vmem:[%s1185] sm:$0x3] %v1184
    %s1187 = scalar_lea.vmem [#allocation3], 6
    %v1188 = vld [vmem:[%s1187] sm:$0x3]
    %1189 = vst.msk [vmem:[#allocation2] sm:$0x3] %vm210, %v1188
    %1190 = vrot.lane.b32.xlu0 %v1102, 16
    %v1191 = vpop.permute.xlu0 %1190
    %1193 = vst.msk [vmem:[#allocation2] sm:$0x3] %vm212, %v1191
    %1194 = vrot.lane.b32.xlu0 %v938, 80
    %v1195 = vpop.permute.xlu0 %1194
    %1197 = vst.msk [vmem:[#allocation2] sm:$0x3] %vm214, %v1195
    %v1198 = vld [vmem:[#allocation2] sm:$0x3]
    %v1200 = vsel %vm220, %v1198, 0
    %1202 = vmatpush.msra.mxu0 0.0
    %1203 = vmatpush.msra.mxu0 0.0
    %1204 = vmatpush.msra.mxu0 0.0
    %1205 = vmatpush.msra.mxu0 0.0
    %1206 = vmatpush.msra.mxu0 0.0
    %1207 = vmatpush.msra.mxu0 0.0
    %1208 = vmatpush.msra.mxu0 %v180
    %1209 = vmatpush.msra.mxu0 %v179
    %1210 = vmatpush.msra.mxu0 %v178
    %1211 = vmatpush.msra.mxu0 %v177
    %1212 = vmatpush.msra.mxu0 %v176
    %1213 = vmatpush.msra.mxu0 %v175
    %1214 = vmatpush.msra.mxu0 %v174
    %1215 = vmatpush.msra.mxu0 %v173
    %1216 = vmatpush.msra.mxu0 %v172
    %1217 = vmatpush.msra.mxu0 %v171
    %1218 = vmatmul.f32.gmra.mxu0 %v1200
    %v1219 = vpop.f32.mrf.mxu0
    %v1220 = vadd.f32 %v218, %v1219
    %1221 = vdwg.mxu0
    %v1222 = vxor.u32 %v1220, 2147483648
    %v1223 = vmul.f32 %v1222, 1.442695
    %v1224 = vpow.pop %v1223
    %v1225 = vadd.f32 %v1224, 1.0
    %v1226 = vrcp.pop %v1225
    %v1227 = vmul.f32 %v1225, %v1226
    %v1228 = vsub.f32 1.0, %v1227
    %v1229 = vmul.f32 %v1226, %v1228
    %v1230 = vadd.f32 %v1226, %v1229
    %vm1231 = vweird.f32 %v1225
    %vm1232 = vweird.f32 %v1226
    %vm1233 = vmor %vm1231, %vm1232
    %v1234 = vsel %vm1233, %v1226, %v1230
    %v1235 = vand.u32 2147483647, %v1225
    %vm1236 = vcmp.eq.f32.partialorder %v1235, 8.507059e+37
    %v1237 = vand.u32 %v1225, 2147483648
    %v1238 = vor.u32 1.1754944e-38, %v1237
    %v1239 = vsel %vm1236, %v1238, %v1234
    %v1240 = vmul.f32 1.0, %v1239
    %v1241 = vtanh.pop %v1220
    %v1242 = vmul.f32 %v1240, %v932
    %1244 = vrot.lane.b32.xlu0 %v1241, 64
    %v1245 = vpop.permute.xlu0 %1244
    %v1247 = vmul.f32 %v1240, %v1245
    %1249 = vrot.lane.b32.xlu0 %v1247, 32
    %v1250 = vpop.permute.xlu0 %1249
    %v1252 = vadd.f32 %v1242, %v1250
    %v1253 = vtanh.pop %v1252
    %1255 = vrot.lane.b32.xlu0 %v1253, 64
    %v1256 = vpop.permute.xlu0 %1255
    %v1258 = vmul.f32 %v1240, %v1256
    %1260 = vrot.lane.b32.xlu0 %v1258, 32
    %v1261 = vpop.permute.xlu0 %1260
    %v1262 = vsel %vm287, %v1261, 0
    %1264 = vmatpush.msra.mxu0 0.0
    %1265 = vmatpush.msra.mxu0 0.0
    %1266 = vmatpush.msra.mxu0 0.0
    %1267 = vmatpush.msra.mxu0 0.0
    %1268 = vmatpush.msra.mxu0 0.0
    %1269 = vmatpush.msra.mxu0 0.0
    %1270 = vmatpush.msra.mxu0 0.0
    %1271 = vmatpush.msra.mxu0 0.0
    %1272 = vmatpush.msra.mxu0 0.0
    %1273 = vmatpush.msra.mxu0 0.0
    %1274 = vmatpush.msra.mxu0 0.0
    %1275 = vmatpush.msra.mxu0 0.0
    %1276 = vmatpush.msra.mxu0 %v185
    %1277 = vmatpush.msra.mxu0 %v184
    %1278 = vmatpush.msra.mxu0 %v183
    %1279 = vmatpush.msra.mxu0 %v182
    %1280 = vmatmul.f32.gmra.mxu0 %v1262
    %v1281 = vpop.f32.mrf.mxu0
    %v1282 = vadd.f32 %v282, %v1281
    %1283 = vdwg.mxu0
    %1284 = vmatpush.msra.mxu0 0.0
    %1285 = vmatpush.msra.mxu0 0.0
    %1286 = vmatpush.msra.mxu0 0.0
    %1287 = vmatpush.msra.mxu0 0.0
    %1288 = vmatpush.msra.mxu0 0.0
    %1289 = vmatpush.msra.mxu0 0.0
    %1290 = vmatpush.msra.mxu0 0.0
    %1291 = vmatpush.msra.mxu0 0.0
    %1292 = vmatpush.msra.mxu0 0.0
    %1293 = vmatpush.msra.mxu0 0.0
    %1294 = vmatpush.msra.mxu0 0.0
    %1295 = vmatpush.msra.mxu0 0.0
    %1296 = vmatpush.msra.mxu0 %v193
    %1297 = vmatpush.msra.mxu0 %v192
    %1298 = vmatpush.msra.mxu0 %v191
    %1299 = vmatpush.msra.mxu0 %v190
    %1300 = vmatmul.f32.gmra.mxu0 %v1048
    %v1301 = vpop.f32.mrf.mxu0
    %v1302 = vadd.f32 0.0, %v1301
    %1303 = vdwg.mxu0
    %v1305 = vsel %vm333, %v1282, 0
    %1307 = vmatpush.msra.mxu0 0.0
    %1308 = vmatpush.msra.mxu0 0.0
    %1309 = vmatpush.msra.mxu0 0.0
    %1310 = vmatpush.msra.mxu0 0.0
    %1311 = vmatpush.msra.mxu0 0.0
    %1312 = vmatpush.msra.mxu0 0.0
    %1313 = vmatpush.msra.mxu0 0.0
    %1314 = vmatpush.msra.mxu0 0.0
    %1315 = vmatpush.msra.mxu0 0.0
    %1316 = vmatpush.msra.mxu0 0.0
    %1317 = vmatpush.msra.mxu0 0.0
    %1318 = vmatpush.msra.mxu0 0.0
    %1319 = vmatpush.msra.mxu0 0.0
    %1320 = vmatpush.msra.mxu0 %v189
    %1321 = vmatpush.msra.mxu0 %v188
    %1322 = vmatpush.msra.mxu0 %v187
    %1323 = vmatmul.f32.gmra.mxu0 %v1305
    %v1324 = vpop.f32.mrf.mxu0
    %v1325 = vadd.f32 %v1302, %v1324
    %1326 = vdwg.mxu0
    %v1327 = vadd.f32 %v1325, %v358
    %v1328 = vxor.u32 %v1327, 2147483648
    %v1329 = vmul.f32 %v1328, 1.442695
    %v1330 = vpow.pop %v1329
    %v1331 = vadd.f32 %v1330, 1.0
    %v1332 = vrcp.pop %v1331
    %v1333 = vmul.f32 %v1331, %v1332
    %v1334 = vsub.f32 1.0, %v1333
    %v1335 = vmul.f32 %v1332, %v1334
    %v1336 = vadd.f32 %v1332, %v1335
    %vm1337 = vweird.f32 %v1331
    %vm1338 = vweird.f32 %v1332
    %vm1339 = vmor %vm1337, %vm1338
    %v1340 = vsel %vm1339, %v1332, %v1336
    %v1341 = vand.u32 2147483647, %v1331
    %vm1342 = vcmp.eq.f32.partialorder %v1341, 8.507059e+37
    %v1343 = vand.u32 %v1331, 2147483648
    %v1344 = vor.u32 1.1754944e-38, %v1343
    %v1345 = vsel %vm1342, %v1344, %v1340
    %v1346 = vmul.f32 1.0, %v1345
    %v1347 = vtanh.pop %v1327
    %v1348 = vmul.f32 %v1346, %v1038
    %1350 = vrot.lane.b32.xlu0 %v1347, 64
    %v1351 = vpop.permute.xlu0 %1350
    %v1353 = vmul.f32 %v1346, %v1351
    %1355 = vrot.lane.b32.xlu0 %v1353, 32
    %v1356 = vpop.permute.xlu0 %1355
    %v1358 = vadd.f32 %v1348, %v1356
    %v1359 = vtanh.pop %v1358
    %1361 = vrot.lane.b32.xlu0 %v1359, 64
    %v1362 = vpop.permute.xlu0 %1361
    %v1364 = vmul.f32 %v1346, %v1362
    %1366 = vrot.lane.b32.xlu0 %v1364, 32
    %v1367 = vpop.permute.xlu0 %1366
    %v1368 = vsel %vm287, %v1367, 0
    %1370 = vmatpush.msra.mxu0 0.0
    %1371 = vmatpush.msra.mxu0 0.0
    %1372 = vmatpush.msra.mxu0 0.0
    %1373 = vmatpush.msra.mxu0 0.0
    %1374 = vmatpush.msra.mxu0 0.0
    %1375 = vmatpush.msra.mxu0 0.0
    %1376 = vmatpush.msra.mxu0 0.0
    %1377 = vmatpush.msra.mxu0 0.0
    %1378 = vmatpush.msra.mxu0 0.0
    %1379 = vmatpush.msra.mxu0 0.0
    %1380 = vmatpush.msra.mxu0 0.0
    %1381 = vmatpush.msra.mxu0 0.0
    %1382 = vmatpush.msra.mxu0 %v166
    %1383 = vmatpush.msra.mxu0 %v165
    %1384 = vmatpush.msra.mxu0 %v164
    %1385 = vmatpush.msra.mxu0 %v163
    %1386 = vmatmul.f32.gmra.mxu0 %v1368
    %v1387 = vpop.f32.mrf.mxu0
    %v1388 = vadd.f32 %v170, %v1387
    %1389 = vdwg.mxu0
    %v1390 = vsel %vm423, %v1388, -inf
    %1391 = vmax.xlane.f32.xlu0 %v1390
    %v1392 = vpop.xlane.xlu0 %1391
    %v1393 = vsub.f32 %v1388, %v1392
    %v1394 = vmul.f32 %v1393, 1.442695
    %v1395 = vpow.pop %v1394
    %v1396 = vsel %vm423, %v1395, 0.0
    %1397 = vadd.xlane.f32.xlu0 %v1396
    %v1398 = vpop.xlane.xlu0 %1397
    %v1399 = vrcp.pop %v1398
    %v1400 = vmul.f32 %v1395, %v1399
    %v1402 = vsel %vm333, %v1400, 0
    %1404 = vmatpush.msra.mxu0 0.0
    %1405 = vmatpush.msra.mxu0 0.0
    %1406 = vmatpush.msra.mxu0 0.0
    %1407 = vmatpush.msra.mxu0 0.0
    %1408 = vmatpush.msra.mxu0 0.0
    %1409 = vmatpush.msra.mxu0 0.0
    %1410 = vmatpush.msra.mxu0 0.0
    %1411 = vmatpush.msra.mxu0 0.0
    %1412 = vmatpush.msra.mxu0 0.0
    %1413 = vmatpush.msra.mxu0 0.0
    %1414 = vmatpush.msra.mxu0 0.0
    %1415 = vmatpush.msra.mxu0 0.0
    %1416 = vmatpush.msra.mxu0 0.0
    %1417 = vmatpush.msra.mxu0 %v169
    %1418 = vmatpush.msra.mxu0 %v168
    %1419 = vmatpush.msra.mxu0 %v167
    %1420 = vmatmul.f32.gmra.mxu0 %v1402
    %v1421 = vpop.f32.mrf.mxu0
    %v1422 = vadd.f32 0.0, %v1421
    %1423 = vdwg.mxu0
    %v1425 = vsel %vm287, %v1422, 0
    %1427 = vmatpush.msra.mxu0 0.0
    %1428 = vmatpush.msra.mxu0 0.0
    %1429 = vmatpush.msra.mxu0 0.0
    %1430 = vmatpush.msra.mxu0 0.0
    %1431 = vmatpush.msra.mxu0 0.0
    %1432 = vmatpush.msra.mxu0 0.0
    %1433 = vmatpush.msra.mxu0 0.0
    %1434 = vmatpush.msra.mxu0 0.0
    %1435 = vmatpush.msra.mxu0 0.0
    %1436 = vmatpush.msra.mxu0 0.0
    %1437 = vmatpush.msra.mxu0 0.0
    %1438 = vmatpush.msra.mxu0 0.0
    %1439 = vmatpush.msra.mxu0 %v202
    %1440 = vmatpush.msra.mxu0 %v201
    %1441 = vmatpush.msra.mxu0 %v200
    %1442 = vmatpush.msra.mxu0 %v199
    %1443 = vmatmul.f32.gmra.mxu0 %v1425
    %v1444 = vpop.f32.mrf.mxu0
    %v1445 = vadd.f32 0.0, %v1444
    %1446 = vdwg.mxu0
    %1447 = vmatpush.msra.mxu0 0.0
    %1448 = vmatpush.msra.mxu0 0.0
    %1449 = vmatpush.msra.mxu0 0.0
    %1450 = vmatpush.msra.mxu0 0.0
    %1451 = vmatpush.msra.mxu0 0.0
    %1452 = vmatpush.msra.mxu0 0.0
    %1453 = vmatpush.msra.mxu0 0.0
    %1454 = vmatpush.msra.mxu0 0.0
    %1455 = vmatpush.msra.mxu0 0.0
    %1456 = vmatpush.msra.mxu0 0.0
    %1457 = vmatpush.msra.mxu0 0.0
    %1458 = vmatpush.msra.mxu0 0.0
    %1459 = vmatpush.msra.mxu0 %v198
    %1460 = vmatpush.msra.mxu0 %v197
    %1461 = vmatpush.msra.mxu0 %v196
    %1462 = vmatpush.msra.mxu0 %v195
    %1463 = vmatmul.f32.gmra.mxu0 %v1368
    %v1464 = vpop.f32.mrf.mxu0
    %v1465 = vadd.f32 %v1445, %v1464
    %1466 = vdwg.mxu0
    %v1467 = vadd.f32 %v1465, %v502
    %v1468 = vtanh.pop %v1467
    %v1470 = vsel %vm287, %v1468, 0
    %1472 = vmatpush.msra.mxu0 0.0
    %1473 = vmatpush.msra.mxu0 0.0
    %1474 = vmatpush.msra.mxu0 0.0
    %1475 = vmatpush.msra.mxu0 0.0
    %1476 = vmatpush.msra.mxu0 0.0
    %1477 = vmatpush.msra.mxu0 0.0
    %1478 = vmatpush.msra.mxu0 0.0
    %1479 = vmatpush.msra.mxu0 0.0
    %1480 = vmatpush.msra.mxu0 0.0
    %1481 = vmatpush.msra.mxu0 0.0
    %1482 = vmatpush.msra.mxu0 0.0
    %1483 = vmatpush.msra.mxu0 0.0
    %1484 = vmatpush.msra.mxu0 %v207
    %1485 = vmatpush.msra.mxu0 %v206
    %1486 = vmatpush.msra.mxu0 %v205
    %1487 = vmatpush.msra.mxu0 %v204
    %1488 = vmatmul.f32.gmra.mxu0 %v1470
    %v1489 = vpop.f32.mrf.mxu0
    %v1490 = vadd.f32 %v507, %v1489
    %1491 = vdwg.mxu0
    %v1492 = vsel %vm532, %v1490, -inf
    %1493 = vmax.xlane.f32.xlu0 %v1492
    %v1494 = vpop.xlane.xlu0 %1493
    %v1495 = vsub.f32 %v1490, %v1494
    %v1496 = vmul.f32 %v1495, 1.442695
    %v1497 = vpow.pop %v1496
    %v1498 = vsel %vm532, %v1497, 0.0
    %1499 = vadd.xlane.f32.xlu0 %v1498
    %v1500 = vpop.xlane.xlu0 %1499
    %v1501 = vlog2.pop %v1500
    %v1502 = vmul.f32 %v1501, 0.6931472
    %v1503 = vadd.f32 %v1502, %v1494
    %v1504 = vsub.f32 %v1490, %v1503
    %s1505 = scalar_lea.vmem [#allocation15], 6
    %1506 = vst [vmem:[%s1505] sm:$0x3] %v1504
    %s1507 = scalar_lea.vmem [#allocation3], 8
    %v1508 = vld [vmem:[%s1507] sm:$0x3]
    %1509 = vst.msk [vmem:[#allocation2] sm:$0x3] %vm210, %v1508
    %1510 = vrot.lane.b32.xlu0 %v1422, 16
    %v1511 = vpop.permute.xlu0 %1510
    %1513 = vst.msk [vmem:[#allocation2] sm:$0x3] %vm212, %v1511
    %1514 = vrot.lane.b32.xlu0 %v1258, 80
    %v1515 = vpop.permute.xlu0 %1514
    %1517 = vst.msk [vmem:[#allocation2] sm:$0x3] %vm214, %v1515
    %v1518 = vld [vmem:[#allocation2] sm:$0x3]
    %v1520 = vsel %vm220, %v1518, 0
    %1522 = vmatpush.msra.mxu0 0.0
    %1523 = vmatpush.msra.mxu0 0.0
    %1524 = vmatpush.msra.mxu0 0.0
    %1525 = vmatpush.msra.mxu0 0.0
    %1526 = vmatpush.msra.mxu0 0.0
    %1527 = vmatpush.msra.mxu0 0.0
    %1528 = vmatpush.msra.mxu0 %v180
    %1529 = vmatpush.msra.mxu0 %v179
    %1530 = vmatpush.msra.mxu0 %v178
    %1531 = vmatpush.msra.mxu0 %v177
    %1532 = vmatpush.msra.mxu0 %v176
    %1533 = vmatpush.msra.mxu0 %v175
    %1534 = vmatpush.msra.mxu0 %v174
    %1535 = vmatpush.msra.mxu0 %v173
    %1536 = vmatpush.msra.mxu0 %v172
    %1537 = vmatpush.msra.mxu0 %v171
    %1538 = vmatmul.f32.gmra.mxu0 %v1520
    %v1539 = vpop.f32.mrf.mxu0
    %v1540 = vadd.f32 %v218, %v1539
    %1541 = vdwg.mxu0
    %v1542 = vxor.u32 %v1540, 2147483648
    %v1543 = vmul.f32 %v1542, 1.442695
    %v1544 = vpow.pop %v1543
    %v1545 = vadd.f32 %v1544, 1.0
    %v1546 = vrcp.pop %v1545
    %v1547 = vmul.f32 %v1545, %v1546
    %v1548 = vsub.f32 1.0, %v1547
    %v1549 = vmul.f32 %v1546, %v1548
    %v1550 = vadd.f32 %v1546, %v1549
    %vm1551 = vweird.f32 %v1545
    %vm1552 = vweird.f32 %v1546
    %vm1553 = vmor %vm1551, %vm1552
    %v1554 = vsel %vm1553, %v1546, %v1550
    %v1555 = vand.u32 2147483647, %v1545
    %vm1556 = vcmp.eq.f32.partialorder %v1555, 8.507059e+37
    %v1557 = vand.u32 %v1545, 2147483648
    %v1558 = vor.u32 1.1754944e-38, %v1557
    %v1559 = vsel %vm1556, %v1558, %v1554
    %v1560 = vmul.f32 1.0, %v1559
    %v1561 = vtanh.pop %v1540
    %v1562 = vmul.f32 %v1560, %v1252
    %1564 = vrot.lane.b32.xlu0 %v1561, 64
    %v1565 = vpop.permute.xlu0 %1564
    %v1567 = vmul.f32 %v1560, %v1565
    %1569 = vrot.lane.b32.xlu0 %v1567, 32
    %v1570 = vpop.permute.xlu0 %1569
    %v1572 = vadd.f32 %v1562, %v1570
    %v1573 = vtanh.pop %v1572
    %1575 = vrot.lane.b32.xlu0 %v1573, 64
    %v1576 = vpop.permute.xlu0 %1575
    %v1578 = vmul.f32 %v1560, %v1576
    %1580 = vrot.lane.b32.xlu0 %v1578, 32
    %v1581 = vpop.permute.xlu0 %1580
    %v1582 = vsel %vm287, %v1581, 0
    %1584 = vmatpush.msra.mxu0 0.0
    %1585 = vmatpush.msra.mxu0 0.0
    %1586 = vmatpush.msra.mxu0 0.0
    %1587 = vmatpush.msra.mxu0 0.0
    %1588 = vmatpush.msra.mxu0 0.0
    %1589 = vmatpush.msra.mxu0 0.0
    %1590 = vmatpush.msra.mxu0 0.0
    %1591 = vmatpush.msra.mxu0 0.0
    %1592 = vmatpush.msra.mxu0 0.0
    %1593 = vmatpush.msra.mxu0 0.0
    %1594 = vmatpush.msra.mxu0 0.0
    %1595 = vmatpush.msra.mxu0 0.0
    %1596 = vmatpush.msra.mxu0 %v185
    %1597 = vmatpush.msra.mxu0 %v184
    %1598 = vmatpush.msra.mxu0 %v183
    %1599 = vmatpush.msra.mxu0 %v182
    %1600 = vmatmul.f32.gmra.mxu0 %v1582
    %v1601 = vpop.f32.mrf.mxu0
    %v1602 = vadd.f32 %v282, %v1601
    %1603 = vdwg.mxu0
    %1604 = vmatpush.msra.mxu0 0.0
    %1605 = vmatpush.msra.mxu0 0.0
    %1606 = vmatpush.msra.mxu0 0.0
    %1607 = vmatpush.msra.mxu0 0.0
    %1608 = vmatpush.msra.mxu0 0.0
    %1609 = vmatpush.msra.mxu0 0.0
    %1610 = vmatpush.msra.mxu0 0.0
    %1611 = vmatpush.msra.mxu0 0.0
    %1612 = vmatpush.msra.mxu0 0.0
    %1613 = vmatpush.msra.mxu0 0.0
    %1614 = vmatpush.msra.mxu0 0.0
    %1615 = vmatpush.msra.mxu0 0.0
    %1616 = vmatpush.msra.mxu0 %v193
    %1617 = vmatpush.msra.mxu0 %v192
    %1618 = vmatpush.msra.mxu0 %v191
    %1619 = vmatpush.msra.mxu0 %v190
    %1620 = vmatmul.f32.gmra.mxu0 %v1368
    %v1621 = vpop.f32.mrf.mxu0
    %v1622 = vadd.f32 0.0, %v1621
    %1623 = vdwg.mxu0
    %v1625 = vsel %vm333, %v1602, 0
    %1627 = vmatpush.msra.mxu0 0.0
    %1628 = vmatpush.msra.mxu0 0.0
    %1629 = vmatpush.msra.mxu0 0.0
    %1630 = vmatpush.msra.mxu0 0.0
    %1631 = vmatpush.msra.mxu0 0.0
    %1632 = vmatpush.msra.mxu0 0.0
    %1633 = vmatpush.msra.mxu0 0.0
    %1634 = vmatpush.msra.mxu0 0.0
    %1635 = vmatpush.msra.mxu0 0.0
    %1636 = vmatpush.msra.mxu0 0.0
    %1637 = vmatpush.msra.mxu0 0.0
    %1638 = vmatpush.msra.mxu0 0.0
    %1639 = vmatpush.msra.mxu0 0.0
    %1640 = vmatpush.msra.mxu0 %v189
    %1641 = vmatpush.msra.mxu0 %v188
    %1642 = vmatpush.msra.mxu0 %v187
    %1643 = vmatmul.f32.gmra.mxu0 %v1625
    %v1644 = vpop.f32.mrf.mxu0
    %v1645 = vadd.f32 %v1622, %v1644
    %1646 = vdwg.mxu0
    %v1647 = vadd.f32 %v1645, %v358
    %v1648 = vxor.u32 %v1647, 2147483648
    %v1649 = vmul.f32 %v1648, 1.442695
    %v1650 = vpow.pop %v1649
    %v1651 = vadd.f32 %v1650, 1.0
    %v1652 = vrcp.pop %v1651
    %v1653 = vmul.f32 %v1651, %v1652
    %v1654 = vsub.f32 1.0, %v1653
    %v1655 = vmul.f32 %v1652, %v1654
    %v1656 = vadd.f32 %v1652, %v1655
    %vm1657 = vweird.f32 %v1651
    %vm1658 = vweird.f32 %v1652
    %vm1659 = vmor %vm1657, %vm1658
    %v1660 = vsel %vm1659, %v1652, %v1656
    %v1661 = vand.u32 2147483647, %v1651
    %vm1662 = vcmp.eq.f32.partialorder %v1661, 8.507059e+37
    %v1663 = vand.u32 %v1651, 2147483648
    %v1664 = vor.u32 1.1754944e-38, %v1663
    %v1665 = vsel %vm1662, %v1664, %v1660
    %v1666 = vmul.f32 1.0, %v1665
    %v1667 = vtanh.pop %v1647
    %v1668 = vmul.f32 %v1666, %v1358
    %1670 = vrot.lane.b32.xlu0 %v1667, 64
    %v1671 = vpop.permute.xlu0 %1670
    %v1673 = vmul.f32 %v1666, %v1671
    %1675 = vrot.lane.b32.xlu0 %v1673, 32
    %v1676 = vpop.permute.xlu0 %1675
    %v1678 = vadd.f32 %v1668, %v1676
    %v1679 = vtanh.pop %v1678
    %1681 = vrot.lane.b32.xlu0 %v1679, 64
    %v1682 = vpop.permute.xlu0 %1681
    %v1684 = vmul.f32 %v1666, %v1682
    %1686 = vrot.lane.b32.xlu0 %v1684, 32
    %v1687 = vpop.permute.xlu0 %1686
    %v1688 = vsel %vm287, %v1687, 0
    %1690 = vmatpush.msra.mxu0 0.0
    %1691 = vmatpush.msra.mxu0 0.0
    %1692 = vmatpush.msra.mxu0 0.0
    %1693 = vmatpush.msra.mxu0 0.0
    %1694 = vmatpush.msra.mxu0 0.0
    %1695 = vmatpush.msra.mxu0 0.0
    %1696 = vmatpush.msra.mxu0 0.0
    %1697 = vmatpush.msra.mxu0 0.0
    %1698 = vmatpush.msra.mxu0 0.0
    %1699 = vmatpush.msra.mxu0 0.0
    %1700 = vmatpush.msra.mxu0 0.0
    %1701 = vmatpush.msra.mxu0 0.0
    %1702 = vmatpush.msra.mxu0 %v166
    %1703 = vmatpush.msra.mxu0 %v165
    %1704 = vmatpush.msra.mxu0 %v164
    %1705 = vmatpush.msra.mxu0 %v163
    %1706 = vmatmul.f32.gmra.mxu0 %v1688
    %v1707 = vpop.f32.mrf.mxu0
    %v1708 = vadd.f32 %v170, %v1707
    %1709 = vdwg.mxu0
    %v1710 = vsel %vm423, %v1708, -inf
    %1711 = vmax.xlane.f32.xlu0 %v1710
    %v1712 = vpop.xlane.xlu0 %1711
    %v1713 = vsub.f32 %v1708, %v1712
    %v1714 = vmul.f32 %v1713, 1.442695
    %v1715 = vpow.pop %v1714
    %v1716 = vsel %vm423, %v1715, 0.0
    %1717 = vadd.xlane.f32.xlu0 %v1716
    %v1718 = vpop.xlane.xlu0 %1717
    %v1719 = vrcp.pop %v1718
    %v1720 = vmul.f32 %v1715, %v1719
    %v1722 = vsel %vm333, %v1720, 0
    %1724 = vmatpush.msra.mxu0 0.0
    %1725 = vmatpush.msra.mxu0 0.0
    %1726 = vmatpush.msra.mxu0 0.0
    %1727 = vmatpush.msra.mxu0 0.0
    %1728 = vmatpush.msra.mxu0 0.0
    %1729 = vmatpush.msra.mxu0 0.0
    %1730 = vmatpush.msra.mxu0 0.0
    %1731 = vmatpush.msra.mxu0 0.0
    %1732 = vmatpush.msra.mxu0 0.0
    %1733 = vmatpush.msra.mxu0 0.0
    %1734 = vmatpush.msra.mxu0 0.0
    %1735 = vmatpush.msra.mxu0 0.0
    %1736 = vmatpush.msra.mxu0 0.0
    %1737 = vmatpush.msra.mxu0 %v169
    %1738 = vmatpush.msra.mxu0 %v168
    %1739 = vmatpush.msra.mxu0 %v167
    %1740 = vmatmul.f32.gmra.mxu0 %v1722
    %v1741 = vpop.f32.mrf.mxu0
    %v1742 = vadd.f32 0.0, %v1741
    %1743 = vdwg.mxu0
    %v1745 = vsel %vm287, %v1742, 0
    %1747 = vmatpush.msra.mxu0 0.0
    %1748 = vmatpush.msra.mxu0 0.0
    %1749 = vmatpush.msra.mxu0 0.0
    %1750 = vmatpush.msra.mxu0 0.0
    %1751 = vmatpush.msra.mxu0 0.0
    %1752 = vmatpush.msra.mxu0 0.0
    %1753 = vmatpush.msra.mxu0 0.0
    %1754 = vmatpush.msra.mxu0 0.0
    %1755 = vmatpush.msra.mxu0 0.0
    %1756 = vmatpush.msra.mxu0 0.0
    %1757 = vmatpush.msra.mxu0 0.0
    %1758 = vmatpush.msra.mxu0 0.0
    %1759 = vmatpush.msra.mxu0 %v202
    %1760 = vmatpush.msra.mxu0 %v201
    %1761 = vmatpush.msra.mxu0 %v200
    %1762 = vmatpush.msra.mxu0 %v199
    %1763 = vmatmul.f32.gmra.mxu0 %v1745
    %v1764 = vpop.f32.mrf.mxu0
    %v1765 = vadd.f32 0.0, %v1764
    %1766 = vdwg.mxu0
    %1767 = vmatpush.msra.mxu0 0.0
    %1768 = vmatpush.msra.mxu0 0.0
    %1769 = vmatpush.msra.mxu0 0.0
    %1770 = vmatpush.msra.mxu0 0.0
    %1771 = vmatpush.msra.mxu0 0.0
    %1772 = vmatpush.msra.mxu0 0.0
    %1773 = vmatpush.msra.mxu0 0.0
    %1774 = vmatpush.msra.mxu0 0.0
    %1775 = vmatpush.msra.mxu0 0.0
    %1776 = vmatpush.msra.mxu0 0.0
    %1777 = vmatpush.msra.mxu0 0.0
    %1778 = vmatpush.msra.mxu0 0.0
    %1779 = vmatpush.msra.mxu0 %v198
    %1780 = vmatpush.msra.mxu0 %v197
    %1781 = vmatpush.msra.mxu0 %v196
    %1782 = vmatpush.msra.mxu0 %v195
    %1783 = vmatmul.f32.gmra.mxu0 %v1688
    %v1784 = vpop.f32.mrf.mxu0
    %v1785 = vadd.f32 %v1765, %v1784
    %1786 = vdwg.mxu0
    %v1787 = vadd.f32 %v1785, %v502
    %v1788 = vtanh.pop %v1787
    %v1790 = vsel %vm287, %v1788, 0
    %1792 = vmatpush.msra.mxu0 0.0
    %1793 = vmatpush.msra.mxu0 0.0
    %1794 = vmatpush.msra.mxu0 0.0
    %1795 = vmatpush.msra.mxu0 0.0
    %1796 = vmatpush.msra.mxu0 0.0
    %1797 = vmatpush.msra.mxu0 0.0
    %1798 = vmatpush.msra.mxu0 0.0
    %1799 = vmatpush.msra.mxu0 0.0
    %1800 = vmatpush.msra.mxu0 0.0
    %1801 = vmatpush.msra.mxu0 0.0
    %1802 = vmatpush.msra.mxu0 0.0
    %1803 = vmatpush.msra.mxu0 0.0
    %1804 = vmatpush.msra.mxu0 %v207
    %1805 = vmatpush.msra.mxu0 %v206
    %1806 = vmatpush.msra.mxu0 %v205
    %1807 = vmatpush.msra.mxu0 %v204
    %1808 = vmatmul.f32.gmra.mxu0 %v1790
    %v1809 = vpop.f32.mrf.mxu0
    %v1810 = vadd.f32 %v507, %v1809
    %1811 = vdwg.mxu0
    %v1812 = vsel %vm532, %v1810, -inf
    %1813 = vmax.xlane.f32.xlu0 %v1812
    %v1814 = vpop.xlane.xlu0 %1813
    %v1815 = vsub.f32 %v1810, %v1814
    %v1816 = vmul.f32 %v1815, 1.442695
    %v1817 = vpow.pop %v1816
    %v1818 = vsel %vm532, %v1817, 0.0
    %1819 = vadd.xlane.f32.xlu0 %v1818
    %v1820 = vpop.xlane.xlu0 %1819
    %v1821 = vlog2.pop %v1820
    %v1822 = vmul.f32 %v1821, 0.6931472
    %v1823 = vadd.f32 %v1822, %v1814
    %v1824 = vsub.f32 %v1810, %v1823
    %s1825 = scalar_lea.vmem [#allocation15], 8
    %1826 = vst [vmem:[%s1825] sm:$0x3] %v1824
    %s1827 = scalar_lea.vmem [#allocation3], 10
    %v1828 = vld [vmem:[%s1827] sm:$0x3]
    %1829 = vst.msk [vmem:[#allocation2] sm:$0x3] %vm210, %v1828
    %1830 = vrot.lane.b32.xlu0 %v1742, 16
    %v1831 = vpop.permute.xlu0 %1830
    %1833 = vst.msk [vmem:[#allocation2] sm:$0x3] %vm212, %v1831
    %1834 = vrot.lane.b32.xlu0 %v1578, 80
    %v1835 = vpop.permute.xlu0 %1834
    %1837 = vst.msk [vmem:[#allocation2] sm:$0x3] %vm214, %v1835
    %v1838 = vld [vmem:[#allocation2] sm:$0x3]
    %v1840 = vsel %vm220, %v1838, 0
    %1842 = vmatpush.msra.mxu0 0.0
    %1843 = vmatpush.msra.mxu0 0.0
    %1844 = vmatpush.msra.mxu0 0.0
    %1845 = vmatpush.msra.mxu0 0.0
    %1846 = vmatpush.msra.mxu0 0.0
    %1847 = vmatpush.msra.mxu0 0.0
    %1848 = vmatpush.msra.mxu0 %v180
    %1849 = vmatpush.msra.mxu0 %v179
    %1850 = vmatpush.msra.mxu0 %v178
    %1851 = vmatpush.msra.mxu0 %v177
    %1852 = vmatpush.msra.mxu0 %v176
    %1853 = vmatpush.msra.mxu0 %v175
    %1854 = vmatpush.msra.mxu0 %v174
    %1855 = vmatpush.msra.mxu0 %v173
    %1856 = vmatpush.msra.mxu0 %v172
    %1857 = vmatpush.msra.mxu0 %v171
    %1858 = vmatmul.f32.gmra.mxu0 %v1840
    %v1859 = vpop.f32.mrf.mxu0
    %v1860 = vadd.f32 %v218, %v1859
    %1861 = vdwg.mxu0
    %v1862 = vxor.u32 %v1860, 2147483648
    %v1863 = vmul.f32 %v1862, 1.442695
    %v1864 = vpow.pop %v1863
    %v1865 = vadd.f32 %v1864, 1.0
    %v1866 = vrcp.pop %v1865
    %v1867 = vmul.f32 %v1865, %v1866
    %v1868 = vsub.f32 1.0, %v1867
    %v1869 = vmul.f32 %v1866, %v1868
    %v1870 = vadd.f32 %v1866, %v1869
    %vm1871 = vweird.f32 %v1865
    %vm1872 = vweird.f32 %v1866
    %vm1873 = vmor %vm1871, %vm1872
    %v1874 = vsel %vm1873, %v1866, %v1870
    %v1875 = vand.u32 2147483647, %v1865
    %vm1876 = vcmp.eq.f32.partialorder %v1875, 8.507059e+37
    %v1877 = vand.u32 %v1865, 2147483648
    %v1878 = vor.u32 1.1754944e-38, %v1877
    %v1879 = vsel %vm1876, %v1878, %v1874
    %v1880 = vmul.f32 1.0, %v1879
    %v1881 = vtanh.pop %v1860
    %v1882 = vmul.f32 %v1880, %v1572
    %1884 = vrot.lane.b32.xlu0 %v1881, 64
    %v1885 = vpop.permute.xlu0 %1884
    %v1887 = vmul.f32 %v1880, %v1885
    %1889 = vrot.lane.b32.xlu0 %v1887, 32
    %v1890 = vpop.permute.xlu0 %1889
    %v1892 = vadd.f32 %v1882, %v1890
    %v1893 = vtanh.pop %v1892
    %1895 = vrot.lane.b32.xlu0 %v1893, 64
    %v1896 = vpop.permute.xlu0 %1895
    %v1898 = vmul.f32 %v1880, %v1896
    %1900 = vrot.lane.b32.xlu0 %v1898, 32
    %v1901 = vpop.permute.xlu0 %1900
    %v1902 = vsel %vm287, %v1901, 0
    %1904 = vmatpush.msra.mxu0 0.0
    %1905 = vmatpush.msra.mxu0 0.0
    %1906 = vmatpush.msra.mxu0 0.0
    %1907 = vmatpush.msra.mxu0 0.0
    %1908 = vmatpush.msra.mxu0 0.0
    %1909 = vmatpush.msra.mxu0 0.0
    %1910 = vmatpush.msra.mxu0 0.0
    %1911 = vmatpush.msra.mxu0 0.0
    %1912 = vmatpush.msra.mxu0 0.0
    %1913 = vmatpush.msra.mxu0 0.0
    %1914 = vmatpush.msra.mxu0 0.0
    %1915 = vmatpush.msra.mxu0 0.0
    %1916 = vmatpush.msra.mxu0 %v185
    %1917 = vmatpush.msra.mxu0 %v184
    %1918 = vmatpush.msra.mxu0 %v183
    %1919 = vmatpush.msra.mxu0 %v182
    %1920 = vmatmul.f32.gmra.mxu0 %v1902
    %v1921 = vpop.f32.mrf.mxu0
    %v1922 = vadd.f32 %v282, %v1921
    %1923 = vdwg.mxu0
    %1924 = vmatpush.msra.mxu0 0.0
    %1925 = vmatpush.msra.mxu0 0.0
    %1926 = vmatpush.msra.mxu0 0.0
    %1927 = vmatpush.msra.mxu0 0.0
    %1928 = vmatpush.msra.mxu0 0.0
    %1929 = vmatpush.msra.mxu0 0.0
    %1930 = vmatpush.msra.mxu0 0.0
    %1931 = vmatpush.msra.mxu0 0.0
    %1932 = vmatpush.msra.mxu0 0.0
    %1933 = vmatpush.msra.mxu0 0.0
    %1934 = vmatpush.msra.mxu0 0.0
    %1935 = vmatpush.msra.mxu0 0.0
    %1936 = vmatpush.msra.mxu0 %v193
    %1937 = vmatpush.msra.mxu0 %v192
    %1938 = vmatpush.msra.mxu0 %v191
    %1939 = vmatpush.msra.mxu0 %v190
    %1940 = vmatmul.f32.gmra.mxu0 %v1688
    %v1941 = vpop.f32.mrf.mxu0
    %v1942 = vadd.f32 0.0, %v1941
    %1943 = vdwg.mxu0
    %v1945 = vsel %vm333, %v1922, 0
    %1947 = vmatpush.msra.mxu0 0.0
    %1948 = vmatpush.msra.mxu0 0.0
    %1949 = vmatpush.msra.mxu0 0.0
    %1950 = vmatpush.msra.mxu0 0.0
    %1951 = vmatpush.msra.mxu0 0.0
    %1952 = vmatpush.msra.mxu0 0.0
    %1953 = vmatpush.msra.mxu0 0.0
    %1954 = vmatpush.msra.mxu0 0.0
    %1955 = vmatpush.msra.mxu0 0.0
    %1956 = vmatpush.msra.mxu0 0.0
    %1957 = vmatpush.msra.mxu0 0.0
    %1958 = vmatpush.msra.mxu0 0.0
    %1959 = vmatpush.msra.mxu0 0.0
    %1960 = vmatpush.msra.mxu0 %v189
    %1961 = vmatpush.msra.mxu0 %v188
    %1962 = vmatpush.msra.mxu0 %v187
    %1963 = vmatmul.f32.gmra.mxu0 %v1945
    %v1964 = vpop.f32.mrf.mxu0
    %v1965 = vadd.f32 %v1942, %v1964
    %1966 = vdwg.mxu0
    %v1967 = vadd.f32 %v1965, %v358
    %v1968 = vxor.u32 %v1967, 2147483648
    %v1969 = vmul.f32 %v1968, 1.442695
    %v1970 = vpow.pop %v1969
    %v1971 = vadd.f32 %v1970, 1.0
    %v1972 = vrcp.pop %v1971
    %v1973 = vmul.f32 %v1971, %v1972
    %v1974 = vsub.f32 1.0, %v1973
    %v1975 = vmul.f32 %v1972, %v1974
    %v1976 = vadd.f32 %v1972, %v1975
    %vm1977 = vweird.f32 %v1971
    %vm1978 = vweird.f32 %v1972
    %vm1979 = vmor %vm1977, %vm1978
    %v1980 = vsel %vm1979, %v1972, %v1976
    %v1981 = vand.u32 2147483647, %v1971
    %vm1982 = vcmp.eq.f32.partialorder %v1981, 8.507059e+37
    %v1983 = vand.u32 %v1971, 2147483648
    %v1984 = vor.u32 1.1754944e-38, %v1983
    %v1985 = vsel %vm1982, %v1984, %v1980
    %v1986 = vmul.f32 1.0, %v1985
    %v1987 = vtanh.pop %v1967
    %v1988 = vmul.f32 %v1986, %v1678
    %1990 = vrot.lane.b32.xlu0 %v1987, 64
    %v1991 = vpop.permute.xlu0 %1990
    %v1993 = vmul.f32 %v1986, %v1991
    %1995 = vrot.lane.b32.xlu0 %v1993, 32
    %v1996 = vpop.permute.xlu0 %1995
    %v1998 = vadd.f32 %v1988, %v1996
    %v1999 = vtanh.pop %v1998
    %2001 = vrot.lane.b32.xlu0 %v1999, 64
    %v2002 = vpop.permute.xlu0 %2001
    %v2004 = vmul.f32 %v1986, %v2002
    %2006 = vrot.lane.b32.xlu0 %v2004, 32
    %v2007 = vpop.permute.xlu0 %2006
    %v2008 = vsel %vm287, %v2007, 0
    %2010 = vmatpush.msra.mxu0 0.0
    %2011 = vmatpush.msra.mxu0 0.0
    %2012 = vmatpush.msra.mxu0 0.0
    %2013 = vmatpush.msra.mxu0 0.0
    %2014 = vmatpush.msra.mxu0 0.0
    %2015 = vmatpush.msra.mxu0 0.0
    %2016 = vmatpush.msra.mxu0 0.0
    %2017 = vmatpush.msra.mxu0 0.0
    %2018 = vmatpush.msra.mxu0 0.0
    %2019 = vmatpush.msra.mxu0 0.0
    %2020 = vmatpush.msra.mxu0 0.0
    %2021 = vmatpush.msra.mxu0 0.0
    %2022 = vmatpush.msra.mxu0 %v166
    %2023 = vmatpush.msra.mxu0 %v165
    %2024 = vmatpush.msra.mxu0 %v164
    %2025 = vmatpush.msra.mxu0 %v163
    %2026 = vmatmul.f32.gmra.mxu0 %v2008
    %v2027 = vpop.f32.mrf.mxu0
    %v2028 = vadd.f32 %v170, %v2027
    %2029 = vdwg.mxu0
    %v2030 = vsel %vm423, %v2028, -inf
    %2031 = vmax.xlane.f32.xlu0 %v2030
    %v2032 = vpop.xlane.xlu0 %2031
    %v2033 = vsub.f32 %v2028, %v2032
    %v2034 = vmul.f32 %v2033, 1.442695
    %v2035 = vpow.pop %v2034
    %v2036 = vsel %vm423, %v2035, 0.0
    %2037 = vadd.xlane.f32.xlu0 %v2036
    %v2038 = vpop.xlane.xlu0 %2037
    %v2039 = vrcp.pop %v2038
    %v2040 = vmul.f32 %v2035, %v2039
    %v2042 = vsel %vm333, %v2040, 0
    %2044 = vmatpush.msra.mxu0 0.0
    %2045 = vmatpush.msra.mxu0 0.0
    %2046 = vmatpush.msra.mxu0 0.0
    %2047 = vmatpush.msra.mxu0 0.0
    %2048 = vmatpush.msra.mxu0 0.0
    %2049 = vmatpush.msra.mxu0 0.0
    %2050 = vmatpush.msra.mxu0 0.0
    %2051 = vmatpush.msra.mxu0 0.0
    %2052 = vmatpush.msra.mxu0 0.0
    %2053 = vmatpush.msra.mxu0 0.0
    %2054 = vmatpush.msra.mxu0 0.0
    %2055 = vmatpush.msra.mxu0 0.0
    %2056 = vmatpush.msra.mxu0 0.0
    %2057 = vmatpush.msra.mxu0 %v169
    %2058 = vmatpush.msra.mxu0 %v168
    %2059 = vmatpush.msra.mxu0 %v167
    %2060 = vmatmul.f32.gmra.mxu0 %v2042
    %v2061 = vpop.f32.mrf.mxu0
    %v2062 = vadd.f32 0.0, %v2061
    %2063 = vdwg.mxu0
    %v2065 = vsel %vm287, %v2062, 0
    %2067 = vmatpush.msra.mxu0 0.0
    %2068 = vmatpush.msra.mxu0 0.0
    %2069 = vmatpush.msra.mxu0 0.0
    %2070 = vmatpush.msra.mxu0 0.0
    %2071 = vmatpush.msra.mxu0 0.0
    %2072 = vmatpush.msra.mxu0 0.0
    %2073 = vmatpush.msra.mxu0 0.0
    %2074 = vmatpush.msra.mxu0 0.0
    %2075 = vmatpush.msra.mxu0 0.0
    %2076 = vmatpush.msra.mxu0 0.0
    %2077 = vmatpush.msra.mxu0 0.0
    %2078 = vmatpush.msra.mxu0 0.0
    %2079 = vmatpush.msra.mxu0 %v202
    %2080 = vmatpush.msra.mxu0 %v201
    %2081 = vmatpush.msra.mxu0 %v200
    %2082 = vmatpush.msra.mxu0 %v199
    %2083 = vmatmul.f32.gmra.mxu0 %v2065
    %v2084 = vpop.f32.mrf.mxu0
    %v2085 = vadd.f32 0.0, %v2084
    %2086 = vdwg.mxu0
    %2087 = vmatpush.msra.mxu0 0.0
    %2088 = vmatpush.msra.mxu0 0.0
    %2089 = vmatpush.msra.mxu0 0.0
    %2090 = vmatpush.msra.mxu0 0.0
    %2091 = vmatpush.msra.mxu0 0.0
    %2092 = vmatpush.msra.mxu0 0.0
    %2093 = vmatpush.msra.mxu0 0.0
    %2094 = vmatpush.msra.mxu0 0.0
    %2095 = vmatpush.msra.mxu0 0.0
    %2096 = vmatpush.msra.mxu0 0.0
    %2097 = vmatpush.msra.mxu0 0.0
    %2098 = vmatpush.msra.mxu0 0.0
    %2099 = vmatpush.msra.mxu0 %v198
    %2100 = vmatpush.msra.mxu0 %v197
    %2101 = vmatpush.msra.mxu0 %v196
    %2102 = vmatpush.msra.mxu0 %v195
    %2103 = vmatmul.f32.gmra.mxu0 %v2008
    %v2104 = vpop.f32.mrf.mxu0
    %v2105 = vadd.f32 %v2085, %v2104
    %2106 = vdwg.mxu0
    %v2107 = vadd.f32 %v2105, %v502
    %v2108 = vtanh.pop %v2107
    %v2110 = vsel %vm287, %v2108, 0
    %2112 = vmatpush.msra.mxu0 0.0
    %2113 = vmatpush.msra.mxu0 0.0
    %2114 = vmatpush.msra.mxu0 0.0
    %2115 = vmatpush.msra.mxu0 0.0
    %2116 = vmatpush.msra.mxu0 0.0
    %2117 = vmatpush.msra.mxu0 0.0
    %2118 = vmatpush.msra.mxu0 0.0
    %2119 = vmatpush.msra.mxu0 0.0
    %2120 = vmatpush.msra.mxu0 0.0
    %2121 = vmatpush.msra.mxu0 0.0
    %2122 = vmatpush.msra.mxu0 0.0
    %2123 = vmatpush.msra.mxu0 0.0
    %2124 = vmatpush.msra.mxu0 %v207
    %2125 = vmatpush.msra.mxu0 %v206
    %2126 = vmatpush.msra.mxu0 %v205
    %2127 = vmatpush.msra.mxu0 %v204
    %2128 = vmatmul.f32.gmra.mxu0 %v2110
    %v2129 = vpop.f32.mrf.mxu0
    %v2130 = vadd.f32 %v507, %v2129
    %2131 = vdwg.mxu0
    %v2132 = vsel %vm532, %v2130, -inf
    %2133 = vmax.xlane.f32.xlu0 %v2132
    %v2134 = vpop.xlane.xlu0 %2133
    %v2135 = vsub.f32 %v2130, %v2134
    %v2136 = vmul.f32 %v2135, 1.442695
    %v2137 = vpow.pop %v2136
    %v2138 = vsel %vm532, %v2137, 0.0
    %2139 = vadd.xlane.f32.xlu0 %v2138
    %v2140 = vpop.xlane.xlu0 %2139
    %v2141 = vlog2.pop %v2140
    %v2142 = vmul.f32 %v2141, 0.6931472
    %v2143 = vadd.f32 %v2142, %v2134
    %v2144 = vsub.f32 %v2130, %v2143
    %s2145 = scalar_lea.vmem [#allocation15], 10
    %2146 = vst [vmem:[%s2145] sm:$0x3] %v2144
    %s2147 = scalar_lea.vmem [#allocation3], 12
    %v2148 = vld [vmem:[%s2147] sm:$0x3]
    %2149 = vst.msk [vmem:[#allocation2] sm:$0x3] %vm210, %v2148
    %2150 = vrot.lane.b32.xlu0 %v2062, 16
    %v2151 = vpop.permute.xlu0 %2150
    %2153 = vst.msk [vmem:[#allocation2] sm:$0x3] %vm212, %v2151
    %2154 = vrot.lane.b32.xlu0 %v1898, 80
    %v2155 = vpop.permute.xlu0 %2154
    %2157 = vst.msk [vmem:[#allocation2] sm:$0x3] %vm214, %v2155
    %v2158 = vld [vmem:[#allocation2] sm:$0x3]
    %v2160 = vsel %vm220, %v2158, 0
    %2162 = vmatpush.msra.mxu0 0.0
    %2163 = vmatpush.msra.mxu0 0.0
    %2164 = vmatpush.msra.mxu0 0.0
    %2165 = vmatpush.msra.mxu0 0.0
    %2166 = vmatpush.msra.mxu0 0.0
    %2167 = vmatpush.msra.mxu0 0.0
    %2168 = vmatpush.msra.mxu0 %v180
    %2169 = vmatpush.msra.mxu0 %v179
    %2170 = vmatpush.msra.mxu0 %v178
    %2171 = vmatpush.msra.mxu0 %v177
    %2172 = vmatpush.msra.mxu0 %v176
    %2173 = vmatpush.msra.mxu0 %v175
    %2174 = vmatpush.msra.mxu0 %v174
    %2175 = vmatpush.msra.mxu0 %v173
    %2176 = vmatpush.msra.mxu0 %v172
    %2177 = vmatpush.msra.mxu0 %v171
    %2178 = vmatmul.f32.gmra.mxu0 %v2160
    %v2179 = vpop.f32.mrf.mxu0
    %v2180 = vadd.f32 %v218, %v2179
    %2181 = vdwg.mxu0
    %v2182 = vxor.u32 %v2180, 2147483648
    %v2183 = vmul.f32 %v2182, 1.442695
    %v2184 = vpow.pop %v2183
    %v2185 = vadd.f32 %v2184, 1.0
    %v2186 = vrcp.pop %v2185
    %v2187 = vmul.f32 %v2185, %v2186
    %v2188 = vsub.f32 1.0, %v2187
    %v2189 = vmul.f32 %v2186, %v2188
    %v2190 = vadd.f32 %v2186, %v2189
    %vm2191 = vweird.f32 %v2185
    %vm2192 = vweird.f32 %v2186
    %vm2193 = vmor %vm2191, %vm2192
    %v2194 = vsel %vm2193, %v2186, %v2190
    %v2195 = vand.u32 2147483647, %v2185
    %vm2196 = vcmp.eq.f32.partialorder %v2195, 8.507059e+37
    %v2197 = vand.u32 %v2185, 2147483648
    %v2198 = vor.u32 1.1754944e-38, %v2197
    %v2199 = vsel %vm2196, %v2198, %v2194
    %v2200 = vmul.f32 1.0, %v2199
    %v2201 = vtanh.pop %v2180
    %v2202 = vmul.f32 %v2200, %v1892
    %2204 = vrot.lane.b32.xlu0 %v2201, 64
    %v2205 = vpop.permute.xlu0 %2204
    %v2207 = vmul.f32 %v2200, %v2205
    %2209 = vrot.lane.b32.xlu0 %v2207, 32
    %v2210 = vpop.permute.xlu0 %2209
    %v2212 = vadd.f32 %v2202, %v2210
    %v2213 = vtanh.pop %v2212
    %2215 = vrot.lane.b32.xlu0 %v2213, 64
    %v2216 = vpop.permute.xlu0 %2215
    %v2218 = vmul.f32 %v2200, %v2216
    %2220 = vrot.lane.b32.xlu0 %v2218, 32
    %v2221 = vpop.permute.xlu0 %2220
    %v2222 = vsel %vm287, %v2221, 0
    %2224 = vmatpush.msra.mxu0 0.0
    %2225 = vmatpush.msra.mxu0 0.0
    %2226 = vmatpush.msra.mxu0 0.0
    %2227 = vmatpush.msra.mxu0 0.0
    %2228 = vmatpush.msra.mxu0 0.0
    %2229 = vmatpush.msra.mxu0 0.0
    %2230 = vmatpush.msra.mxu0 0.0
    %2231 = vmatpush.msra.mxu0 0.0
    %2232 = vmatpush.msra.mxu0 0.0
    %2233 = vmatpush.msra.mxu0 0.0
    %2234 = vmatpush.msra.mxu0 0.0
    %2235 = vmatpush.msra.mxu0 0.0
    %2236 = vmatpush.msra.mxu0 %v185
    %2237 = vmatpush.msra.mxu0 %v184
    %2238 = vmatpush.msra.mxu0 %v183
    %2239 = vmatpush.msra.mxu0 %v182
    %2240 = vmatmul.f32.gmra.mxu0 %v2222
    %v2241 = vpop.f32.mrf.mxu0
    %v2242 = vadd.f32 %v282, %v2241
    %2243 = vdwg.mxu0
    %2244 = vmatpush.msra.mxu0 0.0
    %2245 = vmatpush.msra.mxu0 0.0
    %2246 = vmatpush.msra.mxu0 0.0
    %2247 = vmatpush.msra.mxu0 0.0
    %2248 = vmatpush.msra.mxu0 0.0
    %2249 = vmatpush.msra.mxu0 0.0
    %2250 = vmatpush.msra.mxu0 0.0
    %2251 = vmatpush.msra.mxu0 0.0
    %2252 = vmatpush.msra.mxu0 0.0
    %2253 = vmatpush.msra.mxu0 0.0
    %2254 = vmatpush.msra.mxu0 0.0
    %2255 = vmatpush.msra.mxu0 0.0
    %2256 = vmatpush.msra.mxu0 %v193
    %2257 = vmatpush.msra.mxu0 %v192
    %2258 = vmatpush.msra.mxu0 %v191
    %2259 = vmatpush.msra.mxu0 %v190
    %2260 = vmatmul.f32.gmra.mxu0 %v2008
    %v2261 = vpop.f32.mrf.mxu0
    %v2262 = vadd.f32 0.0, %v2261
    %2263 = vdwg.mxu0
    %v2265 = vsel %vm333, %v2242, 0
    %2267 = vmatpush.msra.mxu0 0.0
    %2268 = vmatpush.msra.mxu0 0.0
    %2269 = vmatpush.msra.mxu0 0.0
    %2270 = vmatpush.msra.mxu0 0.0
    %2271 = vmatpush.msra.mxu0 0.0
    %2272 = vmatpush.msra.mxu0 0.0
    %2273 = vmatpush.msra.mxu0 0.0
    %2274 = vmatpush.msra.mxu0 0.0
    %2275 = vmatpush.msra.mxu0 0.0
    %2276 = vmatpush.msra.mxu0 0.0
    %2277 = vmatpush.msra.mxu0 0.0
    %2278 = vmatpush.msra.mxu0 0.0
    %2279 = vmatpush.msra.mxu0 0.0
    %2280 = vmatpush.msra.mxu0 %v189
    %2281 = vmatpush.msra.mxu0 %v188
    %2282 = vmatpush.msra.mxu0 %v187
    %2283 = vmatmul.f32.gmra.mxu0 %v2265
    %v2284 = vpop.f32.mrf.mxu0
    %v2285 = vadd.f32 %v2262, %v2284
    %2286 = vdwg.mxu0
    %v2287 = vadd.f32 %v2285, %v358
    %v2288 = vxor.u32 %v2287, 2147483648
    %v2289 = vmul.f32 %v2288, 1.442695
    %v2290 = vpow.pop %v2289
    %v2291 = vadd.f32 %v2290, 1.0
    %v2292 = vrcp.pop %v2291
    %v2293 = vmul.f32 %v2291, %v2292
    %v2294 = vsub.f32 1.0, %v2293
    %v2295 = vmul.f32 %v2292, %v2294
    %v2296 = vadd.f32 %v2292, %v2295
    %vm2297 = vweird.f32 %v2291
    %vm2298 = vweird.f32 %v2292
    %vm2299 = vmor %vm2297, %vm2298
    %v2300 = vsel %vm2299, %v2292, %v2296
    %v2301 = vand.u32 2147483647, %v2291
    %vm2302 = vcmp.eq.f32.partialorder %v2301, 8.507059e+37
    %v2303 = vand.u32 %v2291, 2147483648
    %v2304 = vor.u32 1.1754944e-38, %v2303
    %v2305 = vsel %vm2302, %v2304, %v2300
    %v2306 = vmul.f32 1.0, %v2305
    %v2307 = vtanh.pop %v2287
    %v2308 = vmul.f32 %v2306, %v1998
    %2310 = vrot.lane.b32.xlu0 %v2307, 64
    %v2311 = vpop.permute.xlu0 %2310
    %v2313 = vmul.f32 %v2306, %v2311
    %2315 = vrot.lane.b32.xlu0 %v2313, 32
    %v2316 = vpop.permute.xlu0 %2315
    %v2318 = vadd.f32 %v2308, %v2316
    %v2319 = vtanh.pop %v2318
    %2321 = vrot.lane.b32.xlu0 %v2319, 64
    %v2322 = vpop.permute.xlu0 %2321
    %v2324 = vmul.f32 %v2306, %v2322
    %2326 = vrot.lane.b32.xlu0 %v2324, 32
    %v2327 = vpop.permute.xlu0 %2326
    %v2328 = vsel %vm287, %v2327, 0
    %2330 = vmatpush.msra.mxu0 0.0
    %2331 = vmatpush.msra.mxu0 0.0
    %2332 = vmatpush.msra.mxu0 0.0
    %2333 = vmatpush.msra.mxu0 0.0
    %2334 = vmatpush.msra.mxu0 0.0
    %2335 = vmatpush.msra.mxu0 0.0
    %2336 = vmatpush.msra.mxu0 0.0
    %2337 = vmatpush.msra.mxu0 0.0
    %2338 = vmatpush.msra.mxu0 0.0
    %2339 = vmatpush.msra.mxu0 0.0
    %2340 = vmatpush.msra.mxu0 0.0
    %2341 = vmatpush.msra.mxu0 0.0
    %2342 = vmatpush.msra.mxu0 %v166
    %2343 = vmatpush.msra.mxu0 %v165
    %2344 = vmatpush.msra.mxu0 %v164
    %2345 = vmatpush.msra.mxu0 %v163
    %2346 = vmatmul.f32.gmra.mxu0 %v2328
    %v2347 = vpop.f32.mrf.mxu0
    %v2348 = vadd.f32 %v170, %v2347
    %2349 = vdwg.mxu0
    %v2350 = vsel %vm423, %v2348, -inf
    %2351 = vmax.xlane.f32.xlu0 %v2350
    %v2352 = vpop.xlane.xlu0 %2351
    %v2353 = vsub.f32 %v2348, %v2352
    %v2354 = vmul.f32 %v2353, 1.442695
    %v2355 = vpow.pop %v2354
    %v2356 = vsel %vm423, %v2355, 0.0
    %2357 = vadd.xlane.f32.xlu0 %v2356
    %v2358 = vpop.xlane.xlu0 %2357
    %v2359 = vrcp.pop %v2358
    %v2360 = vmul.f32 %v2355, %v2359
    %v2362 = vsel %vm333, %v2360, 0
    %2364 = vmatpush.msra.mxu0 0.0
    %2365 = vmatpush.msra.mxu0 0.0
    %2366 = vmatpush.msra.mxu0 0.0
    %2367 = vmatpush.msra.mxu0 0.0
    %2368 = vmatpush.msra.mxu0 0.0
    %2369 = vmatpush.msra.mxu0 0.0
    %2370 = vmatpush.msra.mxu0 0.0
    %2371 = vmatpush.msra.mxu0 0.0
    %2372 = vmatpush.msra.mxu0 0.0
    %2373 = vmatpush.msra.mxu0 0.0
    %2374 = vmatpush.msra.mxu0 0.0
    %2375 = vmatpush.msra.mxu0 0.0
    %2376 = vmatpush.msra.mxu0 0.0
    %2377 = vmatpush.msra.mxu0 %v169
    %2378 = vmatpush.msra.mxu0 %v168
    %2379 = vmatpush.msra.mxu0 %v167
    %2380 = vmatmul.f32.gmra.mxu0 %v2362
    %v2381 = vpop.f32.mrf.mxu0
    %v2382 = vadd.f32 0.0, %v2381
    %2383 = vdwg.mxu0
    %v2385 = vsel %vm287, %v2382, 0
    %2387 = vmatpush.msra.mxu0 0.0
    %2388 = vmatpush.msra.mxu0 0.0
    %2389 = vmatpush.msra.mxu0 0.0
    %2390 = vmatpush.msra.mxu0 0.0
    %2391 = vmatpush.msra.mxu0 0.0
    %2392 = vmatpush.msra.mxu0 0.0
    %2393 = vmatpush.msra.mxu0 0.0
    %2394 = vmatpush.msra.mxu0 0.0
    %2395 = vmatpush.msra.mxu0 0.0
    %2396 = vmatpush.msra.mxu0 0.0
    %2397 = vmatpush.msra.mxu0 0.0
    %2398 = vmatpush.msra.mxu0 0.0
    %2399 = vmatpush.msra.mxu0 %v202
    %2400 = vmatpush.msra.mxu0 %v201
    %2401 = vmatpush.msra.mxu0 %v200
    %2402 = vmatpush.msra.mxu0 %v199
    %2403 = vmatmul.f32.gmra.mxu0 %v2385
    %v2404 = vpop.f32.mrf.mxu0
    %v2405 = vadd.f32 0.0, %v2404
    %2406 = vdwg.mxu0
    %2407 = vmatpush.msra.mxu0 0.0
    %2408 = vmatpush.msra.mxu0 0.0
    %2409 = vmatpush.msra.mxu0 0.0
    %2410 = vmatpush.msra.mxu0 0.0
    %2411 = vmatpush.msra.mxu0 0.0
    %2412 = vmatpush.msra.mxu0 0.0
    %2413 = vmatpush.msra.mxu0 0.0
    %2414 = vmatpush.msra.mxu0 0.0
    %2415 = vmatpush.msra.mxu0 0.0
    %2416 = vmatpush.msra.mxu0 0.0
    %2417 = vmatpush.msra.mxu0 0.0
    %2418 = vmatpush.msra.mxu0 0.0
    %2419 = vmatpush.msra.mxu0 %v198
    %2420 = vmatpush.msra.mxu0 %v197
    %2421 = vmatpush.msra.mxu0 %v196
    %2422 = vmatpush.msra.mxu0 %v195
    %2423 = vmatmul.f32.gmra.mxu0 %v2328
    %v2424 = vpop.f32.mrf.mxu0
    %v2425 = vadd.f32 %v2405, %v2424
    %2426 = vdwg.mxu0
    %v2427 = vadd.f32 %v2425, %v502
    %v2428 = vtanh.pop %v2427
    %v2430 = vsel %vm287, %v2428, 0
    %2432 = vmatpush.msra.mxu0 0.0
    %2433 = vmatpush.msra.mxu0 0.0
    %2434 = vmatpush.msra.mxu0 0.0
    %2435 = vmatpush.msra.mxu0 0.0
    %2436 = vmatpush.msra.mxu0 0.0
    %2437 = vmatpush.msra.mxu0 0.0
    %2438 = vmatpush.msra.mxu0 0.0
    %2439 = vmatpush.msra.mxu0 0.0
    %2440 = vmatpush.msra.mxu0 0.0
    %2441 = vmatpush.msra.mxu0 0.0
    %2442 = vmatpush.msra.mxu0 0.0
    %2443 = vmatpush.msra.mxu0 0.0
    %2444 = vmatpush.msra.mxu0 %v207
    %2445 = vmatpush.msra.mxu0 %v206
    %2446 = vmatpush.msra.mxu0 %v205
    %2447 = vmatpush.msra.mxu0 %v204
    %2448 = vmatmul.f32.gmra.mxu0 %v2430
    %v2449 = vpop.f32.mrf.mxu0
    %v2450 = vadd.f32 %v507, %v2449
    %2451 = vdwg.mxu0
    %v2452 = vsel %vm532, %v2450, -inf
    %2453 = vmax.xlane.f32.xlu0 %v2452
    %v2454 = vpop.xlane.xlu0 %2453
    %v2455 = vsub.f32 %v2450, %v2454
    %v2456 = vmul.f32 %v2455, 1.442695
    %v2457 = vpow.pop %v2456
    %v2458 = vsel %vm532, %v2457, 0.0
    %2459 = vadd.xlane.f32.xlu0 %v2458
    %v2460 = vpop.xlane.xlu0 %2459
    %v2461 = vlog2.pop %v2460
    %v2462 = vmul.f32 %v2461, 0.6931472
    %v2463 = vadd.f32 %v2462, %v2454
    %v2464 = vsub.f32 %v2450, %v2463
    %s2465 = scalar_lea.vmem [#allocation15], 12
    %2466 = vst [vmem:[%s2465] sm:$0x3] %v2464
    %s2467 = scalar_lea.vmem [#allocation3], 14
    %v2468 = vld [vmem:[%s2467] sm:$0x3]
    %2469 = vst.msk [vmem:[#allocation2] sm:$0x3] %vm210, %v2468
    %2470 = vrot.lane.b32.xlu0 %v2382, 16
    %v2471 = vpop.permute.xlu0 %2470
    %2473 = vst.msk [vmem:[#allocation2] sm:$0x3] %vm212, %v2471
    %2474 = vrot.lane.b32.xlu0 %v2218, 80
    %v2475 = vpop.permute.xlu0 %2474
    %2477 = vst.msk [vmem:[#allocation2] sm:$0x3] %vm214, %v2475
    %v2478 = vld [vmem:[#allocation2] sm:$0x3]
    %v2480 = vsel %vm220, %v2478, 0
    %2482 = vmatpush.msra.mxu0 0.0
    %2483 = vmatpush.msra.mxu0 0.0
    %2484 = vmatpush.msra.mxu0 0.0
    %2485 = vmatpush.msra.mxu0 0.0
    %2486 = vmatpush.msra.mxu0 0.0
    %2487 = vmatpush.msra.mxu0 0.0
    %2488 = vmatpush.msra.mxu0 %v180
    %2489 = vmatpush.msra.mxu0 %v179
    %2490 = vmatpush.msra.mxu0 %v178
    %2491 = vmatpush.msra.mxu0 %v177
    %2492 = vmatpush.msra.mxu0 %v176
    %2493 = vmatpush.msra.mxu0 %v175
    %2494 = vmatpush.msra.mxu0 %v174
    %2495 = vmatpush.msra.mxu0 %v173
    %2496 = vmatpush.msra.mxu0 %v172
    %2497 = vmatpush.msra.mxu0 %v171
    %2498 = vmatmul.f32.gmra.mxu0 %v2480
    %v2499 = vpop.f32.mrf.mxu0
    %v2500 = vadd.f32 %v218, %v2499
    %2501 = vdwg.mxu0
    %v2502 = vxor.u32 %v2500, 2147483648
    %v2503 = vmul.f32 %v2502, 1.442695
    %v2504 = vpow.pop %v2503
    %v2505 = vadd.f32 %v2504, 1.0
    %v2506 = vrcp.pop %v2505
    %v2507 = vmul.f32 %v2505, %v2506
    %v2508 = vsub.f32 1.0, %v2507
    %v2509 = vmul.f32 %v2506, %v2508
    %v2510 = vadd.f32 %v2506, %v2509
    %vm2511 = vweird.f32 %v2505
    %vm2512 = vweird.f32 %v2506
    %vm2513 = vmor %vm2511, %vm2512
    %v2514 = vsel %vm2513, %v2506, %v2510
    %v2515 = vand.u32 2147483647, %v2505
    %vm2516 = vcmp.eq.f32.partialorder %v2515, 8.507059e+37
    %v2517 = vand.u32 %v2505, 2147483648
    %v2518 = vor.u32 1.1754944e-38, %v2517
    %v2519 = vsel %vm2516, %v2518, %v2514
    %v2520 = vmul.f32 1.0, %v2519
    %v2521 = vtanh.pop %v2500
    %v2522 = vmul.f32 %v2520, %v2212
    %2524 = vrot.lane.b32.xlu0 %v2521, 64
    %v2525 = vpop.permute.xlu0 %2524
    %v2527 = vmul.f32 %v2520, %v2525
    %2529 = vrot.lane.b32.xlu0 %v2527, 32
    %v2530 = vpop.permute.xlu0 %2529
    %v2532 = vadd.f32 %v2522, %v2530
    %v2533 = vtanh.pop %v2532
    %2535 = vrot.lane.b32.xlu0 %v2533, 64
    %v2536 = vpop.permute.xlu0 %2535
    %v2538 = vmul.f32 %v2520, %v2536
    %2540 = vrot.lane.b32.xlu0 %v2538, 32
    %v2541 = vpop.permute.xlu0 %2540
    %v2542 = vsel %vm287, %v2541, 0
    %2544 = vmatpush.msra.mxu0 0.0
    %2545 = vmatpush.msra.mxu0 0.0
    %2546 = vmatpush.msra.mxu0 0.0
    %2547 = vmatpush.msra.mxu0 0.0
    %2548 = vmatpush.msra.mxu0 0.0
    %2549 = vmatpush.msra.mxu0 0.0
    %2550 = vmatpush.msra.mxu0 0.0
    %2551 = vmatpush.msra.mxu0 0.0
    %2552 = vmatpush.msra.mxu0 0.0
    %2553 = vmatpush.msra.mxu0 0.0
    %2554 = vmatpush.msra.mxu0 0.0
    %2555 = vmatpush.msra.mxu0 0.0
    %2556 = vmatpush.msra.mxu0 %v185
    %2557 = vmatpush.msra.mxu0 %v184
    %2558 = vmatpush.msra.mxu0 %v183
    %2559 = vmatpush.msra.mxu0 %v182
    %2560 = vmatmul.f32.gmra.mxu0 %v2542
    %v2561 = vpop.f32.mrf.mxu0
    %v2562 = vadd.f32 %v282, %v2561
    %2563 = vdwg.mxu0
    %2564 = vmatpush.msra.mxu0 0.0
    %2565 = vmatpush.msra.mxu0 0.0
    %2566 = vmatpush.msra.mxu0 0.0
    %2567 = vmatpush.msra.mxu0 0.0
    %2568 = vmatpush.msra.mxu0 0.0
    %2569 = vmatpush.msra.mxu0 0.0
    %2570 = vmatpush.msra.mxu0 0.0
    %2571 = vmatpush.msra.mxu0 0.0
    %2572 = vmatpush.msra.mxu0 0.0
    %2573 = vmatpush.msra.mxu0 0.0
    %2574 = vmatpush.msra.mxu0 0.0
    %2575 = vmatpush.msra.mxu0 0.0
    %2576 = vmatpush.msra.mxu0 %v193
    %2577 = vmatpush.msra.mxu0 %v192
    %2578 = vmatpush.msra.mxu0 %v191
    %2579 = vmatpush.msra.mxu0 %v190
    %2580 = vmatmul.f32.gmra.mxu0 %v2328
    %v2581 = vpop.f32.mrf.mxu0
    %v2582 = vadd.f32 0.0, %v2581
    %2583 = vdwg.mxu0
    %v2585 = vsel %vm333, %v2562, 0
    %2587 = vmatpush.msra.mxu0 0.0
    %2588 = vmatpush.msra.mxu0 0.0
    %2589 = vmatpush.msra.mxu0 0.0
    %2590 = vmatpush.msra.mxu0 0.0
    %2591 = vmatpush.msra.mxu0 0.0
    %2592 = vmatpush.msra.mxu0 0.0
    %2593 = vmatpush.msra.mxu0 0.0
    %2594 = vmatpush.msra.mxu0 0.0
    %2595 = vmatpush.msra.mxu0 0.0
    %2596 = vmatpush.msra.mxu0 0.0
    %2597 = vmatpush.msra.mxu0 0.0
    %2598 = vmatpush.msra.mxu0 0.0
    %2599 = vmatpush.msra.mxu0 0.0
    %2600 = vmatpush.msra.mxu0 %v189
    %2601 = vmatpush.msra.mxu0 %v188
    %2602 = vmatpush.msra.mxu0 %v187
    %2603 = vmatmul.f32.gmra.mxu0 %v2585
    %v2604 = vpop.f32.mrf.mxu0
    %v2605 = vadd.f32 %v2582, %v2604
    %2606 = vdwg.mxu0
    %v2607 = vadd.f32 %v2605, %v358
    %v2608 = vxor.u32 %v2607, 2147483648
    %v2609 = vmul.f32 %v2608, 1.442695
    %v2610 = vpow.pop %v2609
    %v2611 = vadd.f32 %v2610, 1.0
    %v2612 = vrcp.pop %v2611
    %v2613 = vmul.f32 %v2611, %v2612
    %v2614 = vsub.f32 1.0, %v2613
    %v2615 = vmul.f32 %v2612, %v2614
    %v2616 = vadd.f32 %v2612, %v2615
    %vm2617 = vweird.f32 %v2611
    %vm2618 = vweird.f32 %v2612
    %vm2619 = vmor %vm2617, %vm2618
    %v2620 = vsel %vm2619, %v2612, %v2616
    %v2621 = vand.u32 2147483647, %v2611
    %vm2622 = vcmp.eq.f32.partialorder %v2621, 8.507059e+37
    %v2623 = vand.u32 %v2611, 2147483648
    %v2624 = vor.u32 1.1754944e-38, %v2623
    %v2625 = vsel %vm2622, %v2624, %v2620
    %v2626 = vmul.f32 1.0, %v2625
    %v2627 = vtanh.pop %v2607
    %v2628 = vmul.f32 %v2626, %v2318
    %2630 = vrot.lane.b32.xlu0 %v2627, 64
    %v2631 = vpop.permute.xlu0 %2630
    %v2633 = vmul.f32 %v2626, %v2631
    %2635 = vrot.lane.b32.xlu0 %v2633, 32
    %v2636 = vpop.permute.xlu0 %2635
    %v2638 = vadd.f32 %v2628, %v2636
    %v2639 = vtanh.pop %v2638
    %2641 = vrot.lane.b32.xlu0 %v2639, 64
    %v2642 = vpop.permute.xlu0 %2641
    %v2644 = vmul.f32 %v2626, %v2642
    %2646 = vrot.lane.b32.xlu0 %v2644, 32
    %v2647 = vpop.permute.xlu0 %2646
    %v2648 = vsel %vm287, %v2647, 0
    %2650 = vmatpush.msra.mxu0 0.0
    %2651 = vmatpush.msra.mxu0 0.0
    %2652 = vmatpush.msra.mxu0 0.0
    %2653 = vmatpush.msra.mxu0 0.0
    %2654 = vmatpush.msra.mxu0 0.0
    %2655 = vmatpush.msra.mxu0 0.0
    %2656 = vmatpush.msra.mxu0 0.0
    %2657 = vmatpush.msra.mxu0 0.0
    %2658 = vmatpush.msra.mxu0 0.0
    %2659 = vmatpush.msra.mxu0 0.0
    %2660 = vmatpush.msra.mxu0 0.0
    %2661 = vmatpush.msra.mxu0 0.0
    %2662 = vmatpush.msra.mxu0 %v166
    %2663 = vmatpush.msra.mxu0 %v165
    %2664 = vmatpush.msra.mxu0 %v164
    %2665 = vmatpush.msra.mxu0 %v163
    %2666 = vmatmul.f32.gmra.mxu0 %v2648
    %v2667 = vpop.f32.mrf.mxu0
    %v2668 = vadd.f32 %v170, %v2667
    %2669 = vdwg.mxu0
    %v2670 = vsel %vm423, %v2668, -inf
    %2671 = vmax.xlane.f32.xlu0 %v2670
    %v2672 = vpop.xlane.xlu0 %2671
    %v2673 = vsub.f32 %v2668, %v2672
    %v2674 = vmul.f32 %v2673, 1.442695
    %v2675 = vpow.pop %v2674
    %v2676 = vsel %vm423, %v2675, 0.0
    %2677 = vadd.xlane.f32.xlu0 %v2676
    %v2678 = vpop.xlane.xlu0 %2677
    %v2679 = vrcp.pop %v2678
    %v2680 = vmul.f32 %v2675, %v2679
    %v2682 = vsel %vm333, %v2680, 0
    %2684 = vmatpush.msra.mxu0 0.0
    %2685 = vmatpush.msra.mxu0 0.0
    %2686 = vmatpush.msra.mxu0 0.0
    %2687 = vmatpush.msra.mxu0 0.0
    %2688 = vmatpush.msra.mxu0 0.0
    %2689 = vmatpush.msra.mxu0 0.0
    %2690 = vmatpush.msra.mxu0 0.0
    %2691 = vmatpush.msra.mxu0 0.0
    %2692 = vmatpush.msra.mxu0 0.0
    %2693 = vmatpush.msra.mxu0 0.0
    %2694 = vmatpush.msra.mxu0 0.0
    %2695 = vmatpush.msra.mxu0 0.0
    %2696 = vmatpush.msra.mxu0 0.0
    %2697 = vmatpush.msra.mxu0 %v169
    %2698 = vmatpush.msra.mxu0 %v168
    %2699 = vmatpush.msra.mxu0 %v167
    %2700 = vmatmul.f32.gmra.mxu0 %v2682
    %v2701 = vpop.f32.mrf.mxu0
    %v2702 = vadd.f32 0.0, %v2701
    %2703 = vdwg.mxu0
    %v2705 = vsel %vm287, %v2702, 0
    %2707 = vmatpush.msra.mxu0 0.0
    %2708 = vmatpush.msra.mxu0 0.0
    %2709 = vmatpush.msra.mxu0 0.0
    %2710 = vmatpush.msra.mxu0 0.0
    %2711 = vmatpush.msra.mxu0 0.0
    %2712 = vmatpush.msra.mxu0 0.0
    %2713 = vmatpush.msra.mxu0 0.0
    %2714 = vmatpush.msra.mxu0 0.0
    %2715 = vmatpush.msra.mxu0 0.0
    %2716 = vmatpush.msra.mxu0 0.0
    %2717 = vmatpush.msra.mxu0 0.0
    %2718 = vmatpush.msra.mxu0 0.0
    %2719 = vmatpush.msra.mxu0 %v202
    %2720 = vmatpush.msra.mxu0 %v201
    %2721 = vmatpush.msra.mxu0 %v200
    %2722 = vmatpush.msra.mxu0 %v199
    %2723 = vmatmul.f32.gmra.mxu0 %v2705
    %v2724 = vpop.f32.mrf.mxu0
    %v2725 = vadd.f32 0.0, %v2724
    %2726 = vdwg.mxu0
    %2727 = vmatpush.msra.mxu0 0.0
    %2728 = vmatpush.msra.mxu0 0.0
    %2729 = vmatpush.msra.mxu0 0.0
    %2730 = vmatpush.msra.mxu0 0.0
    %2731 = vmatpush.msra.mxu0 0.0
    %2732 = vmatpush.msra.mxu0 0.0
    %2733 = vmatpush.msra.mxu0 0.0
    %2734 = vmatpush.msra.mxu0 0.0
    %2735 = vmatpush.msra.mxu0 0.0
    %2736 = vmatpush.msra.mxu0 0.0
    %2737 = vmatpush.msra.mxu0 0.0
    %2738 = vmatpush.msra.mxu0 0.0
    %2739 = vmatpush.msra.mxu0 %v198
    %2740 = vmatpush.msra.mxu0 %v197
    %2741 = vmatpush.msra.mxu0 %v196
    %2742 = vmatpush.msra.mxu0 %v195
    %2743 = vmatmul.f32.gmra.mxu0 %v2648
    %v2744 = vpop.f32.mrf.mxu0
    %v2745 = vadd.f32 %v2725, %v2744
    %2746 = vdwg.mxu0
    %v2747 = vadd.f32 %v2745, %v502
    %v2748 = vtanh.pop %v2747
    %v2750 = vsel %vm287, %v2748, 0
    %2752 = vmatpush.msra.mxu0 0.0
    %2753 = vmatpush.msra.mxu0 0.0
    %2754 = vmatpush.msra.mxu0 0.0
    %2755 = vmatpush.msra.mxu0 0.0
    %2756 = vmatpush.msra.mxu0 0.0
    %2757 = vmatpush.msra.mxu0 0.0
    %2758 = vmatpush.msra.mxu0 0.0
    %2759 = vmatpush.msra.mxu0 0.0
    %2760 = vmatpush.msra.mxu0 0.0
    %2761 = vmatpush.msra.mxu0 0.0
    %2762 = vmatpush.msra.mxu0 0.0
    %2763 = vmatpush.msra.mxu0 0.0
    %2764 = vmatpush.msra.mxu0 %v207
    %2765 = vmatpush.msra.mxu0 %v206
    %2766 = vmatpush.msra.mxu0 %v205
    %2767 = vmatpush.msra.mxu0 %v204
    %2768 = vmatmul.f32.gmra.mxu0 %v2750
    %v2769 = vpop.f32.mrf.mxu0
    %v2770 = vadd.f32 %v507, %v2769
    %2771 = vdwg.mxu0
    %v2772 = vsel %vm532, %v2770, -inf
    %2773 = vmax.xlane.f32.xlu0 %v2772
    %v2774 = vpop.xlane.xlu0 %2773
    %v2775 = vsub.f32 %v2770, %v2774
    %v2776 = vmul.f32 %v2775, 1.442695
    %v2777 = vpow.pop %v2776
    %v2778 = vsel %vm532, %v2777, 0.0
    %2779 = vadd.xlane.f32.xlu0 %v2778
    %v2780 = vpop.xlane.xlu0 %2779
    %v2781 = vlog2.pop %v2780
    %v2782 = vmul.f32 %v2781, 0.6931472
    %v2783 = vadd.f32 %v2782, %v2774
    %v2784 = vsub.f32 %v2770, %v2783
    %s2785 = scalar_lea.vmem [#allocation15], 14
    %2786 = vst [vmem:[%s2785] sm:$0x3] %v2784
    // Predicated region
    $region94: #{tpu_custom_call.1} parent=1 // pred_check
      _
    $region95: #{tpu_custom_call.1} parent=1 // pred_check_branch
      %2788 = sbr.rel (0) target = $region97
    $region96: #{tpu_custom_call.1} parent=1 // pred_region
      %2790 = vsyncadd [#allocation5], 0
      %s2791 = sshll.u32 [#allocation15], 4
      %s2792 = int_to_ptr.vmem [resolvable:$true] %s2791
      %s2793 = sshll.u32 %s16, 4
      %s2794 = int_to_ptr.hbm [resolvable:$true] %s2793
      %2799 = dma.vmem_to_hbm [thread:$0]  %s2792, 256, %s2794, [#allocation5], 32, 32, 2
    $region97: #{tpu_custom_call.1} parent=1 // pred_fallthru
      _
    // Predicated region
    $region98: #{tpu_custom_call.1} parent=1 // pred_check
      _
    $region99: #{tpu_custom_call.1} parent=1 // pred_check_branch
      %2801 = sbr.rel (0) target = $region101
    $region100: #{tpu_custom_call.1} parent=1 // pred_region
      %2803 = dma.done [#allocation5], 256
    $region101: #{tpu_custom_call.1} parent=1 // pred_fallthru
      _
    %2804 = vsyncpa [#allocation4], 1
    %2805 = vsyncpa [#allocation7], 1
    %2806 = vsyncpa [#allocation10], 1
    %2807 = vsyncpa [#allocation13], 1
    %2808 = vsyncpa [#allocation5], 1

</llo_original>
